<compile_context>
chip_gen: v6e
topology: v6e:2x2x1
jax: 0.10.0
libtpu: 0.0.40
codegen_flags: <defaults>
</compile_context>

<pallas_src>
import functools

import jax
import jax.numpy as jnp
import numpy as np
from jax.experimental import pallas as pl
from jax.experimental.pallas import tpu as pltpu

N_LAYERS = 12
D_IN = 768
D_OUT = 512
EPS = 2.3e-08


def _style_projector_kernel(x_ref, w_ref, b_ref, o_ref, sum_ref, sumsq_ref,
                            *, seq_len, l_tile, mask_tail):
    """Grid = (layer_groups, batch_tiles, L_reduction_tiles).

    x_ref     : [G, tB, tL, D_IN]  activation tile (stats computed in f32)
    w_ref     : [G, D_IN, D_OUT]   bf16 weights (pre-transposed)
    b_ref     : [G, 1, D_OUT]      f32 biases
    o_ref     : [tB, G*D_OUT]      lane-dense output slab
    sum_ref   : [G, tB, D_IN]      f32 running sum(x) over L        (scratch)
    sumsq_ref : [G, tB, D_IN]      f32 running sum(x*x) over L      (scratch)
    """
    G = x_ref.shape[0]
    k = pl.program_id(2)
    n_k = pl.num_programs(2)

    @pl.when(k == 0)
    def _init():
        sum_ref[...] = jnp.zeros_like(sum_ref)
        sumsq_ref[...] = jnp.zeros_like(sumsq_ref)

    # One-pass statistics: accumulate sum and sum-of-squares over this L tile.
    for j in range(G):
        xj = x_ref[j].astype(jnp.float32)                 # [tB, tL, D_IN]
        if mask_tail:
            # L is not a multiple of l_tile (e.g. CLIP's L=197): zero out the
            # out-of-bounds rows of the final tile; divisor stays the true L.
            rem = seq_len - k * l_tile
            idx = jax.lax.broadcasted_iota(jnp.int32, (l_tile, 1), 0)
            xj = jnp.where((idx < rem)[None, :, :], xj, 0.0)
        sum_ref[j] += jnp.sum(xj, axis=1)
        sumsq_ref[j] += jnp.sum(xj * xj, axis=1)

    @pl.when(k == n_k - 1)
    def _finalize():
        inv_l = 1.0 / float(seq_len)
        for j in range(G):
            s = sum_ref[j]                                # [tB, D_IN]
            sq = sumsq_ref[j]
            mu = s * inv_l
            # sum((x - mu)^2) = sumsq - mu*sum, clamped at 0 to guard against
            # cancellation before the sqrt.
            # TODO(synk): switch to a two-pass / Welford update if sigma
            # accuracy vs torch's two-pass becomes a concern for large means.
            ss = jnp.maximum(sq - mu * s, 0.0)
            sigma = jnp.sqrt((ss + EPS) * inv_l)
            # AdaptiveAvgPool2d((1,768)) over cat([mu, sigma], 1) == row mean.
            pooled = ((mu + sigma) * 0.5).astype(w_ref.dtype)   # bf16 [tB, D_IN]
            out_j = jnp.dot(pooled, w_ref[j],
                            preferred_element_type=jnp.float32)  # [tB, D_OUT]
            out_j = out_j + b_ref[j, 0][None, :]
            o_ref[:, j * D_OUT:(j + 1) * D_OUT] = out_j.astype(o_ref.dtype)


def _vmem_capacity_bytes():
    try:
        return int(pltpu.get_tpu_info().vmem_capacity_bytes)
    except Exception:
        return 64 << 20  # conservative: v7x per-TensorCore VMEM


def _vmem_block_bytes(G, tB, tL, x_itemsize, w_itemsize, out_itemsize):
    x_blk = G * tB * tL * D_IN * x_itemsize
    w_blk = G * D_IN * D_OUT * w_itemsize
    b_blk = G * 8 * D_OUT * 4                 # (G,1,512) pads sublane dim to 8
    o_blk = tB * G * D_OUT * out_itemsize
    scratch = 2 * G * tB * D_IN * 4
    # Pallas double-buffers every BlockSpec operand.
    return 2 * (x_blk + w_blk + b_blk + o_blk) + scratch


def _select_tiles(B, L, G, x_itemsize, w_itemsize, out_itemsize, budget):
    """Prefer tL == L (single reduction step); shrink the batch tile first."""
    b_cands = [B] + [t for t in (256, 128, 64, 32, 16, 8) if t < B and B % t == 0]
    l_cands = [L] + [t for t in (512, 256, 128, 64, 32, 16, 8) if t < L]
    for tL in l_cands:
        for tB in b_cands:
            if _vmem_block_bytes(G, tB, tL, x_itemsize, w_itemsize,
                                 out_itemsize) <= budget:
                return tB, tL
    return b_cands[-1], l_cands[-1]


def style_projector_forward(data, weights, biases, *, layers_per_step=3,
                            batch_tile=None, l_tile=None,
                            out_dtype=jnp.float32):
    """data    : [N_LAYERS, B, L, 768]  per-layer ViT token features (f32 or bf16)
       weights : [N_LAYERS, 768, 512]   pre-transposed vs torch Linear.weight,
                                        ideally stored persistently in bf16
       biases  : [N_LAYERS, 512]
       returns : [B, N_LAYERS, 512]     (matches torch.stack(..., dim=1))"""
    n, B, L, D = data.shape
    assert n == N_LAYERS and D == D_IN
    G = layers_per_step
    assert n % G == 0, "layers_per_step must divide 12"
    # Keep n//G >= 2 so the "parallel" layer axis spans both v7x TensorCores.

    if weights.dtype != jnp.bfloat16:
        # Fallback only: a per-call cast re-reads the f32 weights and costs
        # more HBM traffic than bf16 streaming saves. Keep weights in bf16.
        weights = weights.astype(jnp.bfloat16)
    b3 = biases.astype(jnp.float32).reshape(n, 1, D_OUT)

    x_itemsize = data.dtype.itemsize
    out_itemsize = jnp.dtype(out_dtype).itemsize

    vmem_cap = _vmem_capacity_bytes()
    budget = max(vmem_cap - (16 << 20), 8 << 20)

    auto_tB, auto_tL = _select_tiles(B, L, G, x_itemsize, 2, out_itemsize, budget)
    tB = batch_tile if batch_tile is not None else auto_tB
    tL = l_tile if l_tile is not None else auto_tL
    assert tB == B or (tB % 8 == 0 and B % tB == 0), "batch tile must be B or a multiple of 8 dividing B"
    assert tL == L or tL % 8 == 0, "L tile must be L or a multiple of 8"

    n_b = pl.cdiv(B, tB)
    n_k = pl.cdiv(L, tL)
    mask_tail = (n_k > 1) and (L % tL != 0)

    needed = _vmem_block_bytes(G, tB, tL, x_itemsize, 2, out_itemsize)
    # Only override the default scoped-VMEM limit when the blocks need more,
    # and never ask for more than the device physically has (minus headroom).
    if needed <= (16 << 20):
        vmem_limit = None
    else:
        vmem_limit = min(needed + (8 << 20), vmem_cap - (4 << 20))

    cost = pl.CostEstimate(
        flops=n * (2 * B * D_IN * D_OUT + 4 * B * L * D_IN),
        transcendentals=n * B * D_IN,
        bytes_accessed=(n * B * L * D_IN * x_itemsize     # activations
                        + n * D_IN * D_OUT * 2            # bf16 weights
                        + n * D_OUT * 4                   # biases
                        + B * n * D_OUT * out_itemsize))  # output

    kernel = functools.partial(_style_projector_kernel, seq_len=L, l_tile=tL,
                               mask_tail=mask_tail)

    out_flat = pl.pallas_call(
        kernel,
        out_shape=jax.ShapeDtypeStruct((B, n * D_OUT), out_dtype),
        grid_spec=pltpu.PrefetchScalarGridSpec(
            num_scalar_prefetch=0,
            grid=(n // G, n_b, n_k),        # (layer groups, batch tiles, L tiles)
            in_specs=[
                pl.BlockSpec((G, tB, tL, D_IN), lambda i, b, k: (i, b, k, 0)),
                pl.BlockSpec((G, D_IN, D_OUT), lambda i, b, k: (i, 0, 0)),
                pl.BlockSpec((G, 1, D_OUT), lambda i, b, k: (i, 0, 0)),
            ],
            out_specs=pl.BlockSpec((tB, G * D_OUT), lambda i, b, k: (b, i)),
            scratch_shapes=[
                pltpu.VMEM((G, tB, D_IN), jnp.float32),   # running sum(x)
                pltpu.VMEM((G, tB, D_IN), jnp.float32),   # running sum(x*x)
            ],
        ),
        compiler_params=pltpu.CompilerParams(
            dimension_semantics=("parallel", "parallel", "arbitrary"),
            vmem_limit_bytes=vmem_limit),
        cost_estimate=cost,
    )(data, weights, b3)

    # [B, n*512] is already layer-major within each batch row, so a reshape
    # reproduces torch.stack(data_prompt, dim=1) with no transpose kernel.
    return out_flat.reshape(B, n, D_OUT)


def _reference(data, weights, biases):
    # Pure-JAX f32 reference of the same math for a correctness check.
    L = data.shape[2]
    mu = jnp.sum(data, axis=2) / L
    diff = data - mu[:, :, None, :]
    sigma = jnp.sqrt((jnp.sum(diff * diff, axis=2) + EPS) / L)
    pooled = (mu + sigma) * 0.5                          # [n, B, 768]
    out = jnp.einsum("nbd,ndo->nbo", pooled, weights) + biases[:, None, :]
    return jnp.transpose(out, (1, 0, 2))


if __name__ == "__main__":
    key = jax.random.PRNGKey(0)
    k_data, k_w, k_b = jax.random.split(key, 3)

    B, L = 2, 8  # small batch / sequence; feature dims fixed by the module (768 -> 512)
    data = jax.random.normal(k_data, (N_LAYERS, B, L, D_IN), dtype=jnp.float32)

    # Deterministic Linear(768, 512) init (uniform(-1/sqrt(768), 1/sqrt(768)), like nn.Linear).
    bound = 1.0 / np.sqrt(D_IN)
    weights = jax.random.uniform(k_w, (N_LAYERS, D_IN, D_OUT),
                                 minval=-bound, maxval=bound, dtype=jnp.float32)
    biases = jax.random.uniform(k_b, (N_LAYERS, D_OUT),
                                minval=-bound, maxval=bound, dtype=jnp.float32)

    # Projector weights are kept persistently in bf16: cast once, outside the
    # forward path (this is the "hoisted" cast the perf review asked for).
    w_bf16 = jax.block_until_ready(weights.astype(jnp.bfloat16))

    out = style_projector_forward(data, w_bf16, biases)
    out = jax.block_until_ready(out)

    ref = jax.block_until_ready(_reference(data, weights, biases))
    assert out.shape == (B, N_LAYERS, D_OUT), out.shape
    # Weights / pooled stream through the MXU in bf16 (f32 accumulate), so compare
    # against the f32 reference with a correspondingly relaxed tolerance.
    err = float(np.max(np.abs(np.asarray(out) - np.asarray(ref))))
    assert np.allclose(np.asarray(out), np.asarray(ref), atol=2e-2, rtol=2e-2), err

    print("KERNEL_OK")
</pallas_src>

<mosaic_0001>
module attributes {stable_mosaic.version = 11 : i64} {
  func.func @_style_projector_kernel(%arg0: i32, %arg1: i32, %arg2: i32, %arg3: memref<3x2x8x768xf32, #tpu.memory_space<vmem>>, %arg4: memref<3x768x512xbf16, #tpu.memory_space<vmem>>, %arg5: memref<3x1x512xf32, #tpu.memory_space<vmem>>, %arg6: memref<2x1536xf32, #tpu.memory_space<vmem>>, %arg7: memref<3x2x768xf32, #tpu.memory_space<vmem>>, %arg8: memref<3x2x768xf32, #tpu.memory_space<vmem>>) attributes {dimension_semantics = [#tpu.dimension_semantics<parallel>, #tpu.dimension_semantics<parallel>, #tpu.dimension_semantics<arbitrary>], iteration_bounds = array<i64: 4, 1, 1>, scalar_prefetch = 0 : i64, scratch_operands = 2 : i64, tpu.core_type = #tpu.core_type<tc>, window_params = [{transform_indices = @transform_0, window_bounds = array<i64: 3, 2, 8, 768>}, {transform_indices = @transform_1, window_bounds = array<i64: 3, 768, 512>}, {transform_indices = @transform_2, window_bounds = array<i64: 3, 1, 512>}, {transform_indices = @transform_3, window_bounds = array<i64: 2, 1536>}]} {
    %c0_i32 = arith.constant 0 : i32
    %0 = arith.cmpi eq, %arg2, %c0_i32 : i32
    %1 = arith.extui %0 : i1 to i32
    %c0_i32_0 = arith.constant 0 : i32
    %2 = arith.cmpi ne, %1, %c0_i32_0 : i32
    scf.if %2 {
      %cst_53 = arith.constant 0.000000e+00 : f32
      %57 = vector.broadcast %cst_53 : f32 to vector<3x2x768xf32>
      %c0_54 = arith.constant 0 : index
      %c0_55 = arith.constant 0 : index
      %c0_56 = arith.constant 0 : index
      %58 = vector.load %arg7[%c0_54, %c0_55, %c0_56] : memref<3x2x768xf32, #tpu.memory_space<vmem>>, vector<3x2x768xf32>
      tpu.vector_store %arg7[%c0_54, %c0_55, %c0_56], %57 {strides = array<i32>} : memref<3x2x768xf32, #tpu.memory_space<vmem>>, vector<3x2x768xf32>,
      %cst_57 = arith.constant 0.000000e+00 : f32
      %59 = vector.broadcast %cst_57 : f32 to vector<3x2x768xf32>
      %c0_58 = arith.constant 0 : index
      %c0_59 = arith.constant 0 : index
      %c0_60 = arith.constant 0 : index
      %60 = vector.load %arg8[%c0_58, %c0_59, %c0_60] : memref<3x2x768xf32, #tpu.memory_space<vmem>>, vector<3x2x768xf32>
      tpu.vector_store %arg8[%c0_58, %c0_59, %c0_60], %59 {strides = array<i32>} : memref<3x2x768xf32, #tpu.memory_space<vmem>>, vector<3x2x768xf32>,
    } else {
    }
    %c0 = arith.constant 0 : index
    %c0_1 = arith.constant 0 : index
    %c0_2 = arith.constant 0 : index
    %c0_3 = arith.constant 0 : index
    %3 = vector.load %arg3[%c0, %c0_1, %c0_2, %c0_3] : memref<3x2x8x768xf32, #tpu.memory_space<vmem>>, vector<1x2x8x768xf32>
    %4 = vector.shape_cast %3 : vector<1x2x8x768xf32> to vector<2x8x768xf32>
    %c0_4 = arith.constant 0 : index
    %c0_5 = arith.constant 0 : index
    %c0_6 = arith.constant 0 : index
    %5 = vector.load %arg7[%c0_4, %c0_5, %c0_6] : memref<3x2x768xf32, #tpu.memory_space<vmem>>, vector<1x2x768xf32>
    %6 = vector.shape_cast %5 : vector<1x2x768xf32> to vector<2x768xf32>
    %cst = arith.constant dense<0.000000e+00> : vector<2x768xf32>
    %7 = vector.multi_reduction <add>, %4, %cst [1] : vector<2x8x768xf32> to vector<2x768xf32>
    %8 = arith.addf %6, %7 : vector<2x768xf32>
    %c0_7 = arith.constant 0 : index
    %c0_8 = arith.constant 0 : index
    %c0_9 = arith.constant 0 : index
    %9 = vector.load %arg7[%c0_7, %c0_8, %c0_9] : memref<3x2x768xf32, #tpu.memory_space<vmem>>, vector<1x2x768xf32>
    %10 = vector.shape_cast %9 : vector<1x2x768xf32> to vector<2x768xf32>
    %11 = vector.shape_cast %8 : vector<2x768xf32> to vector<1x2x768xf32>
    tpu.vector_store %arg7[%c0_7, %c0_8, %c0_9], %11 {strides = array<i32>} : memref<3x2x768xf32, #tpu.memory_space<vmem>>, vector<1x2x768xf32>,
    %c0_10 = arith.constant 0 : index
    %c0_11 = arith.constant 0 : index
    %c0_12 = arith.constant 0 : index
    %12 = vector.load %arg8[%c0_10, %c0_11, %c0_12] : memref<3x2x768xf32, #tpu.memory_space<vmem>>, vector<1x2x768xf32>
    %13 = vector.shape_cast %12 : vector<1x2x768xf32> to vector<2x768xf32>
    %14 = arith.mulf %4, %4 : vector<2x8x768xf32>
    %cst_13 = arith.constant dense<0.000000e+00> : vector<2x768xf32>
    %15 = vector.multi_reduction <add>, %14, %cst_13 [1] : vector<2x8x768xf32> to vector<2x768xf32>
    %16 = arith.addf %13, %15 : vector<2x768xf32>
    %c0_14 = arith.constant 0 : index
    %c0_15 = arith.constant 0 : index
    %c0_16 = arith.constant 0 : index
    %17 = vector.load %arg8[%c0_14, %c0_15, %c0_16] : memref<3x2x768xf32, #tpu.memory_space<vmem>>, vector<1x2x768xf32>
    %18 = vector.shape_cast %17 : vector<1x2x768xf32> to vector<2x768xf32>
    %19 = vector.shape_cast %16 : vector<2x768xf32> to vector<1x2x768xf32>
    tpu.vector_store %arg8[%c0_14, %c0_15, %c0_16], %19 {strides = array<i32>} : memref<3x2x768xf32, #tpu.memory_space<vmem>>, vector<1x2x768xf32>,
    %c1 = arith.constant 1 : index
    %c0_17 = arith.constant 0 : index
    %c0_18 = arith.constant 0 : index
    %c0_19 = arith.constant 0 : index
    %20 = vector.load %arg3[%c1, %c0_17, %c0_18, %c0_19] : memref<3x2x8x768xf32, #tpu.memory_space<vmem>>, vector<1x2x8x768xf32>
    %21 = vector.shape_cast %20 : vector<1x2x8x768xf32> to vector<2x8x768xf32>
    %c1_20 = arith.constant 1 : index
    %c0_21 = arith.constant 0 : index
    %c0_22 = arith.constant 0 : index
    %22 = vector.load %arg7[%c1_20, %c0_21, %c0_22] : memref<3x2x768xf32, #tpu.memory_space<vmem>>, vector<1x2x768xf32>
    %23 = vector.shape_cast %22 : vector<1x2x768xf32> to vector<2x768xf32>
    %cst_23 = arith.constant dense<0.000000e+00> : vector<2x768xf32>
    %24 = vector.multi_reduction <add>, %21, %cst_23 [1] : vector<2x8x768xf32> to vector<2x768xf32>
    %25 = arith.addf %23, %24 : vector<2x768xf32>
    %c1_24 = arith.constant 1 : index
    %c0_25 = arith.constant 0 : index
    %c0_26 = arith.constant 0 : index
    %26 = vector.load %arg7[%c1_24, %c0_25, %c0_26] : memref<3x2x768xf32, #tpu.memory_space<vmem>>, vector<1x2x768xf32>
    %27 = vector.shape_cast %26 : vector<1x2x768xf32> to vector<2x768xf32>
    %28 = vector.shape_cast %25 : vector<2x768xf32> to vector<1x2x768xf32>
    tpu.vector_store %arg7[%c1_24, %c0_25, %c0_26], %28 {strides = array<i32>} : memref<3x2x768xf32, #tpu.memory_space<vmem>>, vector<1x2x768xf32>,
    %c1_27 = arith.constant 1 : index
    %c0_28 = arith.constant 0 : index
    %c0_29 = arith.constant 0 : index
    %29 = vector.load %arg8[%c1_27, %c0_28, %c0_29] : memref<3x2x768xf32, #tpu.memory_space<vmem>>, vector<1x2x768xf32>
    %30 = vector.shape_cast %29 : vector<1x2x768xf32> to vector<2x768xf32>
    %31 = arith.mulf %21, %21 : vector<2x8x768xf32>
    %cst_30 = arith.constant dense<0.000000e+00> : vector<2x768xf32>
    %32 = vector.multi_reduction <add>, %31, %cst_30 [1] : vector<2x8x768xf32> to vector<2x768xf32>
    %33 = arith.addf %30, %32 : vector<2x768xf32>
    %c1_31 = arith.constant 1 : index
    %c0_32 = arith.constant 0 : index
    %c0_33 = arith.constant 0 : index
    %34 = vector.load %arg8[%c1_31, %c0_32, %c0_33] : memref<3x2x768xf32, #tpu.memory_space<vmem>>, vector<1x2x768xf32>
    %35 = vector.shape_cast %34 : vector<1x2x768xf32> to vector<2x768xf32>
    %36 = vector.shape_cast %33 : vector<2x768xf32> to vector<1x2x768xf32>
    tpu.vector_store %arg8[%c1_31, %c0_32, %c0_33], %36 {strides = array<i32>} : memref<3x2x768xf32, #tpu.memory_space<vmem>>, vector<1x2x768xf32>,
    %c2 = arith.constant 2 : index
    %c0_34 = arith.constant 0 : index
    %c0_35 = arith.constant 0 : index
    %c0_36 = arith.constant 0 : index
    %37 = vector.load %arg3[%c2, %c0_34, %c0_35, %c0_36] : memref<3x2x8x768xf32, #tpu.memory_space<vmem>>, vector<1x2x8x768xf32>
    %38 = vector.shape_cast %37 : vector<1x2x8x768xf32> to vector<2x8x768xf32>
    %c2_37 = arith.constant 2 : index
    %c0_38 = arith.constant 0 : index
    %c0_39 = arith.constant 0 : index
    %39 = vector.load %arg7[%c2_37, %c0_38, %c0_39] : memref<3x2x768xf32, #tpu.memory_space<vmem>>, vector<1x2x768xf32>
    %40 = vector.shape_cast %39 : vector<1x2x768xf32> to vector<2x768xf32>
    %cst_40 = arith.constant dense<0.000000e+00> : vector<2x768xf32>
    %41 = vector.multi_reduction <add>, %38, %cst_40 [1] : vector<2x8x768xf32> to vector<2x768xf32>
    %42 = arith.addf %40, %41 : vector<2x768xf32>
    %c2_41 = arith.constant 2 : index
    %c0_42 = arith.constant 0 : index
    %c0_43 = arith.constant 0 : index
    %43 = vector.load %arg7[%c2_41, %c0_42, %c0_43] : memref<3x2x768xf32, #tpu.memory_space<vmem>>, vector<1x2x768xf32>
    %44 = vector.shape_cast %43 : vector<1x2x768xf32> to vector<2x768xf32>
    %45 = vector.shape_cast %42 : vector<2x768xf32> to vector<1x2x768xf32>
    tpu.vector_store %arg7[%c2_41, %c0_42, %c0_43], %45 {strides = array<i32>} : memref<3x2x768xf32, #tpu.memory_space<vmem>>, vector<1x2x768xf32>,
    %c2_44 = arith.constant 2 : index
    %c0_45 = arith.constant 0 : index
    %c0_46 = arith.constant 0 : index
    %46 = vector.load %arg8[%c2_44, %c0_45, %c0_46] : memref<3x2x768xf32, #tpu.memory_space<vmem>>, vector<1x2x768xf32>
    %47 = vector.shape_cast %46 : vector<1x2x768xf32> to vector<2x768xf32>
    %48 = arith.mulf %38, %38 : vector<2x8x768xf32>
    %cst_47 = arith.constant dense<0.000000e+00> : vector<2x768xf32>
    %49 = vector.multi_reduction <add>, %48, %cst_47 [1] : vector<2x8x768xf32> to vector<2x768xf32>
    %50 = arith.addf %47, %49 : vector<2x768xf32>
    %c2_48 = arith.constant 2 : index
    %c0_49 = arith.constant 0 : index
    %c0_50 = arith.constant 0 : index
    %51 = vector.load %arg8[%c2_48, %c0_49, %c0_50] : memref<3x2x768xf32, #tpu.memory_space<vmem>>, vector<1x2x768xf32>
    %52 = vector.shape_cast %51 : vector<1x2x768xf32> to vector<2x768xf32>
    %53 = vector.shape_cast %50 : vector<2x768xf32> to vector<1x2x768xf32>
    tpu.vector_store %arg8[%c2_48, %c0_49, %c0_50], %53 {strides = array<i32>} : memref<3x2x768xf32, #tpu.memory_space<vmem>>, vector<1x2x768xf32>,
    %c0_i32_51 = arith.constant 0 : i32
    %54 = arith.cmpi eq, %arg2, %c0_i32_51 : i32
    %55 = arith.extui %54 : i1 to i32
    %c0_i32_52 = arith.constant 0 : i32
    %56 = arith.cmpi ne, %55, %c0_i32_52 : i32
    scf.if %56 {
      %c0_53 = arith.constant 0 : index
      %c0_54 = arith.constant 0 : index
      %c0_55 = arith.constant 0 : index
      %57 = vector.load %arg7[%c0_53, %c0_54, %c0_55] : memref<3x2x768xf32, #tpu.memory_space<vmem>>, vector<1x2x768xf32>
      %58 = vector.shape_cast %57 : vector<1x2x768xf32> to vector<2x768xf32>
      %c0_56 = arith.constant 0 : index
      %c0_57 = arith.constant 0 : index
      %c0_58 = arith.constant 0 : index
      %59 = vector.load %arg8[%c0_56, %c0_57, %c0_58] : memref<3x2x768xf32, #tpu.memory_space<vmem>>, vector<1x2x768xf32>
      %60 = vector.shape_cast %59 : vector<1x2x768xf32> to vector<2x768xf32>
      %cst_59 = arith.constant 1.250000e-01 : f32
      %61 = vector.broadcast %cst_59 : f32 to vector<2x768xf32>
      %62 = arith.mulf %58, %61 : vector<2x768xf32>
      %63 = arith.mulf %62, %58 : vector<2x768xf32>
      %64 = arith.subf %60, %63 : vector<2x768xf32>
      %cst_60 = arith.constant 0.000000e+00 : f32
      %65 = vector.broadcast %cst_60 : f32 to vector<2x768xf32>
      %66 = arith.maximumf %64, %65 : vector<2x768xf32>
      %cst_61 = arith.constant 2.300000e-08 : f32
      %67 = vector.broadcast %cst_61 : f32 to vector<2x768xf32>
      %68 = arith.addf %66, %67 : vector<2x768xf32>
      %cst_62 = arith.constant 1.250000e-01 : f32
      %69 = vector.broadcast %cst_62 : f32 to vector<2x768xf32>
      %70 = arith.mulf %68, %69 : vector<2x768xf32>
      %71 = math.sqrt %70 : vector<2x768xf32>
      %72 = arith.addf %62, %71 : vector<2x768xf32>
      %cst_63 = arith.constant 5.000000e-01 : f32
      %73 = vector.broadcast %cst_63 : f32 to vector<2x768xf32>
      %74 = arith.mulf %72, %73 : vector<2x768xf32>
      %75 = arith.truncf %74 : vector<2x768xf32> to vector<2x768xbf16>
      %c0_64 = arith.constant 0 : index
      %c0_65 = arith.constant 0 : index
      %c0_66 = arith.constant 0 : index
      %76 = vector.load %arg4[%c0_64, %c0_65, %c0_66] : memref<3x768x512xbf16, #tpu.memory_space<vmem>>, vector<1x768x512xbf16>
      %77 = vector.shape_cast %76 : vector<1x768x512xbf16> to vector<768x512xbf16>
      %cst_67 = arith.constant dense<0.000000e+00> : vector<2x512xf32>
      %78 = tpu.matmul %75, %77, %cst_67 {dimension_numbers = #tpu.dot_dimension_numbers<[1], [0], [0], [1], [0, 0, 1, 1], [], []>} : vector<2x768xbf16>, vector<768x512xbf16>, vector<2x512xf32> -> vector<2x512xf32>
      %c0_68 = arith.constant 0 : index
      %c0_69 = arith.constant 0 : index
      %c0_70 = arith.constant 0 : index
      %79 = vector.load %arg5[%c0_68, %c0_69, %c0_70] : memref<3x1x512xf32, #tpu.memory_space<vmem>>, vector<1x1x512xf32>
      %80 = vector.shape_cast %79 : vector<1x1x512xf32> to vector<512xf32>
      %81 = vector.shape_cast %80 : vector<512xf32> to vector<1x512xf32>
      %82 = vector.broadcast %81 : vector<1x512xf32> to vector<2x512xf32>
      %83 = arith.addf %78, %82 : vector<2x512xf32>
      %c0_71 = arith.constant 0 : index
      %c0_72 = arith.constant 0 : index
      %84 = vector.load %arg6[%c0_71, %c0_72] : memref<2x1536xf32, #tpu.memory_space<vmem>>, vector<2x512xf32>
      tpu.vector_store %arg6[%c0_71, %c0_72], %83 {strides = array<i32>} : memref<2x1536xf32, #tpu.memory_space<vmem>>, vector<2x512xf32>,
      %c1_73 = arith.constant 1 : index
      %c0_74 = arith.constant 0 : index
      %c0_75 = arith.constant 0 : index
      %85 = vector.load %arg7[%c1_73, %c0_74, %c0_75] : memref<3x2x768xf32, #tpu.memory_space<vmem>>, vector<1x2x768xf32>
      %86 = vector.shape_cast %85 : vector<1x2x768xf32> to vector<2x768xf32>
      %c1_76 = arith.constant 1 : index
      %c0_77 = arith.constant 0 : index
      %c0_78 = arith.constant 0 : index
      %87 = vector.load %arg8[%c1_76, %c0_77, %c0_78] : memref<3x2x768xf32, #tpu.memory_space<vmem>>, vector<1x2x768xf32>
      %88 = vector.shape_cast %87 : vector<1x2x768xf32> to vector<2x768xf32>
      %cst_79 = arith.constant 1.250000e-01 : f32
      %89 = vector.broadcast %cst_79 : f32 to vector<2x768xf32>
      %90 = arith.mulf %86, %89 : vector<2x768xf32>
      %91 = arith.mulf %90, %86 : vector<2x768xf32>
      %92 = arith.subf %88, %91 : vector<2x768xf32>
      %cst_80 = arith.constant 0.000000e+00 : f32
      %93 = vector.broadcast %cst_80 : f32 to vector<2x768xf32>
      %94 = arith.maximumf %92, %93 : vector<2x768xf32>
      %cst_81 = arith.constant 2.300000e-08 : f32
      %95 = vector.broadcast %cst_81 : f32 to vector<2x768xf32>
      %96 = arith.addf %94, %95 : vector<2x768xf32>
      %cst_82 = arith.constant 1.250000e-01 : f32
      %97 = vector.broadcast %cst_82 : f32 to vector<2x768xf32>
      %98 = arith.mulf %96, %97 : vector<2x768xf32>
      %99 = math.sqrt %98 : vector<2x768xf32>
      %100 = arith.addf %90, %99 : vector<2x768xf32>
      %cst_83 = arith.constant 5.000000e-01 : f32
      %101 = vector.broadcast %cst_83 : f32 to vector<2x768xf32>
      %102 = arith.mulf %100, %101 : vector<2x768xf32>
      %103 = arith.truncf %102 : vector<2x768xf32> to vector<2x768xbf16>
      %c1_84 = arith.constant 1 : index
      %c0_85 = arith.constant 0 : index
      %c0_86 = arith.constant 0 : index
      %104 = vector.load %arg4[%c1_84, %c0_85, %c0_86] : memref<3x768x512xbf16, #tpu.memory_space<vmem>>, vector<1x768x512xbf16>
      %105 = vector.shape_cast %104 : vector<1x768x512xbf16> to vector<768x512xbf16>
      %cst_87 = arith.constant dense<0.000000e+00> : vector<2x512xf32>
      %106 = tpu.matmul %103, %105, %cst_87 {dimension_numbers = #tpu.dot_dimension_numbers<[1], [0], [0], [1], [0, 0, 1, 1], [], []>} : vector<2x768xbf16>, vector<768x512xbf16>, vector<2x512xf32> -> vector<2x512xf32>
      %c1_88 = arith.constant 1 : index
      %c0_89 = arith.constant 0 : index
      %c0_90 = arith.constant 0 : index
      %107 = vector.load %arg5[%c1_88, %c0_89, %c0_90] : memref<3x1x512xf32, #tpu.memory_space<vmem>>, vector<1x1x512xf32>
      %108 = vector.shape_cast %107 : vector<1x1x512xf32> to vector<512xf32>
      %109 = vector.shape_cast %108 : vector<512xf32> to vector<1x512xf32>
      %110 = vector.broadcast %109 : vector<1x512xf32> to vector<2x512xf32>
      %111 = arith.addf %106, %110 : vector<2x512xf32>
      %c0_91 = arith.constant 0 : index
      %c512 = arith.constant 512 : index
      %112 = vector.load %arg6[%c0_91, %c512] : memref<2x1536xf32, #tpu.memory_space<vmem>>, vector<2x512xf32>
      tpu.vector_store %arg6[%c0_91, %c512], %111 {strides = array<i32>} : memref<2x1536xf32, #tpu.memory_space<vmem>>, vector<2x512xf32>,
      %c2_92 = arith.constant 2 : index
      %c0_93 = arith.constant 0 : index
      %c0_94 = arith.constant 0 : index
      %113 = vector.load %arg7[%c2_92, %c0_93, %c0_94] : memref<3x2x768xf32, #tpu.memory_space<vmem>>, vector<1x2x768xf32>
      %114 = vector.shape_cast %113 : vector<1x2x768xf32> to vector<2x768xf32>
      %c2_95 = arith.constant 2 : index
      %c0_96 = arith.constant 0 : index
      %c0_97 = arith.constant 0 : index
      %115 = vector.load %arg8[%c2_95, %c0_96, %c0_97] : memref<3x2x768xf32, #tpu.memory_space<vmem>>, vector<1x2x768xf32>
      %116 = vector.shape_cast %115 : vector<1x2x768xf32> to vector<2x768xf32>
      %cst_98 = arith.constant 1.250000e-01 : f32
      %117 = vector.broadcast %cst_98 : f32 to vector<2x768xf32>
      %118 = arith.mulf %114, %117 : vector<2x768xf32>
      %119 = arith.mulf %118, %114 : vector<2x768xf32>
      %120 = arith.subf %116, %119 : vector<2x768xf32>
      %cst_99 = arith.constant 0.000000e+00 : f32
      %121 = vector.broadcast %cst_99 : f32 to vector<2x768xf32>
      %122 = arith.maximumf %120, %121 : vector<2x768xf32>
      %cst_100 = arith.constant 2.300000e-08 : f32
      %123 = vector.broadcast %cst_100 : f32 to vector<2x768xf32>
      %124 = arith.addf %122, %123 : vector<2x768xf32>
      %cst_101 = arith.constant 1.250000e-01 : f32
      %125 = vector.broadcast %cst_101 : f32 to vector<2x768xf32>
      %126 = arith.mulf %124, %125 : vector<2x768xf32>
      %127 = math.sqrt %126 : vector<2x768xf32>
      %128 = arith.addf %118, %127 : vector<2x768xf32>
      %cst_102 = arith.constant 5.000000e-01 : f32
      %129 = vector.broadcast %cst_102 : f32 to vector<2x768xf32>
      %130 = arith.mulf %128, %129 : vector<2x768xf32>
      %131 = arith.truncf %130 : vector<2x768xf32> to vector<2x768xbf16>
      %c2_103 = arith.constant 2 : index
      %c0_104 = arith.constant 0 : index
      %c0_105 = arith.constant 0 : index
      %132 = vector.load %arg4[%c2_103, %c0_104, %c0_105] : memref<3x768x512xbf16, #tpu.memory_space<vmem>>, vector<1x768x512xbf16>
      %133 = vector.shape_cast %132 : vector<1x768x512xbf16> to vector<768x512xbf16>
      %cst_106 = arith.constant dense<0.000000e+00> : vector<2x512xf32>
      %134 = tpu.matmul %131, %133, %cst_106 {dimension_numbers = #tpu.dot_dimension_numbers<[1], [0], [0], [1], [0, 0, 1, 1], [], []>} : vector<2x768xbf16>, vector<768x512xbf16>, vector<2x512xf32> -> vector<2x512xf32>
      %c2_107 = arith.constant 2 : index
      %c0_108 = arith.constant 0 : index
      %c0_109 = arith.constant 0 : index
      %135 = vector.load %arg5[%c2_107, %c0_108, %c0_109] : memref<3x1x512xf32, #tpu.memory_space<vmem>>, vector<1x1x512xf32>
      %136 = vector.shape_cast %135 : vector<1x1x512xf32> to vector<512xf32>
      %137 = vector.shape_cast %136 : vector<512xf32> to vector<1x512xf32>
      %138 = vector.broadcast %137 : vector<1x512xf32> to vector<2x512xf32>
      %139 = arith.addf %134, %138 : vector<2x512xf32>
      %c0_110 = arith.constant 0 : index
      %c1024 = arith.constant 1024 : index
      %140 = vector.load %arg6[%c0_110, %c1024] : memref<2x1536xf32, #tpu.memory_space<vmem>>, vector<2x512xf32>
      tpu.vector_store %arg6[%c0_110, %c1024], %139 {strides = array<i32>} : memref<2x1536xf32, #tpu.memory_space<vmem>>, vector<2x512xf32>,
    } else {
    }
    return
  }
  func.func @transform_0(%arg0: i32, %arg1: i32, %arg2: i32) -> (i32, i32, i32, i32) {
    %c0_i32 = arith.constant 0 : i32
    %c0_i32_0 = arith.constant 0 : i32
    return %arg0, %arg1, %arg2, %c0_i32 : i32, i32, i32, i32
  }
  func.func @transform_1(%arg0: i32, %arg1: i32, %arg2: i32) -> (i32, i32, i32) {
    %c0_i32 = arith.constant 0 : i32
    %c0_i32_0 = arith.constant 0 : i32
    %c0_i32_1 = arith.constant 0 : i32
    return %arg0, %c0_i32, %c0_i32_0 : i32, i32, i32
  }
  func.func @transform_2(%arg0: i32, %arg1: i32, %arg2: i32) -> (i32, i32, i32) {
    %c0_i32 = arith.constant 0 : i32
    %c0_i32_0 = arith.constant 0 : i32
    %c0_i32_1 = arith.constant 0 : i32
    return %arg0, %c0_i32, %c0_i32_0 : i32, i32, i32
  }
  func.func @transform_3(%arg0: i32, %arg1: i32, %arg2: i32) -> (i32, i32) {
    %c0_i32 = arith.constant 0 : i32
    return %arg1, %arg0 : i32, i32
  }
}

</mosaic_0001>

<llo_original>
// kernel: tpu_custom_call.1
$region0: #{tpu_custom_call.1}
  #allocation0 [shape = 'u32[]', space=smem, size = 0x4, offset = 0x4, fixed_abs, tag = 'smem constant byte address 0x4 - core index']
  #allocation1 [shape = 'u32[144,128]{1,0:T(1,128)}', space=vmem, size = 0x12000, scoped, tag = 'internal scratch']
  #allocation2 [shape = 'f32[3,2,768]{2,1,0:T(2,128)}', space=vmem, size = 0x4800, scoped, tag = 'scratch operand']
  #allocation3 [shape = 'f32[3,2,768]{2,1,0:T(2,128)}', space=vmem, size = 0x4800, scoped, tag = 'scratch operand']
  %s0 = inlined_call_operand.hbm [shape: f32[12,2,8,768], index: 0, kind: input, shape index: {}]
  %s1 = inlined_call_operand.hbm [shape: bf16[12,768,512], index: 1, kind: input, shape index: {}]
  %s2 = inlined_call_operand.hbm [shape: f32[12,1,512], index: 2, kind: input, shape index: {}]
  %s3 = inlined_call_operand.hbm [shape: f32[2,6144], index: 3, kind: output, shape index: {}]
  %s4 = sld [smem:[#allocation0]]
  $region65: #{tpu_custom_call.1} parent=0
    _
  %s6 = ssub.s32 1, %s4
  %s7 = scalar_select 0, %s6, %s4
  $region1: #{tpu_custom_call.1} parent=0
    #allocation4 [shape = 'u8[294912]{0}', space=vmem, size = 0x48000, scoped, tag = 'input window, operand 0']
    #allocation5 [shape = 's32[2]{0}', space=sflag, size = 0x8, scoped, tag = 'scoped memory for tpu_custom_call.1']
    #allocation6 [shape = 's32[2]{0}', space=sflag, size = 0x8, scoped, tag = 'scoped memory for tpu_custom_call.1']
    #allocation7 [shape = 'u8[4718592]{0}', space=vmem, size = 0x480000, scoped, tag = 'input window, operand 1']
    #allocation8 [shape = 's32[2]{0}', space=sflag, size = 0x8, scoped, tag = 'scoped memory for tpu_custom_call.1']
    #allocation9 [shape = 'u8[12288]{0}', space=vmem, size = 0x3000, scoped, tag = 'input window, operand 2']
    #allocation10 [shape = 'u8[24576]{0}', space=vmem, size = 0x6000, scoped, tag = 'output window, operand 0']
    %8 = vsyncpa [#allocation5], 0
    %s9 = scalar_lea.sflag [#allocation5], 1
    %10 = vsyncpa %s9, 0
    %11 = vsyncpa [#allocation8], 0
    %s12 = scalar_lea.sflag [#allocation8], 1
    %13 = vsyncpa %s12, 0
    %14 = vsyncpa [#allocation6], 0
    %s15 = scalar_lea.sflag [#allocation6], 1
    %16 = vsyncpa %s15, 0
    loop: start=0, step=1, limit=6
    $region2: #{tpu_custom_call.1} parent=1 // loop_pre_header
      _
    $region3: #{tpu_custom_call.1} parent=1 // loop_header
      %s18 = sphi 0, %s22
      %p19 = scmp.ge.s32.totalorder %s18, 6
      %s25 = sphi 0, %s44
      %s26 = sphi 0, %s40
      %s27 = sphi 0, %s36
      %s28 = sphi 0, %s25
      %s29 = sphi 0, %s26
      %s30 = sphi 0, %s27
      %s31 = sphi 0, %s28
      %s32 = sphi 0, %s29
      %s33 = sphi 0, %s30
      %s51 = sphi 0, %s53
      %s54 = sphi 0, %s51
      %s55 = sphi 0, %s54
      %s71 = sphi 0, %s55
      %s77 = sphi 0, %s79
      %s80 = sphi 0, %s77
      %s81 = sphi 0, %s80
      %s97 = sphi 0, %s81
      %s103 = sphi 0, %s105
      %s106 = sphi 0, %s103
      %s107 = sphi 0, %s106
      %s123 = sphi 0, %s107
      %s131 = sphi 0, %s133
      %s134 = sphi 0, %s131
      %s135 = sphi 0, %s134
      %s151 = sphi 0, %s135
    $region4: #{tpu_custom_call.1} parent=1 // loop_header_branch
      %21 = sbr.rel (%p19) target = $region8
    $region5: #{tpu_custom_call.1} parent=1 // loop_body
      %s23 = ssub.s32 %s18, 1
      %s24 = ssub.s32 %s18, 2
      %s34 = sadd.s32 1, %s27
      %p35 = scmp.ge.s32.totalorder %s34, 1
      %s36 = scalar_select %p35, 0, %s34
      %s37 = sadd.s32 1, %s26
      %s38 = scalar_select %p35, %s37, %s26
      %p39 = scmp.ge.s32.totalorder %s38, 1
      %s40 = scalar_select %p39, 0, %s38
      %s41 = sadd.s32 1, %s25
      %s42 = scalar_select %p39, %s41, %s25
      %p43 = scmp.ge.s32.totalorder %s42, 4
      %s44 = scalar_select %p43, 0, %s42
      %s45 = ssub.s32 %s25, %s44
      %s46 = ssub.s32 %s26, %s40
      %s47 = sor.u32 %s45, %s46
      %s48 = ssub.s32 %s27, %s36
      %s49 = sor.u32 %s47, %s48
      %p50 = scmp.eq.s32.totalorder %s49, 0
      %s52 = sadd.s32 %s51, 1
      %s53 = scalar_select %p50, %s51, %s52
      %p56 = pneg %p50
      %p57 = scmp.eq.s32.totalorder %s18, 3
      %p58 = por %p56, %p57
      %p59 = scmp.ne.s32.totalorder %s51, %s54
      %p60 = scmp.eq.s32.totalorder %s18, 0
      %p61 = por %p59, %p60
      %p62 = scmp.ne.s32.totalorder %s51, %s54
      %p63 = scmp.eq.s32.totalorder %s23, 3
      %p64 = por %p62, %p63
      %p65 = scmp.ne.s32.totalorder %s54, %s55
      %p66 = scmp.eq.s32.totalorder %s23, 0
      %p67 = por %p65, %p66
      %p68 = scmp.ne.s32.totalorder %s54, %s55
      %p69 = scmp.eq.s32.totalorder %s24, 3
      %p70 = por %p68, %p69
      %p72 = scmp.ne.s32.totalorder %s55, %s71
      %p73 = scmp.eq.s32.totalorder %s24, 0
      %p74 = por %p72, %p73
      %s75 = ssub.s32 %s25, %s44
      %p76 = scmp.eq.s32.totalorder %s75, 0
      %s78 = sadd.s32 %s77, 1
      %s79 = scalar_select %p76, %s77, %s78
      %p82 = pneg %p76
      %p83 = scmp.eq.s32.totalorder %s18, 3
      %p84 = por %p82, %p83
      %p85 = scmp.ne.s32.totalorder %s77, %s80
      %p86 = scmp.eq.s32.totalorder %s18, 0
      %p87 = por %p85, %p86
      %p88 = scmp.ne.s32.totalorder %s77, %s80
      %p89 = scmp.eq.s32.totalorder %s23, 3
      %p90 = por %p88, %p89
      %p91 = scmp.ne.s32.totalorder %s80, %s81
      %p92 = scmp.eq.s32.totalorder %s23, 0
      %p93 = por %p91, %p92
      %p94 = scmp.ne.s32.totalorder %s80, %s81
      %p95 = scmp.eq.s32.totalorder %s24, 3
      %p96 = por %p94, %p95
      %p98 = scmp.ne.s32.totalorder %s81, %s97
      %p99 = scmp.eq.s32.totalorder %s24, 0
      %p100 = por %p98, %p99
      %s101 = ssub.s32 %s25, %s44
      %p102 = scmp.eq.s32.totalorder %s101, 0
      %s104 = sadd.s32 %s103, 1
      %s105 = scalar_select %p102, %s103, %s104
      %p108 = pneg %p102
      %p109 = scmp.eq.s32.totalorder %s18, 3
      %p110 = por %p108, %p109
      %p111 = scmp.ne.s32.totalorder %s103, %s106
      %p112 = scmp.eq.s32.totalorder %s18, 0
      %p113 = por %p111, %p112
      %p114 = scmp.ne.s32.totalorder %s103, %s106
      %p115 = scmp.eq.s32.totalorder %s23, 3
      %p116 = por %p114, %p115
      %p117 = scmp.ne.s32.totalorder %s106, %s107
      %p118 = scmp.eq.s32.totalorder %s23, 0
      %p119 = por %p117, %p118
      %p120 = scmp.ne.s32.totalorder %s106, %s107
      %p121 = scmp.eq.s32.totalorder %s24, 3
      %p122 = por %p120, %p121
      %p124 = scmp.ne.s32.totalorder %s107, %s123
      %p125 = scmp.eq.s32.totalorder %s24, 0
      %p126 = por %p124, %p125
      %s127 = ssub.s32 %s26, %s40
      %s128 = ssub.s32 %s25, %s44
      %s129 = sor.u32 %s127, %s128
      %p130 = scmp.eq.s32.totalorder %s129, 0
      %s132 = sadd.s32 %s131, 1
      %s133 = scalar_select %p130, %s131, %s132
      %p136 = pneg %p130
      %p137 = scmp.eq.s32.totalorder %s18, 3
      %p138 = por %p136, %p137
      %p139 = scmp.ne.s32.totalorder %s131, %s134
      %p140 = scmp.eq.s32.totalorder %s18, 0
      %p141 = por %p139, %p140
      %p142 = scmp.ne.s32.totalorder %s131, %s134
      %p143 = scmp.eq.s32.totalorder %s23, 3
      %p144 = por %p142, %p143
      %p145 = scmp.ne.s32.totalorder %s134, %s135
      %p146 = scmp.eq.s32.totalorder %s23, 0
      %p147 = por %p145, %p146
      %p148 = scmp.ne.s32.totalorder %s134, %s135
      %p149 = scmp.eq.s32.totalorder %s24, 3
      %p150 = por %p148, %p149
      %p152 = scmp.ne.s32.totalorder %s135, %s151
      %p153 = scmp.eq.s32.totalorder %s24, 0
      %p154 = por %p152, %p153
      %p155 = scmp.le.s32.totalorder 1, %s18
      %p156 = scmp.lt.s32.totalorder %s18, 5
      %p157 = pnand %p155, %p156
      %p158 = pneg %p157
      // Predicated region
      $region9: #{tpu_custom_call.1} parent=5 // pred_check
        _
      $region10: #{tpu_custom_call.1} parent=5 // pred_check_branch
        %160 = sbr.rel (%p157) target = $region12
      $region11: #{tpu_custom_call.1} parent=5 // pred_region
        %s161 = ssub.s32 %s18, 1
      $region12: #{tpu_custom_call.1} parent=5 // pred_fallthru
        _
      %p162 = scmp.lt.s32.totalorder %s18, 4
      // Predicated region
      $region13: #{tpu_custom_call.1} parent=5 // pred_check
        %p163 = pneg %p162
      $region14: #{tpu_custom_call.1} parent=5 // pred_check_branch
        %165 = sbr.rel (%p163) target = $region16
      $region15: #{tpu_custom_call.1} parent=5 // pred_region
        // Predicated region
        $region17: #{tpu_custom_call.1} parent=15 // pred_check
          %p166 = pneg %p61
        $region18: #{tpu_custom_call.1} parent=15 // pred_check_branch
          %168 = sbr.rel (%p166) target = $region20
        $region19: #{tpu_custom_call.1} parent=15 // pred_region
          %s169 = sand.u32 %s51, 1
          %s170 = scalar_lea.sflag [#allocation5], %s169
          %s171 = sand.u32 %s51, 1
          %s172 = smul.addr %s171, 288
          %s173 = scalar_lea.vmem [#allocation4], %s172
          %s174 = smul.u32 3, %s25
          %s175 = smul.u32 2, %s26
          %s177 = ssub.s32 4608, 4608
          %178 = vsyncadd %s170, %s177
          %s179 = smul.addr %s27, 6
          %s180 = smul.addr %s175, 6
          %s181 = sadd.s32 %s179, %s180
          %s182 = smul.addr %s174, 12
          %s183 = sadd.s32 %s181, %s182
          %s184 = smul.addr %s183, 128
          %s185 = scalar_lea.hbm %s0, %s184
          %s186 = sshll.u32 %s173, 4
          %s187 = int_to_ptr.vmem [resolvable:$true] %s186
          %192 = dma.hbm_to_vmem [thread:$0]  %s185, 4608, %s187, %s170, 768, 768, 48
        $region20: #{tpu_custom_call.1} parent=15 // pred_fallthru
          _
        // Predicated region
        $region21: #{tpu_custom_call.1} parent=15 // pred_check
          %p193 = pneg %p87
        $region22: #{tpu_custom_call.1} parent=15 // pred_check_branch
          %195 = sbr.rel (%p193) target = $region24
        $region23: #{tpu_custom_call.1} parent=15 // pred_region
          %s196 = sand.u32 %s18, 1
          %s197 = scalar_lea.sflag [#allocation8], %s196
          %s198 = sand.u32 %s77, 1
          %s199 = smul.addr %s198, 4608
          %s200 = scalar_lea.vmem [#allocation7], %s199
          %s201 = smul.u32 3, %s25
          %s203 = ssub.s32 73728, 73728
          %204 = vsyncadd %s197, %s203
          %s205 = smul.addr %s201, 384
          %s206 = smul.addr %s205, 64
          %s207 = scalar_lea.hbm %s1, %s206
          %s208 = sshll.u32 %s200, 4
          %s209 = int_to_ptr.vmem [resolvable:$true] %s208
          %214 = dma.hbm_to_vmem [thread:$0]  %s207, 73728, %s209, %s197, 256, 256, 16
        $region24: #{tpu_custom_call.1} parent=15 // pred_fallthru
          _
        // Predicated region
        $region25: #{tpu_custom_call.1} parent=15 // pred_check
          %p215 = pneg %p113
        $region26: #{tpu_custom_call.1} parent=15 // pred_check_branch
          %217 = sbr.rel (%p215) target = $region28
        $region27: #{tpu_custom_call.1} parent=15 // pred_region
          %s218 = sand.u32 %s18, 1
          %s219 = scalar_lea.sflag [#allocation8], %s218
          %s220 = sand.u32 %s103, 1
          %s221 = smul.addr %s220, 12
          %s222 = scalar_lea.vmem [#allocation9], %s221
          %s223 = smul.u32 3, %s25
          %s225 = ssub.s32 192, 192
          %226 = vsyncadd %s219, %s225
          %s227 = smul.addr %s223, 4
          %s228 = smul.addr %s227, 16
          %s229 = scalar_lea.hbm %s2, %s228
          %s230 = sshll.u32 %s222, 4
          %s231 = int_to_ptr.vmem [resolvable:$true] %s230
          %236 = dma.hbm_to_vmem [thread:$0]  %s229, 192, %s231, %s219, 64, 64, 4
        $region28: #{tpu_custom_call.1} parent=15 // pred_fallthru
          _
      $region16: #{tpu_custom_call.1} parent=5 // pred_fallthru
        _
      %p237 = scmp.le.s32.totalorder 1, %s18
      %p238 = scmp.lt.s32.totalorder %s18, 5
      %p239 = pnand %p237, %p238
      %p240 = pneg %p239
      // Predicated region
      $region29: #{tpu_custom_call.1} parent=5 // pred_check
        _
      $region30: #{tpu_custom_call.1} parent=5 // pred_check_branch
        %242 = sbr.rel (%p239) target = $region32
      $region31: #{tpu_custom_call.1} parent=5 // pred_region
        %s243 = ssub.s32 %s18, 1
        %s244 = sand.u32 %s54, 1
        %s245 = scalar_lea.sflag [#allocation5], %s244
        %s246 = sand.u32 %s54, 1
        %s247 = smul.addr %s246, 288
        %s248 = scalar_lea.vmem [#allocation4], %s247
        // Predicated region
        $region33: #{tpu_custom_call.1} parent=31 // pred_check
          %p249 = pneg %p67
        $region34: #{tpu_custom_call.1} parent=31 // pred_check_branch
          %251 = sbr.rel (%p249) target = $region36
        $region35: #{tpu_custom_call.1} parent=31 // pred_region
          %252 = dma.done %s245, 4608
        $region36: #{tpu_custom_call.1} parent=31 // pred_fallthru
          _
        %s253 = sand.u32 %s23, 1
        %s254 = scalar_lea.sflag [#allocation8], %s253
        %s255 = sand.u32 %s80, 1
        %s256 = smul.addr %s255, 4608
        %s257 = scalar_lea.vmem [#allocation7], %s256
        // Predicated region
        $region37: #{tpu_custom_call.1} parent=31 // pred_check
          %p258 = pneg %p93
        $region38: #{tpu_custom_call.1} parent=31 // pred_check_branch
          %260 = sbr.rel (%p258) target = $region40
        $region39: #{tpu_custom_call.1} parent=31 // pred_region
          %261 = dma.done %s254, 73728
        $region40: #{tpu_custom_call.1} parent=31 // pred_fallthru
          _
        %s262 = sand.u32 %s23, 1
        %s263 = scalar_lea.sflag [#allocation8], %s262
        %s264 = sand.u32 %s106, 1
        %s265 = smul.addr %s264, 12
        %s266 = scalar_lea.vmem [#allocation9], %s265
        // Predicated region
        $region41: #{tpu_custom_call.1} parent=31 // pred_check
          %p267 = pneg %p119
        $region42: #{tpu_custom_call.1} parent=31 // pred_check_branch
          %269 = sbr.rel (%p267) target = $region44
        $region43: #{tpu_custom_call.1} parent=31 // pred_region
          %270 = dma.done %s263, 192
        $region44: #{tpu_custom_call.1} parent=31 // pred_fallthru
          _
        %s271 = sand.u32 %s54, 1
        %s272 = scalar_lea.sflag [#allocation5], %s271
        %s273 = sand.u32 %s54, 1
        %s274 = smul.addr %s273, 288
        %s275 = scalar_lea.vmem [#allocation4], %s274
        %p276 = pneg %p67
        %p277 = pneg %p64
        %s278 = sand.u32 %s23, 1
        %s279 = scalar_lea.sflag [#allocation8], %s278
        %s280 = sand.u32 %s80, 1
        %s281 = smul.addr %s280, 4608
        %s282 = scalar_lea.vmem [#allocation7], %s281
        %p283 = pneg %p93
        %p284 = pneg %p90
        %s285 = sand.u32 %s23, 1
        %s286 = scalar_lea.sflag [#allocation8], %s285
        %s287 = sand.u32 %s106, 1
        %s288 = smul.addr %s287, 12
        %s289 = scalar_lea.vmem [#allocation9], %s288
        %p290 = pneg %p119
        %p291 = pneg %p116
        %p292 = pneg %p147
        %p293 = pneg %p144
        %s294 = sand.u32 %s134, 1
        %s295 = scalar_lea.sflag [#allocation6], %s294
        %s296 = sand.u32 %s134, 1
        %s297 = smul.addr %s296, 24
        %s298 = scalar_lea.vmem [#allocation10], %s297
        %s299 = smul.u32 3, %s28
        %s300 = smul.u32 2, %s29
        %s301 = smul.u32 3, %s28
        %s302 = smul.u32 3, %s28
        %s303 = smul.u32 12, %s28
        %p304 = scmp.eq.s32.totalorder %s30, 0
        // Predicated region
        $region45: #{tpu_custom_call.1} parent=31 // pred_check
          %p305 = pneg %p304
        $region46: #{tpu_custom_call.1} parent=31 // pred_check_branch
          %307 = sbr.rel (%p305) target = $region48
        $region47: #{tpu_custom_call.1} parent=31 // pred_region
          %308 = vst [vmem:[#allocation2] sm:$0xff] 0.0
          %309 = vst [vmem:[#allocation2 + $0x8] sm:$0xf] 0.0
          %310 = vst [vmem:[#allocation2 + $0xc] sm:$0xff] 0.0
          %311 = vst [vmem:[#allocation2 + $0x14] sm:$0xf] 0.0
          %312 = vst [vmem:[#allocation2 + $0x18] sm:$0xff] 0.0
          %313 = vst [vmem:[#allocation2 + $0x20] sm:$0xf] 0.0
          %314 = vst [vmem:[#allocation3] sm:$0xff] 0.0
          %315 = vst [vmem:[#allocation3 + $0x8] sm:$0xf] 0.0
          %316 = vst [vmem:[#allocation3 + $0xc] sm:$0xff] 0.0
          %317 = vst [vmem:[#allocation3 + $0x14] sm:$0xf] 0.0
          %318 = vst [vmem:[#allocation3 + $0x18] sm:$0xff] 0.0
          %319 = vst [vmem:[#allocation3 + $0x20] sm:$0xf] 0.0
        $region48: #{tpu_custom_call.1} parent=31 // pred_fallthru
          _
        %v320 = vld [vmem:[%s248] sm:$0xff]
        %v321 = vld [vmem:[%s248 + $0x8] sm:$0xff]
        %v322 = vld [vmem:[%s248 + $0x10] sm:$0xff]
        %v323 = vld [vmem:[%s248 + $0x18] sm:$0xff]
        %v324 = vld [vmem:[%s248 + $0x20] sm:$0xff]
        %v325 = vld [vmem:[%s248 + $0x28] sm:$0xff]
        %v326 = vld [vmem:[%s248 + $0x30] sm:$0xff]
        %v327 = vld [vmem:[%s248 + $0x38] sm:$0xff]
        %v328 = vld [vmem:[%s248 + $0x40] sm:$0xff]
        %v329 = vld [vmem:[%s248 + $0x48] sm:$0xff]
        %v330 = vld [vmem:[%s248 + $0x50] sm:$0xff]
        %v331 = vld [vmem:[%s248 + $0x58] sm:$0xff]
        %v332 = vld [vmem:[#allocation2] sm:$0xff]
        %v333 = vld [vmem:[#allocation2 + $0x8] sm:$0xf]
        %v334 = vrot.slane %v320, 4
        %v335 = vadd.f32 %v320, %v334
        %v336 = vrot.slane %v335, 2
        %v337 = vadd.f32 %v335, %v336
        %v338 = vrot.slane %v337, 1
        %v339 = vadd.f32 %v337, %v338
        %v340 = vrot.slane %v321, 4
        %v341 = vadd.f32 %v321, %v340
        %v342 = vrot.slane %v341, 2
        %v343 = vadd.f32 %v341, %v342
        %v344 = vrot.slane %v343, 1
        %v345 = vadd.f32 %v343, %v344
        %v346 = vrot.slane %v322, 4
        %v347 = vadd.f32 %v322, %v346
        %v348 = vrot.slane %v347, 2
        %v349 = vadd.f32 %v347, %v348
        %v350 = vrot.slane %v349, 1
        %v351 = vadd.f32 %v349, %v350
        %v352 = vrot.slane %v323, 4
        %v353 = vadd.f32 %v323, %v352
        %v354 = vrot.slane %v353, 2
        %v355 = vadd.f32 %v353, %v354
        %v356 = vrot.slane %v355, 1
        %v357 = vadd.f32 %v355, %v356
        %v358 = vrot.slane %v324, 4
        %v359 = vadd.f32 %v324, %v358
        %v360 = vrot.slane %v359, 2
        %v361 = vadd.f32 %v359, %v360
        %v362 = vrot.slane %v361, 1
        %v363 = vadd.f32 %v361, %v362
        %v364 = vrot.slane %v325, 4
        %v365 = vadd.f32 %v325, %v364
        %v366 = vrot.slane %v365, 2
        %v367 = vadd.f32 %v365, %v366
        %v368 = vrot.slane %v367, 1
        %v369 = vadd.f32 %v367, %v368
        %v370 = vrot.slane %v326, 4
        %v371 = vadd.f32 %v326, %v370
        %v372 = vrot.slane %v371, 2
        %v373 = vadd.f32 %v371, %v372
        %v374 = vrot.slane %v373, 1
        %v375 = vadd.f32 %v373, %v374
        %v376 = vrot.slane %v327, 4
        %v377 = vadd.f32 %v327, %v376
        %v378 = vrot.slane %v377, 2
        %v379 = vadd.f32 %v377, %v378
        %v380 = vrot.slane %v379, 1
        %v381 = vadd.f32 %v379, %v380
        %v382 = vrot.slane %v328, 4
        %v383 = vadd.f32 %v328, %v382
        %v384 = vrot.slane %v383, 2
        %v385 = vadd.f32 %v383, %v384
        %v386 = vrot.slane %v385, 1
        %v387 = vadd.f32 %v385, %v386
        %v388 = vrot.slane %v329, 4
        %v389 = vadd.f32 %v329, %v388
        %v390 = vrot.slane %v389, 2
        %v391 = vadd.f32 %v389, %v390
        %v392 = vrot.slane %v391, 1
        %v393 = vadd.f32 %v391, %v392
        %v394 = vrot.slane %v330, 4
        %v395 = vadd.f32 %v330, %v394
        %v396 = vrot.slane %v395, 2
        %v397 = vadd.f32 %v395, %v396
        %v398 = vrot.slane %v397, 1
        %v399 = vadd.f32 %v397, %v398
        %v400 = vrot.slane %v331, 4
        %v401 = vadd.f32 %v331, %v400
        %v402 = vrot.slane %v401, 2
        %v403 = vadd.f32 %v401, %v402
        %v404 = vrot.slane %v403, 1
        %v405 = vadd.f32 %v403, %v404
        %v418 = vcombine.low %v339, %v345
        %v419 = vcombine.low %v351, %v357
        %v421 = vunpack.c.l.s4 1983009808
        %v422 = vunpack.c.0.s8 %v421
        %v423 = vlaneseq
        %v424 = vshrl.u32 %v423, 7
        %v425 = vsub.s32 %v422, %v424
        %v426 = vrot.slane %v418, %v425
        %v428 = vunpack.c.l.s4 1983009808
        %v429 = vunpack.c.0.s8 %v428
        %v430 = vlaneseq
        %v431 = vshrl.u32 %v430, 7
        %v432 = vsub.s32 %v429, %v431
        %v433 = vrot.slane %v419, %v432
        %v434 = vcombine.low %v426, %v433
        %v435 = vcombine.low %v363, %v369
        %v437 = vunpack.c.l.s4 1983009808
        %v438 = vunpack.c.0.s8 %v437
        %v439 = vlaneseq
        %v440 = vshrl.u32 %v439, 7
        %v441 = vsub.s32 %v438, %v440
        %v442 = vrot.slane %v435, %v441
        %v443 = vcombine.low %v375, %v381
        %v444 = vcombine.low %v387, %v393
        %v446 = vunpack.c.l.s4 1983009808
        %v447 = vunpack.c.0.s8 %v446
        %v448 = vlaneseq
        %v449 = vshrl.u32 %v448, 7
        %v450 = vsub.s32 %v447, %v449
        %v451 = vrot.slane %v443, %v450
        %v453 = vunpack.c.l.s4 1983009808
        %v454 = vunpack.c.0.s8 %v453
        %v455 = vlaneseq
        %v456 = vshrl.u32 %v455, 7
        %v457 = vsub.s32 %v454, %v456
        %v458 = vrot.slane %v444, %v457
        %v459 = vcombine.low %v451, %v458
        %v460 = vcombine.low %v399, %v405
        %v462 = vunpack.c.l.s4 1983009808
        %v463 = vunpack.c.0.s8 %v462
        %v464 = vlaneseq
        %v465 = vshrl.u32 %v464, 7
        %v466 = vsub.s32 %v463, %v465
        %v467 = vrot.slane %v460, %v466
        %vm468 = vcmask 1044484
        %v469 = vsel %vm468, %v434, %v434
        %vm470 = vcmask 1046534
        %v471 = vsel %vm470, %v434, %v469
        %v472 = vrot.slane %v459, 7
        %vm473 = vcmask 1041409
        %v474 = vsel %vm473, %v472, %v471
        %vm475 = vcmask 1043459
        %v476 = vsel %vm475, %v472, %v474
        %vm477 = vcmask 1045509
        %v478 = vsel %vm477, %v472, %v476
        %vm479 = vcmask 1047559
        %v480 = vsel %vm479, %v472, %v478
        %v481 = vsel %vm468, %v442, %v442
        %v482 = vsel %vm470, %v442, %v481
        %v483 = vrot.slane %v467, 7
        %v484 = vsel %vm473, %v483, %v482
        %v485 = vsel %vm475, %v483, %v484
        %v486 = vsel %vm477, %v483, %v485
        %v487 = vsel %vm479, %v483, %v486
        %v490 = vadd.f32 %v332, %v480
        %v491 = vadd.f32 %v333, %v487
        %492 = vst [vmem:[#allocation2] sm:$0xff] %v490
        %493 = vst [vmem:[#allocation2 + $0x8] sm:$0xf] %v491
        %v494 = vld [vmem:[#allocation3] sm:$0xff]
        %v495 = vld [vmem:[#allocation3 + $0x8] sm:$0xf]
        %v496 = vmul.f32 %v320, %v320
        %v497 = vmul.f32 %v321, %v321
        %v498 = vmul.f32 %v322, %v322
        %v499 = vmul.f32 %v323, %v323
        %v500 = vmul.f32 %v324, %v324
        %v501 = vmul.f32 %v325, %v325
        %v502 = vmul.f32 %v326, %v326
        %v503 = vmul.f32 %v327, %v327
        %v504 = vmul.f32 %v328, %v328
        %v505 = vmul.f32 %v329, %v329
        %v506 = vmul.f32 %v330, %v330
        %v507 = vmul.f32 %v331, %v331
        %v508 = vrot.slane %v496, 4
        %v509 = vadd.f32 %v496, %v508
        %v510 = vrot.slane %v509, 2
        %v511 = vadd.f32 %v509, %v510
        %v512 = vrot.slane %v511, 1
        %v513 = vadd.f32 %v511, %v512
        %v514 = vrot.slane %v497, 4
        %v515 = vadd.f32 %v497, %v514
        %v516 = vrot.slane %v515, 2
        %v517 = vadd.f32 %v515, %v516
        %v518 = vrot.slane %v517, 1
        %v519 = vadd.f32 %v517, %v518
        %v520 = vrot.slane %v498, 4
        %v521 = vadd.f32 %v498, %v520
        %v522 = vrot.slane %v521, 2
        %v523 = vadd.f32 %v521, %v522
        %v524 = vrot.slane %v523, 1
        %v525 = vadd.f32 %v523, %v524
        %v526 = vrot.slane %v499, 4
        %v527 = vadd.f32 %v499, %v526
        %v528 = vrot.slane %v527, 2
        %v529 = vadd.f32 %v527, %v528
        %v530 = vrot.slane %v529, 1
        %v531 = vadd.f32 %v529, %v530
        %v532 = vrot.slane %v500, 4
        %v533 = vadd.f32 %v500, %v532
        %v534 = vrot.slane %v533, 2
        %v535 = vadd.f32 %v533, %v534
        %v536 = vrot.slane %v535, 1
        %v537 = vadd.f32 %v535, %v536
        %v538 = vrot.slane %v501, 4
        %v539 = vadd.f32 %v501, %v538
        %v540 = vrot.slane %v539, 2
        %v541 = vadd.f32 %v539, %v540
        %v542 = vrot.slane %v541, 1
        %v543 = vadd.f32 %v541, %v542
        %v544 = vrot.slane %v502, 4
        %v545 = vadd.f32 %v502, %v544
        %v546 = vrot.slane %v545, 2
        %v547 = vadd.f32 %v545, %v546
        %v548 = vrot.slane %v547, 1
        %v549 = vadd.f32 %v547, %v548
        %v550 = vrot.slane %v503, 4
        %v551 = vadd.f32 %v503, %v550
        %v552 = vrot.slane %v551, 2
        %v553 = vadd.f32 %v551, %v552
        %v554 = vrot.slane %v553, 1
        %v555 = vadd.f32 %v553, %v554
        %v556 = vrot.slane %v504, 4
        %v557 = vadd.f32 %v504, %v556
        %v558 = vrot.slane %v557, 2
        %v559 = vadd.f32 %v557, %v558
        %v560 = vrot.slane %v559, 1
        %v561 = vadd.f32 %v559, %v560
        %v562 = vrot.slane %v505, 4
        %v563 = vadd.f32 %v505, %v562
        %v564 = vrot.slane %v563, 2
        %v565 = vadd.f32 %v563, %v564
        %v566 = vrot.slane %v565, 1
        %v567 = vadd.f32 %v565, %v566
        %v568 = vrot.slane %v506, 4
        %v569 = vadd.f32 %v506, %v568
        %v570 = vrot.slane %v569, 2
        %v571 = vadd.f32 %v569, %v570
        %v572 = vrot.slane %v571, 1
        %v573 = vadd.f32 %v571, %v572
        %v574 = vrot.slane %v507, 4
        %v575 = vadd.f32 %v507, %v574
        %v576 = vrot.slane %v575, 2
        %v577 = vadd.f32 %v575, %v576
        %v578 = vrot.slane %v577, 1
        %v579 = vadd.f32 %v577, %v578
        %v592 = vcombine.low %v513, %v519
        %v593 = vcombine.low %v525, %v531
        %v595 = vunpack.c.l.s4 1983009808
        %v596 = vunpack.c.0.s8 %v595
        %v597 = vlaneseq
        %v598 = vshrl.u32 %v597, 7
        %v599 = vsub.s32 %v596, %v598
        %v600 = vrot.slane %v592, %v599
        %v602 = vunpack.c.l.s4 1983009808
        %v603 = vunpack.c.0.s8 %v602
        %v604 = vlaneseq
        %v605 = vshrl.u32 %v604, 7
        %v606 = vsub.s32 %v603, %v605
        %v607 = vrot.slane %v593, %v606
        %v608 = vcombine.low %v600, %v607
        %v609 = vcombine.low %v537, %v543
        %v611 = vunpack.c.l.s4 1983009808
        %v612 = vunpack.c.0.s8 %v611
        %v613 = vlaneseq
        %v614 = vshrl.u32 %v613, 7
        %v615 = vsub.s32 %v612, %v614
        %v616 = vrot.slane %v609, %v615
        %v617 = vcombine.low %v549, %v555
        %v618 = vcombine.low %v561, %v567
        %v620 = vunpack.c.l.s4 1983009808
        %v621 = vunpack.c.0.s8 %v620
        %v622 = vlaneseq
        %v623 = vshrl.u32 %v622, 7
        %v624 = vsub.s32 %v621, %v623
        %v625 = vrot.slane %v617, %v624
        %v627 = vunpack.c.l.s4 1983009808
        %v628 = vunpack.c.0.s8 %v627
        %v629 = vlaneseq
        %v630 = vshrl.u32 %v629, 7
        %v631 = vsub.s32 %v628, %v630
        %v632 = vrot.slane %v618, %v631
        %v633 = vcombine.low %v625, %v632
        %v634 = vcombine.low %v573, %v579
        %v636 = vunpack.c.l.s4 1983009808
        %v637 = vunpack.c.0.s8 %v636
        %v638 = vlaneseq
        %v639 = vshrl.u32 %v638, 7
        %v640 = vsub.s32 %v637, %v639
        %v641 = vrot.slane %v634, %v640
        %v642 = vsel %vm468, %v608, %v608
        %v643 = vsel %vm470, %v608, %v642
        %v644 = vrot.slane %v633, 7
        %v645 = vsel %vm473, %v644, %v643
        %v646 = vsel %vm475, %v644, %v645
        %v647 = vsel %vm477, %v644, %v646
        %v648 = vsel %vm479, %v644, %v647
        %v649 = vsel %vm468, %v616, %v616
        %v650 = vsel %vm470, %v616, %v649
        %v651 = vrot.slane %v641, 7
        %v652 = vsel %vm473, %v651, %v650
        %v653 = vsel %vm475, %v651, %v652
        %v654 = vsel %vm477, %v651, %v653
        %v655 = vsel %vm479, %v651, %v654
        %v658 = vadd.f32 %v494, %v648
        %v659 = vadd.f32 %v495, %v655
        %660 = vst [vmem:[#allocation3] sm:$0xff] %v658
        %661 = vst [vmem:[#allocation3 + $0x8] sm:$0xf] %v659
        %s662 = scalar_lea.vmem %s248, 96 [#allocation4]
        %v663 = vld [vmem:[%s662] sm:$0xff]
        %v664 = vld [vmem:[%s662 + $0x8] sm:$0xff]
        %v665 = vld [vmem:[%s662 + $0x10] sm:$0xff]
        %v666 = vld [vmem:[%s662 + $0x18] sm:$0xff]
        %v667 = vld [vmem:[%s662 + $0x20] sm:$0xff]
        %v668 = vld [vmem:[%s662 + $0x28] sm:$0xff]
        %v669 = vld [vmem:[%s662 + $0x30] sm:$0xff]
        %v670 = vld [vmem:[%s662 + $0x38] sm:$0xff]
        %v671 = vld [vmem:[%s662 + $0x40] sm:$0xff]
        %v672 = vld [vmem:[%s662 + $0x48] sm:$0xff]
        %v673 = vld [vmem:[%s662 + $0x50] sm:$0xff]
        %v674 = vld [vmem:[%s662 + $0x58] sm:$0xff]
        %s675 = scalar_lea.vmem [#allocation2], 12
        %v676 = vld [vmem:[%s675] sm:$0xff]
        %v677 = vld [vmem:[%s675 + $0x8] sm:$0xf]
        %v678 = vrot.slane %v663, 4
        %v679 = vadd.f32 %v663, %v678
        %v680 = vrot.slane %v679, 2
        %v681 = vadd.f32 %v679, %v680
        %v682 = vrot.slane %v681, 1
        %v683 = vadd.f32 %v681, %v682
        %v684 = vrot.slane %v664, 4
        %v685 = vadd.f32 %v664, %v684
        %v686 = vrot.slane %v685, 2
        %v687 = vadd.f32 %v685, %v686
        %v688 = vrot.slane %v687, 1
        %v689 = vadd.f32 %v687, %v688
        %v690 = vrot.slane %v665, 4
        %v691 = vadd.f32 %v665, %v690
        %v692 = vrot.slane %v691, 2
        %v693 = vadd.f32 %v691, %v692
        %v694 = vrot.slane %v693, 1
        %v695 = vadd.f32 %v693, %v694
        %v696 = vrot.slane %v666, 4
        %v697 = vadd.f32 %v666, %v696
        %v698 = vrot.slane %v697, 2
        %v699 = vadd.f32 %v697, %v698
        %v700 = vrot.slane %v699, 1
        %v701 = vadd.f32 %v699, %v700
        %v702 = vrot.slane %v667, 4
        %v703 = vadd.f32 %v667, %v702
        %v704 = vrot.slane %v703, 2
        %v705 = vadd.f32 %v703, %v704
        %v706 = vrot.slane %v705, 1
        %v707 = vadd.f32 %v705, %v706
        %v708 = vrot.slane %v668, 4
        %v709 = vadd.f32 %v668, %v708
        %v710 = vrot.slane %v709, 2
        %v711 = vadd.f32 %v709, %v710
        %v712 = vrot.slane %v711, 1
        %v713 = vadd.f32 %v711, %v712
        %v714 = vrot.slane %v669, 4
        %v715 = vadd.f32 %v669, %v714
        %v716 = vrot.slane %v715, 2
        %v717 = vadd.f32 %v715, %v716
        %v718 = vrot.slane %v717, 1
        %v719 = vadd.f32 %v717, %v718
        %v720 = vrot.slane %v670, 4
        %v721 = vadd.f32 %v670, %v720
        %v722 = vrot.slane %v721, 2
        %v723 = vadd.f32 %v721, %v722
        %v724 = vrot.slane %v723, 1
        %v725 = vadd.f32 %v723, %v724
        %v726 = vrot.slane %v671, 4
        %v727 = vadd.f32 %v671, %v726
        %v728 = vrot.slane %v727, 2
        %v729 = vadd.f32 %v727, %v728
        %v730 = vrot.slane %v729, 1
        %v731 = vadd.f32 %v729, %v730
        %v732 = vrot.slane %v672, 4
        %v733 = vadd.f32 %v672, %v732
        %v734 = vrot.slane %v733, 2
        %v735 = vadd.f32 %v733, %v734
        %v736 = vrot.slane %v735, 1
        %v737 = vadd.f32 %v735, %v736
        %v738 = vrot.slane %v673, 4
        %v739 = vadd.f32 %v673, %v738
        %v740 = vrot.slane %v739, 2
        %v741 = vadd.f32 %v739, %v740
        %v742 = vrot.slane %v741, 1
        %v743 = vadd.f32 %v741, %v742
        %v744 = vrot.slane %v674, 4
        %v745 = vadd.f32 %v674, %v744
        %v746 = vrot.slane %v745, 2
        %v747 = vadd.f32 %v745, %v746
        %v748 = vrot.slane %v747, 1
        %v749 = vadd.f32 %v747, %v748
        %v762 = vcombine.low %v683, %v689
        %v763 = vcombine.low %v695, %v701
        %v765 = vunpack.c.l.s4 1983009808
        %v766 = vunpack.c.0.s8 %v765
        %v767 = vlaneseq
        %v768 = vshrl.u32 %v767, 7
        %v769 = vsub.s32 %v766, %v768
        %v770 = vrot.slane %v762, %v769
        %v772 = vunpack.c.l.s4 1983009808
        %v773 = vunpack.c.0.s8 %v772
        %v774 = vlaneseq
        %v775 = vshrl.u32 %v774, 7
        %v776 = vsub.s32 %v773, %v775
        %v777 = vrot.slane %v763, %v776
        %v778 = vcombine.low %v770, %v777
        %v779 = vcombine.low %v707, %v713
        %v781 = vunpack.c.l.s4 1983009808
        %v782 = vunpack.c.0.s8 %v781
        %v783 = vlaneseq
        %v784 = vshrl.u32 %v783, 7
        %v785 = vsub.s32 %v782, %v784
        %v786 = vrot.slane %v779, %v785
        %v787 = vcombine.low %v719, %v725
        %v788 = vcombine.low %v731, %v737
        %v790 = vunpack.c.l.s4 1983009808
        %v791 = vunpack.c.0.s8 %v790
        %v792 = vlaneseq
        %v793 = vshrl.u32 %v792, 7
        %v794 = vsub.s32 %v791, %v793
        %v795 = vrot.slane %v787, %v794
        %v797 = vunpack.c.l.s4 1983009808
        %v798 = vunpack.c.0.s8 %v797
        %v799 = vlaneseq
        %v800 = vshrl.u32 %v799, 7
        %v801 = vsub.s32 %v798, %v800
        %v802 = vrot.slane %v788, %v801
        %v803 = vcombine.low %v795, %v802
        %v804 = vcombine.low %v743, %v749
        %v806 = vunpack.c.l.s4 1983009808
        %v807 = vunpack.c.0.s8 %v806
        %v808 = vlaneseq
        %v809 = vshrl.u32 %v808, 7
        %v810 = vsub.s32 %v807, %v809
        %v811 = vrot.slane %v804, %v810
        %v812 = vsel %vm468, %v778, %v778
        %v813 = vsel %vm470, %v778, %v812
        %v814 = vrot.slane %v803, 7
        %v815 = vsel %vm473, %v814, %v813
        %v816 = vsel %vm475, %v814, %v815
        %v817 = vsel %vm477, %v814, %v816
        %v818 = vsel %vm479, %v814, %v817
        %v819 = vsel %vm468, %v786, %v786
        %v820 = vsel %vm470, %v786, %v819
        %v821 = vrot.slane %v811, 7
        %v822 = vsel %vm473, %v821, %v820
        %v823 = vsel %vm475, %v821, %v822
        %v824 = vsel %vm477, %v821, %v823
        %v825 = vsel %vm479, %v821, %v824
        %v828 = vadd.f32 %v676, %v818
        %v829 = vadd.f32 %v677, %v825
        %830 = vst [vmem:[%s675] sm:$0xff] %v828
        %831 = vst [vmem:[%s675 + $0x8] sm:$0xf] %v829
        %s832 = scalar_lea.vmem [#allocation3], 12
        %v833 = vld [vmem:[%s832] sm:$0xff]
        %v834 = vld [vmem:[%s832 + $0x8] sm:$0xf]
        %v835 = vmul.f32 %v663, %v663
        %v836 = vmul.f32 %v664, %v664
        %v837 = vmul.f32 %v665, %v665
        %v838 = vmul.f32 %v666, %v666
        %v839 = vmul.f32 %v667, %v667
        %v840 = vmul.f32 %v668, %v668
        %v841 = vmul.f32 %v669, %v669
        %v842 = vmul.f32 %v670, %v670
        %v843 = vmul.f32 %v671, %v671
        %v844 = vmul.f32 %v672, %v672
        %v845 = vmul.f32 %v673, %v673
        %v846 = vmul.f32 %v674, %v674
        %v847 = vrot.slane %v835, 4
        %v848 = vadd.f32 %v835, %v847
        %v849 = vrot.slane %v848, 2
        %v850 = vadd.f32 %v848, %v849
        %v851 = vrot.slane %v850, 1
        %v852 = vadd.f32 %v850, %v851
        %v853 = vrot.slane %v836, 4
        %v854 = vadd.f32 %v836, %v853
        %v855 = vrot.slane %v854, 2
        %v856 = vadd.f32 %v854, %v855
        %v857 = vrot.slane %v856, 1
        %v858 = vadd.f32 %v856, %v857
        %v859 = vrot.slane %v837, 4
        %v860 = vadd.f32 %v837, %v859
        %v861 = vrot.slane %v860, 2
        %v862 = vadd.f32 %v860, %v861
        %v863 = vrot.slane %v862, 1
        %v864 = vadd.f32 %v862, %v863
        %v865 = vrot.slane %v838, 4
        %v866 = vadd.f32 %v838, %v865
        %v867 = vrot.slane %v866, 2
        %v868 = vadd.f32 %v866, %v867
        %v869 = vrot.slane %v868, 1
        %v870 = vadd.f32 %v868, %v869
        %v871 = vrot.slane %v839, 4
        %v872 = vadd.f32 %v839, %v871
        %v873 = vrot.slane %v872, 2
        %v874 = vadd.f32 %v872, %v873
        %v875 = vrot.slane %v874, 1
        %v876 = vadd.f32 %v874, %v875
        %v877 = vrot.slane %v840, 4
        %v878 = vadd.f32 %v840, %v877
        %v879 = vrot.slane %v878, 2
        %v880 = vadd.f32 %v878, %v879
        %v881 = vrot.slane %v880, 1
        %v882 = vadd.f32 %v880, %v881
        %v883 = vrot.slane %v841, 4
        %v884 = vadd.f32 %v841, %v883
        %v885 = vrot.slane %v884, 2
        %v886 = vadd.f32 %v884, %v885
        %v887 = vrot.slane %v886, 1
        %v888 = vadd.f32 %v886, %v887
        %v889 = vrot.slane %v842, 4
        %v890 = vadd.f32 %v842, %v889
        %v891 = vrot.slane %v890, 2
        %v892 = vadd.f32 %v890, %v891
        %v893 = vrot.slane %v892, 1
        %v894 = vadd.f32 %v892, %v893
        %v895 = vrot.slane %v843, 4
        %v896 = vadd.f32 %v843, %v895
        %v897 = vrot.slane %v896, 2
        %v898 = vadd.f32 %v896, %v897
        %v899 = vrot.slane %v898, 1
        %v900 = vadd.f32 %v898, %v899
        %v901 = vrot.slane %v844, 4
        %v902 = vadd.f32 %v844, %v901
        %v903 = vrot.slane %v902, 2
        %v904 = vadd.f32 %v902, %v903
        %v905 = vrot.slane %v904, 1
        %v906 = vadd.f32 %v904, %v905
        %v907 = vrot.slane %v845, 4
        %v908 = vadd.f32 %v845, %v907
        %v909 = vrot.slane %v908, 2
        %v910 = vadd.f32 %v908, %v909
        %v911 = vrot.slane %v910, 1
        %v912 = vadd.f32 %v910, %v911
        %v913 = vrot.slane %v846, 4
        %v914 = vadd.f32 %v846, %v913
        %v915 = vrot.slane %v914, 2
        %v916 = vadd.f32 %v914, %v915
        %v917 = vrot.slane %v916, 1
        %v918 = vadd.f32 %v916, %v917
        %v931 = vcombine.low %v852, %v858
        %v932 = vcombine.low %v864, %v870
        %v934 = vunpack.c.l.s4 1983009808
        %v935 = vunpack.c.0.s8 %v934
        %v936 = vlaneseq
        %v937 = vshrl.u32 %v936, 7
        %v938 = vsub.s32 %v935, %v937
        %v939 = vrot.slane %v931, %v938
        %v941 = vunpack.c.l.s4 1983009808
        %v942 = vunpack.c.0.s8 %v941
        %v943 = vlaneseq
        %v944 = vshrl.u32 %v943, 7
        %v945 = vsub.s32 %v942, %v944
        %v946 = vrot.slane %v932, %v945
        %v947 = vcombine.low %v939, %v946
        %v948 = vcombine.low %v876, %v882
        %v950 = vunpack.c.l.s4 1983009808
        %v951 = vunpack.c.0.s8 %v950
        %v952 = vlaneseq
        %v953 = vshrl.u32 %v952, 7
        %v954 = vsub.s32 %v951, %v953
        %v955 = vrot.slane %v948, %v954
        %v956 = vcombine.low %v888, %v894
        %v957 = vcombine.low %v900, %v906
        %v959 = vunpack.c.l.s4 1983009808
        %v960 = vunpack.c.0.s8 %v959
        %v961 = vlaneseq
        %v962 = vshrl.u32 %v961, 7
        %v963 = vsub.s32 %v960, %v962
        %v964 = vrot.slane %v956, %v963
        %v966 = vunpack.c.l.s4 1983009808
        %v967 = vunpack.c.0.s8 %v966
        %v968 = vlaneseq
        %v969 = vshrl.u32 %v968, 7
        %v970 = vsub.s32 %v967, %v969
        %v971 = vrot.slane %v957, %v970
        %v972 = vcombine.low %v964, %v971
        %v973 = vcombine.low %v912, %v918
        %v975 = vunpack.c.l.s4 1983009808
        %v976 = vunpack.c.0.s8 %v975
        %v977 = vlaneseq
        %v978 = vshrl.u32 %v977, 7
        %v979 = vsub.s32 %v976, %v978
        %v980 = vrot.slane %v973, %v979
        %v981 = vsel %vm468, %v947, %v947
        %v982 = vsel %vm470, %v947, %v981
        %v983 = vrot.slane %v972, 7
        %v984 = vsel %vm473, %v983, %v982
        %v985 = vsel %vm475, %v983, %v984
        %v986 = vsel %vm477, %v983, %v985
        %v987 = vsel %vm479, %v983, %v986
        %v988 = vsel %vm468, %v955, %v955
        %v989 = vsel %vm470, %v955, %v988
        %v990 = vrot.slane %v980, 7
        %v991 = vsel %vm473, %v990, %v989
        %v992 = vsel %vm475, %v990, %v991
        %v993 = vsel %vm477, %v990, %v992
        %v994 = vsel %vm479, %v990, %v993
        %v997 = vadd.f32 %v833, %v987
        %v998 = vadd.f32 %v834, %v994
        %999 = vst [vmem:[%s832] sm:$0xff] %v997
        %1000 = vst [vmem:[%s832 + $0x8] sm:$0xf] %v998
        %s1001 = scalar_lea.vmem %s248, 192 [#allocation4]
        %v1002 = vld [vmem:[%s1001] sm:$0xff]
        %v1003 = vld [vmem:[%s1001 + $0x8] sm:$0xff]
        %v1004 = vld [vmem:[%s1001 + $0x10] sm:$0xff]
        %v1005 = vld [vmem:[%s1001 + $0x18] sm:$0xff]
        %v1006 = vld [vmem:[%s1001 + $0x20] sm:$0xff]
        %v1007 = vld [vmem:[%s1001 + $0x28] sm:$0xff]
        %v1008 = vld [vmem:[%s1001 + $0x30] sm:$0xff]
        %v1009 = vld [vmem:[%s1001 + $0x38] sm:$0xff]
        %v1010 = vld [vmem:[%s1001 + $0x40] sm:$0xff]
        %v1011 = vld [vmem:[%s1001 + $0x48] sm:$0xff]
        %v1012 = vld [vmem:[%s1001 + $0x50] sm:$0xff]
        %v1013 = vld [vmem:[%s1001 + $0x58] sm:$0xff]
        %s1014 = scalar_lea.vmem [#allocation2], 24
        %v1015 = vld [vmem:[%s1014] sm:$0xff]
        %v1016 = vld [vmem:[%s1014 + $0x8] sm:$0xf]
        %v1017 = vrot.slane %v1002, 4
        %v1018 = vadd.f32 %v1002, %v1017
        %v1019 = vrot.slane %v1018, 2
        %v1020 = vadd.f32 %v1018, %v1019
        %v1021 = vrot.slane %v1020, 1
        %v1022 = vadd.f32 %v1020, %v1021
        %v1023 = vrot.slane %v1003, 4
        %v1024 = vadd.f32 %v1003, %v1023
        %v1025 = vrot.slane %v1024, 2
        %v1026 = vadd.f32 %v1024, %v1025
        %v1027 = vrot.slane %v1026, 1
        %v1028 = vadd.f32 %v1026, %v1027
        %v1029 = vrot.slane %v1004, 4
        %v1030 = vadd.f32 %v1004, %v1029
        %v1031 = vrot.slane %v1030, 2
        %v1032 = vadd.f32 %v1030, %v1031
        %v1033 = vrot.slane %v1032, 1
        %v1034 = vadd.f32 %v1032, %v1033
        %v1035 = vrot.slane %v1005, 4
        %v1036 = vadd.f32 %v1005, %v1035
        %v1037 = vrot.slane %v1036, 2
        %v1038 = vadd.f32 %v1036, %v1037
        %v1039 = vrot.slane %v1038, 1
        %v1040 = vadd.f32 %v1038, %v1039
        %v1041 = vrot.slane %v1006, 4
        %v1042 = vadd.f32 %v1006, %v1041
        %v1043 = vrot.slane %v1042, 2
        %v1044 = vadd.f32 %v1042, %v1043
        %v1045 = vrot.slane %v1044, 1
        %v1046 = vadd.f32 %v1044, %v1045
        %v1047 = vrot.slane %v1007, 4
        %v1048 = vadd.f32 %v1007, %v1047
        %v1049 = vrot.slane %v1048, 2
        %v1050 = vadd.f32 %v1048, %v1049
        %v1051 = vrot.slane %v1050, 1
        %v1052 = vadd.f32 %v1050, %v1051
        %v1053 = vrot.slane %v1008, 4
        %v1054 = vadd.f32 %v1008, %v1053
        %v1055 = vrot.slane %v1054, 2
        %v1056 = vadd.f32 %v1054, %v1055
        %v1057 = vrot.slane %v1056, 1
        %v1058 = vadd.f32 %v1056, %v1057
        %v1059 = vrot.slane %v1009, 4
        %v1060 = vadd.f32 %v1009, %v1059
        %v1061 = vrot.slane %v1060, 2
        %v1062 = vadd.f32 %v1060, %v1061
        %v1063 = vrot.slane %v1062, 1
        %v1064 = vadd.f32 %v1062, %v1063
        %v1065 = vrot.slane %v1010, 4
        %v1066 = vadd.f32 %v1010, %v1065
        %v1067 = vrot.slane %v1066, 2
        %v1068 = vadd.f32 %v1066, %v1067
        %v1069 = vrot.slane %v1068, 1
        %v1070 = vadd.f32 %v1068, %v1069
        %v1071 = vrot.slane %v1011, 4
        %v1072 = vadd.f32 %v1011, %v1071
        %v1073 = vrot.slane %v1072, 2
        %v1074 = vadd.f32 %v1072, %v1073
        %v1075 = vrot.slane %v1074, 1
        %v1076 = vadd.f32 %v1074, %v1075
        %v1077 = vrot.slane %v1012, 4
        %v1078 = vadd.f32 %v1012, %v1077
        %v1079 = vrot.slane %v1078, 2
        %v1080 = vadd.f32 %v1078, %v1079
        %v1081 = vrot.slane %v1080, 1
        %v1082 = vadd.f32 %v1080, %v1081
        %v1083 = vrot.slane %v1013, 4
        %v1084 = vadd.f32 %v1013, %v1083
        %v1085 = vrot.slane %v1084, 2
        %v1086 = vadd.f32 %v1084, %v1085
        %v1087 = vrot.slane %v1086, 1
        %v1088 = vadd.f32 %v1086, %v1087
        %v1101 = vcombine.low %v1022, %v1028
        %v1102 = vcombine.low %v1034, %v1040
        %v1104 = vunpack.c.l.s4 1983009808
        %v1105 = vunpack.c.0.s8 %v1104
        %v1106 = vlaneseq
        %v1107 = vshrl.u32 %v1106, 7
        %v1108 = vsub.s32 %v1105, %v1107
        %v1109 = vrot.slane %v1101, %v1108
        %v1111 = vunpack.c.l.s4 1983009808
        %v1112 = vunpack.c.0.s8 %v1111
        %v1113 = vlaneseq
        %v1114 = vshrl.u32 %v1113, 7
        %v1115 = vsub.s32 %v1112, %v1114
        %v1116 = vrot.slane %v1102, %v1115
        %v1117 = vcombine.low %v1109, %v1116
        %v1118 = vcombine.low %v1046, %v1052
        %v1120 = vunpack.c.l.s4 1983009808
        %v1121 = vunpack.c.0.s8 %v1120
        %v1122 = vlaneseq
        %v1123 = vshrl.u32 %v1122, 7
        %v1124 = vsub.s32 %v1121, %v1123
        %v1125 = vrot.slane %v1118, %v1124
        %v1126 = vcombine.low %v1058, %v1064
        %v1127 = vcombine.low %v1070, %v1076
        %v1129 = vunpack.c.l.s4 1983009808
        %v1130 = vunpack.c.0.s8 %v1129
        %v1131 = vlaneseq
        %v1132 = vshrl.u32 %v1131, 7
        %v1133 = vsub.s32 %v1130, %v1132
        %v1134 = vrot.slane %v1126, %v1133
        %v1136 = vunpack.c.l.s4 1983009808
        %v1137 = vunpack.c.0.s8 %v1136
        %v1138 = vlaneseq
        %v1139 = vshrl.u32 %v1138, 7
        %v1140 = vsub.s32 %v1137, %v1139
        %v1141 = vrot.slane %v1127, %v1140
        %v1142 = vcombine.low %v1134, %v1141
        %v1143 = vcombine.low %v1082, %v1088
        %v1145 = vunpack.c.l.s4 1983009808
        %v1146 = vunpack.c.0.s8 %v1145
        %v1147 = vlaneseq
        %v1148 = vshrl.u32 %v1147, 7
        %v1149 = vsub.s32 %v1146, %v1148
        %v1150 = vrot.slane %v1143, %v1149
        %v1151 = vsel %vm468, %v1117, %v1117
        %v1152 = vsel %vm470, %v1117, %v1151
        %v1153 = vrot.slane %v1142, 7
        %v1154 = vsel %vm473, %v1153, %v1152
        %v1155 = vsel %vm475, %v1153, %v1154
        %v1156 = vsel %vm477, %v1153, %v1155
        %v1157 = vsel %vm479, %v1153, %v1156
        %v1158 = vsel %vm468, %v1125, %v1125
        %v1159 = vsel %vm470, %v1125, %v1158
        %v1160 = vrot.slane %v1150, 7
        %v1161 = vsel %vm473, %v1160, %v1159
        %v1162 = vsel %vm475, %v1160, %v1161
        %v1163 = vsel %vm477, %v1160, %v1162
        %v1164 = vsel %vm479, %v1160, %v1163
        %v1167 = vadd.f32 %v1015, %v1157
        %v1168 = vadd.f32 %v1016, %v1164
        %1169 = vst [vmem:[%s1014] sm:$0xff] %v1167
        %1170 = vst [vmem:[%s1014 + $0x8] sm:$0xf] %v1168
        %s1171 = scalar_lea.vmem [#allocation3], 24
        %v1172 = vld [vmem:[%s1171] sm:$0xff]
        %v1173 = vld [vmem:[%s1171 + $0x8] sm:$0xf]
        %v1174 = vmul.f32 %v1002, %v1002
        %v1175 = vmul.f32 %v1003, %v1003
        %v1176 = vmul.f32 %v1004, %v1004
        %v1177 = vmul.f32 %v1005, %v1005
        %v1178 = vmul.f32 %v1006, %v1006
        %v1179 = vmul.f32 %v1007, %v1007
        %v1180 = vmul.f32 %v1008, %v1008
        %v1181 = vmul.f32 %v1009, %v1009
        %v1182 = vmul.f32 %v1010, %v1010
        %v1183 = vmul.f32 %v1011, %v1011
        %v1184 = vmul.f32 %v1012, %v1012
        %v1185 = vmul.f32 %v1013, %v1013
        %v1186 = vrot.slane %v1174, 4
        %v1187 = vadd.f32 %v1174, %v1186
        %v1188 = vrot.slane %v1187, 2
        %v1189 = vadd.f32 %v1187, %v1188
        %v1190 = vrot.slane %v1189, 1
        %v1191 = vadd.f32 %v1189, %v1190
        %v1192 = vrot.slane %v1175, 4
        %v1193 = vadd.f32 %v1175, %v1192
        %v1194 = vrot.slane %v1193, 2
        %v1195 = vadd.f32 %v1193, %v1194
        %v1196 = vrot.slane %v1195, 1
        %v1197 = vadd.f32 %v1195, %v1196
        %v1198 = vrot.slane %v1176, 4
        %v1199 = vadd.f32 %v1176, %v1198
        %v1200 = vrot.slane %v1199, 2
        %v1201 = vadd.f32 %v1199, %v1200
        %v1202 = vrot.slane %v1201, 1
        %v1203 = vadd.f32 %v1201, %v1202
        %v1204 = vrot.slane %v1177, 4
        %v1205 = vadd.f32 %v1177, %v1204
        %v1206 = vrot.slane %v1205, 2
        %v1207 = vadd.f32 %v1205, %v1206
        %v1208 = vrot.slane %v1207, 1
        %v1209 = vadd.f32 %v1207, %v1208
        %v1210 = vrot.slane %v1178, 4
        %v1211 = vadd.f32 %v1178, %v1210
        %v1212 = vrot.slane %v1211, 2
        %v1213 = vadd.f32 %v1211, %v1212
        %v1214 = vrot.slane %v1213, 1
        %v1215 = vadd.f32 %v1213, %v1214
        %v1216 = vrot.slane %v1179, 4
        %v1217 = vadd.f32 %v1179, %v1216
        %v1218 = vrot.slane %v1217, 2
        %v1219 = vadd.f32 %v1217, %v1218
        %v1220 = vrot.slane %v1219, 1
        %v1221 = vadd.f32 %v1219, %v1220
        %v1222 = vrot.slane %v1180, 4
        %v1223 = vadd.f32 %v1180, %v1222
        %v1224 = vrot.slane %v1223, 2
        %v1225 = vadd.f32 %v1223, %v1224
        %v1226 = vrot.slane %v1225, 1
        %v1227 = vadd.f32 %v1225, %v1226
        %v1228 = vrot.slane %v1181, 4
        %v1229 = vadd.f32 %v1181, %v1228
        %v1230 = vrot.slane %v1229, 2
        %v1231 = vadd.f32 %v1229, %v1230
        %v1232 = vrot.slane %v1231, 1
        %v1233 = vadd.f32 %v1231, %v1232
        %v1234 = vrot.slane %v1182, 4
        %v1235 = vadd.f32 %v1182, %v1234
        %v1236 = vrot.slane %v1235, 2
        %v1237 = vadd.f32 %v1235, %v1236
        %v1238 = vrot.slane %v1237, 1
        %v1239 = vadd.f32 %v1237, %v1238
        %v1240 = vrot.slane %v1183, 4
        %v1241 = vadd.f32 %v1183, %v1240
        %v1242 = vrot.slane %v1241, 2
        %v1243 = vadd.f32 %v1241, %v1242
        %v1244 = vrot.slane %v1243, 1
        %v1245 = vadd.f32 %v1243, %v1244
        %v1246 = vrot.slane %v1184, 4
        %v1247 = vadd.f32 %v1184, %v1246
        %v1248 = vrot.slane %v1247, 2
        %v1249 = vadd.f32 %v1247, %v1248
        %v1250 = vrot.slane %v1249, 1
        %v1251 = vadd.f32 %v1249, %v1250
        %v1252 = vrot.slane %v1185, 4
        %v1253 = vadd.f32 %v1185, %v1252
        %v1254 = vrot.slane %v1253, 2
        %v1255 = vadd.f32 %v1253, %v1254
        %v1256 = vrot.slane %v1255, 1
        %v1257 = vadd.f32 %v1255, %v1256
        %v1270 = vcombine.low %v1191, %v1197
        %v1271 = vcombine.low %v1203, %v1209
        %v1273 = vunpack.c.l.s4 1983009808
        %v1274 = vunpack.c.0.s8 %v1273
        %v1275 = vlaneseq
        %v1276 = vshrl.u32 %v1275, 7
        %v1277 = vsub.s32 %v1274, %v1276
        %v1278 = vrot.slane %v1270, %v1277
        %v1280 = vunpack.c.l.s4 1983009808
        %v1281 = vunpack.c.0.s8 %v1280
        %v1282 = vlaneseq
        %v1283 = vshrl.u32 %v1282, 7
        %v1284 = vsub.s32 %v1281, %v1283
        %v1285 = vrot.slane %v1271, %v1284
        %v1286 = vcombine.low %v1278, %v1285
        %v1287 = vcombine.low %v1215, %v1221
        %v1289 = vunpack.c.l.s4 1983009808
        %v1290 = vunpack.c.0.s8 %v1289
        %v1291 = vlaneseq
        %v1292 = vshrl.u32 %v1291, 7
        %v1293 = vsub.s32 %v1290, %v1292
        %v1294 = vrot.slane %v1287, %v1293
        %v1295 = vcombine.low %v1227, %v1233
        %v1296 = vcombine.low %v1239, %v1245
        %v1298 = vunpack.c.l.s4 1983009808
        %v1299 = vunpack.c.0.s8 %v1298
        %v1300 = vlaneseq
        %v1301 = vshrl.u32 %v1300, 7
        %v1302 = vsub.s32 %v1299, %v1301
        %v1303 = vrot.slane %v1295, %v1302
        %v1305 = vunpack.c.l.s4 1983009808
        %v1306 = vunpack.c.0.s8 %v1305
        %v1307 = vlaneseq
        %v1308 = vshrl.u32 %v1307, 7
        %v1309 = vsub.s32 %v1306, %v1308
        %v1310 = vrot.slane %v1296, %v1309
        %v1311 = vcombine.low %v1303, %v1310
        %v1312 = vcombine.low %v1251, %v1257
        %v1314 = vunpack.c.l.s4 1983009808
        %v1315 = vunpack.c.0.s8 %v1314
        %v1316 = vlaneseq
        %v1317 = vshrl.u32 %v1316, 7
        %v1318 = vsub.s32 %v1315, %v1317
        %v1319 = vrot.slane %v1312, %v1318
        %v1320 = vsel %vm468, %v1286, %v1286
        %v1321 = vsel %vm470, %v1286, %v1320
        %v1322 = vrot.slane %v1311, 7
        %v1323 = vsel %vm473, %v1322, %v1321
        %v1324 = vsel %vm475, %v1322, %v1323
        %v1325 = vsel %vm477, %v1322, %v1324
        %v1326 = vsel %vm479, %v1322, %v1325
        %v1327 = vsel %vm468, %v1294, %v1294
        %v1328 = vsel %vm470, %v1294, %v1327
        %v1329 = vrot.slane %v1319, 7
        %v1330 = vsel %vm473, %v1329, %v1328
        %v1331 = vsel %vm475, %v1329, %v1330
        %v1332 = vsel %vm477, %v1329, %v1331
        %v1333 = vsel %vm479, %v1329, %v1332
        %v1336 = vadd.f32 %v1172, %v1326
        %v1337 = vadd.f32 %v1173, %v1333
        %1338 = vst [vmem:[%s1171] sm:$0xff] %v1336
        %1339 = vst [vmem:[%s1171 + $0x8] sm:$0xf] %v1337
        // Predicated region
        $region49: #{tpu_custom_call.1} parent=31 // pred_check
          %p1340 = pneg %p304
        $region50: #{tpu_custom_call.1} parent=31 // pred_check_branch
          %1342 = sbr.rel (%p1340) target = $region52
        $region51: #{tpu_custom_call.1} parent=31 // pred_region
          %v1343 = vld [vmem:[#allocation2] sm:$0xff]
          %v1344 = vld [vmem:[#allocation2 + $0x8] sm:$0xf]
          %v1345 = vld [vmem:[#allocation3] sm:$0xff]
          %v1346 = vld [vmem:[#allocation3 + $0x8] sm:$0xf]
          %v1347 = vmul.f32 %v1343, 0.125
          %v1348 = vmul.f32 %v1344, 0.125
          %v1349 = vmul.f32 %v1347, %v1343
          %v1350 = vmul.f32 %v1348, %v1344
          %v1351 = vsub.f32 %v1345, %v1349
          %v1352 = vsub.f32 %v1346, %v1350
          %v1353 = vmax.f32 %v1351, 0.0
          %v1354 = vmax.f32 %v1352, 0.0
          %v1355 = vadd.f32 %v1353, 2.3e-08
          %v1356 = vadd.f32 %v1354, 2.3e-08
          %v1357 = vmul.f32 %v1355, 0.125
          %v1358 = vmul.f32 %v1356, 0.125
          %v1359 = vrsqrt.pop %v1357
          %v1360 = vmul.f32 %v1357, %v1359
          %vm1361 = vcmp.eq.f32.partialorder %v1357, inf
          %v1362 = vsel %vm1361, %v1357, %v1360
          %vm1363 = vcmp.eq.f32.partialorder %v1357, 0.0
          %v1364 = vand.u32 %v1357, 2147483648
          %v1365 = vsel %vm1363, %v1364, %v1362
          %v1366 = vrsqrt.pop %v1358
          %v1367 = vmul.f32 %v1358, %v1366
          %vm1368 = vcmp.eq.f32.partialorder %v1358, inf
          %v1369 = vsel %vm1368, %v1358, %v1367
          %vm1370 = vcmp.eq.f32.partialorder %v1358, 0.0
          %v1371 = vand.u32 %v1358, 2147483648
          %v1372 = vsel %vm1370, %v1371, %v1369
          %v1373 = vadd.f32 %v1347, %v1365
          %v1374 = vadd.f32 %v1348, %v1372
          %v1375 = vmul.f32 %v1373, 0.5
          %v1376 = vmul.f32 %v1374, 0.5
          %v1379 = vcombine.high %v1375, %v1375
          %v1381 = vunpack.c.l.s4 1983009808
          %v1382 = vunpack.c.0.s8 %v1381
          %v1383 = vlaneseq
          %v1384 = vshrl.u32 %v1383, 7
          %v1385 = vsub.s32 %v1382, %v1384
          %v1386 = vrot.slane %v1375, %v1385
          %v1388 = vunpack.c.l.s4 1983009808
          %v1389 = vunpack.c.0.s8 %v1388
          %v1390 = vlaneseq
          %v1391 = vshrl.u32 %v1390, 7
          %v1392 = vsub.s32 %v1389, %v1391
          %v1393 = vrot.slane %v1379, %v1392
          %v1394 = vcombine.high %v1386, %v1386
          %v1395 = vcombine.high %v1393, %v1393
          %v1397 = vunpack.c.l.s4 1983009808
          %v1398 = vunpack.c.0.s8 %v1397
          %v1399 = vlaneseq
          %v1400 = vshrl.u32 %v1399, 7
          %v1401 = vsub.s32 %v1398, %v1400
          %v1402 = vrot.slane %v1376, %v1401
          %v1403 = vcombine.high %v1402, %v1402
          %v1410 = vpack.c.bf16 %v1386, %v1386
          %v1411 = vpack.c.bf16 %v1394, %v1394
          %v1412 = vpack.c.bf16 %v1393, %v1393
          %v1413 = vpack.c.bf16 %v1395, %v1395
          %v1414 = vpack.c.bf16 %v1402, %v1402
          %v1415 = vpack.c.bf16 %v1403, %v1403
          %v1416 = vld [vmem:[%s257] sm:$0xff]
          %v1417 = vld [vmem:[%s257 + $0x8] sm:$0xff]
          %v1418 = vld [vmem:[%s257 + $0x10] sm:$0xff]
          %v1419 = vld [vmem:[%s257 + $0x18] sm:$0xff]
          %v1420 = vld [vmem:[%s257 + $0x20] sm:$0xff]
          %v1421 = vld [vmem:[%s257 + $0x28] sm:$0xff]
          %v1422 = vld [vmem:[%s257 + $0x30] sm:$0xff]
          %v1423 = vld [vmem:[%s257 + $0x38] sm:$0xff]
          %v1424 = vld [vmem:[%s257 + $0x40] sm:$0xff]
          %v1425 = vld [vmem:[%s257 + $0x48] sm:$0xff]
          %v1426 = vld [vmem:[%s257 + $0x50] sm:$0xff]
          %v1427 = vld [vmem:[%s257 + $0x58] sm:$0xff]
          %v1428 = vld [vmem:[%s257 + $0x60] sm:$0xff]
          %v1429 = vld [vmem:[%s257 + $0x68] sm:$0xff]
          %v1430 = vld [vmem:[%s257 + $0x70] sm:$0xff]
          %v1431 = vld [vmem:[%s257 + $0x78] sm:$0xff]
          %v1432 = vld [vmem:[%s257 + $0x80] sm:$0xff]
          %v1433 = vld [vmem:[%s257 + $0x88] sm:$0xff]
          %v1434 = vld [vmem:[%s257 + $0x90] sm:$0xff]
          %v1435 = vld [vmem:[%s257 + $0x98] sm:$0xff]
          %v1436 = vld [vmem:[%s257 + $0xa0] sm:$0xff]
          %v1437 = vld [vmem:[%s257 + $0xa8] sm:$0xff]
          %v1438 = vld [vmem:[%s257 + $0xb0] sm:$0xff]
          %v1439 = vld [vmem:[%s257 + $0xb8] sm:$0xff]
          %v1440 = vld [vmem:[%s257 + $0xc0] sm:$0xff]
          %v1441 = vld [vmem:[%s257 + $0xc8] sm:$0xff]
          %v1442 = vld [vmem:[%s257 + $0xd0] sm:$0xff]
          %v1443 = vld [vmem:[%s257 + $0xd8] sm:$0xff]
          %v1444 = vld [vmem:[%s257 + $0xe0] sm:$0xff]
          %v1445 = vld [vmem:[%s257 + $0xe8] sm:$0xff]
          %v1446 = vld [vmem:[%s257 + $0xf0] sm:$0xff]
          %v1447 = vld [vmem:[%s257 + $0xf8] sm:$0xff]
          %v1448 = vld [vmem:[%s257 + $0x100] sm:$0xff]
          %v1449 = vld [vmem:[%s257 + $0x108] sm:$0xff]
          %v1450 = vld [vmem:[%s257 + $0x110] sm:$0xff]
          %v1451 = vld [vmem:[%s257 + $0x118] sm:$0xff]
          %v1452 = vld [vmem:[%s257 + $0x120] sm:$0xff]
          %v1453 = vld [vmem:[%s257 + $0x128] sm:$0xff]
          %v1454 = vld [vmem:[%s257 + $0x130] sm:$0xff]
          %v1455 = vld [vmem:[%s257 + $0x138] sm:$0xff]
          %v1456 = vld [vmem:[%s257 + $0x140] sm:$0xff]
          %v1457 = vld [vmem:[%s257 + $0x148] sm:$0xff]
          %v1458 = vld [vmem:[%s257 + $0x150] sm:$0xff]
          %v1459 = vld [vmem:[%s257 + $0x158] sm:$0xff]
          %v1460 = vld [vmem:[%s257 + $0x160] sm:$0xff]
          %v1461 = vld [vmem:[%s257 + $0x168] sm:$0xff]
          %v1462 = vld [vmem:[%s257 + $0x170] sm:$0xff]
          %v1463 = vld [vmem:[%s257 + $0x178] sm:$0xff]
          %v1464 = vld [vmem:[%s257 + $0x180] sm:$0xff]
          %v1465 = vld [vmem:[%s257 + $0x188] sm:$0xff]
          %v1466 = vld [vmem:[%s257 + $0x190] sm:$0xff]
          %v1467 = vld [vmem:[%s257 + $0x198] sm:$0xff]
          %v1468 = vld [vmem:[%s257 + $0x1a0] sm:$0xff]
          %v1469 = vld [vmem:[%s257 + $0x1a8] sm:$0xff]
          %v1470 = vld [vmem:[%s257 + $0x1b0] sm:$0xff]
          %v1471 = vld [vmem:[%s257 + $0x1b8] sm:$0xff]
          %v1472 = vld [vmem:[%s257 + $0x1c0] sm:$0xff]
          %v1473 = vld [vmem:[%s257 + $0x1c8] sm:$0xff]
          %v1474 = vld [vmem:[%s257 + $0x1d0] sm:$0xff]
          %v1475 = vld [vmem:[%s257 + $0x1d8] sm:$0xff]
          %v1476 = vld [vmem:[%s257 + $0x1e0] sm:$0xff]
          %v1477 = vld [vmem:[%s257 + $0x1e8] sm:$0xff]
          %v1478 = vld [vmem:[%s257 + $0x1f0] sm:$0xff]
          %v1479 = vld [vmem:[%s257 + $0x1f8] sm:$0xff]
          %v1480 = vld [vmem:[%s257 + $0x200] sm:$0xff]
          %v1481 = vld [vmem:[%s257 + $0x208] sm:$0xff]
          %v1482 = vld [vmem:[%s257 + $0x210] sm:$0xff]
          %v1483 = vld [vmem:[%s257 + $0x218] sm:$0xff]
          %v1484 = vld [vmem:[%s257 + $0x220] sm:$0xff]
          %v1485 = vld [vmem:[%s257 + $0x228] sm:$0xff]
          %v1486 = vld [vmem:[%s257 + $0x230] sm:$0xff]
          %v1487 = vld [vmem:[%s257 + $0x238] sm:$0xff]
          %v1488 = vld [vmem:[%s257 + $0x240] sm:$0xff]
          %v1489 = vld [vmem:[%s257 + $0x248] sm:$0xff]
          %v1490 = vld [vmem:[%s257 + $0x250] sm:$0xff]
          %v1491 = vld [vmem:[%s257 + $0x258] sm:$0xff]
          %v1492 = vld [vmem:[%s257 + $0x260] sm:$0xff]
          %v1493 = vld [vmem:[%s257 + $0x268] sm:$0xff]
          %v1494 = vld [vmem:[%s257 + $0x270] sm:$0xff]
          %v1495 = vld [vmem:[%s257 + $0x278] sm:$0xff]
          %v1496 = vld [vmem:[%s257 + $0x280] sm:$0xff]
          %v1497 = vld [vmem:[%s257 + $0x288] sm:$0xff]
          %v1498 = vld [vmem:[%s257 + $0x290] sm:$0xff]
          %v1499 = vld [vmem:[%s257 + $0x298] sm:$0xff]
          %v1500 = vld [vmem:[%s257 + $0x2a0] sm:$0xff]
          %v1501 = vld [vmem:[%s257 + $0x2a8] sm:$0xff]
          %v1502 = vld [vmem:[%s257 + $0x2b0] sm:$0xff]
          %v1503 = vld [vmem:[%s257 + $0x2b8] sm:$0xff]
          %v1504 = vld [vmem:[%s257 + $0x2c0] sm:$0xff]
          %v1505 = vld [vmem:[%s257 + $0x2c8] sm:$0xff]
          %v1506 = vld [vmem:[%s257 + $0x2d0] sm:$0xff]
          %v1507 = vld [vmem:[%s257 + $0x2d8] sm:$0xff]
          %v1508 = vld [vmem:[%s257 + $0x2e0] sm:$0xff]
          %v1509 = vld [vmem:[%s257 + $0x2e8] sm:$0xff]
          %v1510 = vld [vmem:[%s257 + $0x2f0] sm:$0xff]
          %v1511 = vld [vmem:[%s257 + $0x2f8] sm:$0xff]
          %v1512 = vld [vmem:[%s257 + $0x300] sm:$0xff]
          %v1513 = vld [vmem:[%s257 + $0x308] sm:$0xff]
          %v1514 = vld [vmem:[%s257 + $0x310] sm:$0xff]
          %v1515 = vld [vmem:[%s257 + $0x318] sm:$0xff]
          %v1516 = vld [vmem:[%s257 + $0x320] sm:$0xff]
          %v1517 = vld [vmem:[%s257 + $0x328] sm:$0xff]
          %v1518 = vld [vmem:[%s257 + $0x330] sm:$0xff]
          %v1519 = vld [vmem:[%s257 + $0x338] sm:$0xff]
          %v1520 = vld [vmem:[%s257 + $0x340] sm:$0xff]
          %v1521 = vld [vmem:[%s257 + $0x348] sm:$0xff]
          %v1522 = vld [vmem:[%s257 + $0x350] sm:$0xff]
          %v1523 = vld [vmem:[%s257 + $0x358] sm:$0xff]
          %v1524 = vld [vmem:[%s257 + $0x360] sm:$0xff]
          %v1525 = vld [vmem:[%s257 + $0x368] sm:$0xff]
          %v1526 = vld [vmem:[%s257 + $0x370] sm:$0xff]
          %v1527 = vld [vmem:[%s257 + $0x378] sm:$0xff]
          %v1528 = vld [vmem:[%s257 + $0x380] sm:$0xff]
          %v1529 = vld [vmem:[%s257 + $0x388] sm:$0xff]
          %v1530 = vld [vmem:[%s257 + $0x390] sm:$0xff]
          %v1531 = vld [vmem:[%s257 + $0x398] sm:$0xff]
          %v1532 = vld [vmem:[%s257 + $0x3a0] sm:$0xff]
          %v1533 = vld [vmem:[%s257 + $0x3a8] sm:$0xff]
          %v1534 = vld [vmem:[%s257 + $0x3b0] sm:$0xff]
          %v1535 = vld [vmem:[%s257 + $0x3b8] sm:$0xff]
          %v1536 = vld [vmem:[%s257 + $0x3c0] sm:$0xff]
          %v1537 = vld [vmem:[%s257 + $0x3c8] sm:$0xff]
          %v1538 = vld [vmem:[%s257 + $0x3d0] sm:$0xff]
          %v1539 = vld [vmem:[%s257 + $0x3d8] sm:$0xff]
          %v1540 = vld [vmem:[%s257 + $0x3e0] sm:$0xff]
          %v1541 = vld [vmem:[%s257 + $0x3e8] sm:$0xff]
          %v1542 = vld [vmem:[%s257 + $0x3f0] sm:$0xff]
          %v1543 = vld [vmem:[%s257 + $0x3f8] sm:$0xff]
          %v1544 = vld [vmem:[%s257 + $0x400] sm:$0xff]
          %v1545 = vld [vmem:[%s257 + $0x408] sm:$0xff]
          %v1546 = vld [vmem:[%s257 + $0x410] sm:$0xff]
          %v1547 = vld [vmem:[%s257 + $0x418] sm:$0xff]
          %v1548 = vld [vmem:[%s257 + $0x420] sm:$0xff]
          %v1549 = vld [vmem:[%s257 + $0x428] sm:$0xff]
          %v1550 = vld [vmem:[%s257 + $0x430] sm:$0xff]
          %v1551 = vld [vmem:[%s257 + $0x438] sm:$0xff]
          %v1552 = vld [vmem:[%s257 + $0x440] sm:$0xff]
          %v1553 = vld [vmem:[%s257 + $0x448] sm:$0xff]
          %v1554 = vld [vmem:[%s257 + $0x450] sm:$0xff]
          %v1555 = vld [vmem:[%s257 + $0x458] sm:$0xff]
          %v1556 = vld [vmem:[%s257 + $0x460] sm:$0xff]
          %v1557 = vld [vmem:[%s257 + $0x468] sm:$0xff]
          %v1558 = vld [vmem:[%s257 + $0x470] sm:$0xff]
          %v1559 = vld [vmem:[%s257 + $0x478] sm:$0xff]
          %v1560 = vld [vmem:[%s257 + $0x480] sm:$0xff]
          %v1561 = vld [vmem:[%s257 + $0x488] sm:$0xff]
          %v1562 = vld [vmem:[%s257 + $0x490] sm:$0xff]
          %v1563 = vld [vmem:[%s257 + $0x498] sm:$0xff]
          %v1564 = vld [vmem:[%s257 + $0x4a0] sm:$0xff]
          %v1565 = vld [vmem:[%s257 + $0x4a8] sm:$0xff]
          %v1566 = vld [vmem:[%s257 + $0x4b0] sm:$0xff]
          %v1567 = vld [vmem:[%s257 + $0x4b8] sm:$0xff]
          %v1568 = vld [vmem:[%s257 + $0x4c0] sm:$0xff]
          %v1569 = vld [vmem:[%s257 + $0x4c8] sm:$0xff]
          %v1570 = vld [vmem:[%s257 + $0x4d0] sm:$0xff]
          %v1571 = vld [vmem:[%s257 + $0x4d8] sm:$0xff]
          %v1572 = vld [vmem:[%s257 + $0x4e0] sm:$0xff]
          %v1573 = vld [vmem:[%s257 + $0x4e8] sm:$0xff]
          %v1574 = vld [vmem:[%s257 + $0x4f0] sm:$0xff]
          %v1575 = vld [vmem:[%s257 + $0x4f8] sm:$0xff]
          %v1576 = vld [vmem:[%s257 + $0x500] sm:$0xff]
          %v1577 = vld [vmem:[%s257 + $0x508] sm:$0xff]
          %v1578 = vld [vmem:[%s257 + $0x510] sm:$0xff]
          %v1579 = vld [vmem:[%s257 + $0x518] sm:$0xff]
          %v1580 = vld [vmem:[%s257 + $0x520] sm:$0xff]
          %v1581 = vld [vmem:[%s257 + $0x528] sm:$0xff]
          %v1582 = vld [vmem:[%s257 + $0x530] sm:$0xff]
          %v1583 = vld [vmem:[%s257 + $0x538] sm:$0xff]
          %v1584 = vld [vmem:[%s257 + $0x540] sm:$0xff]
          %v1585 = vld [vmem:[%s257 + $0x548] sm:$0xff]
          %v1586 = vld [vmem:[%s257 + $0x550] sm:$0xff]
          %v1587 = vld [vmem:[%s257 + $0x558] sm:$0xff]
          %v1588 = vld [vmem:[%s257 + $0x560] sm:$0xff]
          %v1589 = vld [vmem:[%s257 + $0x568] sm:$0xff]
          %v1590 = vld [vmem:[%s257 + $0x570] sm:$0xff]
          %v1591 = vld [vmem:[%s257 + $0x578] sm:$0xff]
          %v1592 = vld [vmem:[%s257 + $0x580] sm:$0xff]
          %v1593 = vld [vmem:[%s257 + $0x588] sm:$0xff]
          %v1594 = vld [vmem:[%s257 + $0x590] sm:$0xff]
          %v1595 = vld [vmem:[%s257 + $0x598] sm:$0xff]
          %v1596 = vld [vmem:[%s257 + $0x5a0] sm:$0xff]
          %v1597 = vld [vmem:[%s257 + $0x5a8] sm:$0xff]
          %v1598 = vld [vmem:[%s257 + $0x5b0] sm:$0xff]
          %v1599 = vld [vmem:[%s257 + $0x5b8] sm:$0xff]
          %v1600 = vld [vmem:[%s257 + $0x5c0] sm:$0xff]
          %v1601 = vld [vmem:[%s257 + $0x5c8] sm:$0xff]
          %v1602 = vld [vmem:[%s257 + $0x5d0] sm:$0xff]
          %v1603 = vld [vmem:[%s257 + $0x5d8] sm:$0xff]
          %v1604 = vld [vmem:[%s257 + $0x5e0] sm:$0xff]
          %v1605 = vld [vmem:[%s257 + $0x5e8] sm:$0xff]
          %v1606 = vld [vmem:[%s257 + $0x5f0] sm:$0xff]
          %v1607 = vld [vmem:[%s257 + $0x5f8] sm:$0xff]
          %v1608 = vld [vmem:[%s266] sm:$0xf]
          %v1610 = vlaneseq
          %v1611 = vshrl.u32 %v1610, 7
          %v1612 = vsub.s32 0, %v1611
          %v1613 = vrot.slane %v1608, %v1612
          %v1614 = vlaneseq
          %v1615 = vshrl.u32 %v1614, 7
          %v1616 = vsub.s32 1, %v1615
          %v1617 = vrot.slane %v1608, %v1616
          %v1618 = vlaneseq
          %v1619 = vshrl.u32 %v1618, 7
          %v1620 = vsub.s32 2, %v1619
          %v1621 = vrot.slane %v1608, %v1620
          %v1622 = vlaneseq
          %v1623 = vshrl.u32 %v1622, 7
          %v1624 = vsub.s32 3, %v1623
          %v1625 = vrot.slane %v1608, %v1624
          %v1822 = vunpack.c.l.b16 %v1416
          %v1823 = vunpack.c.h.b16 %v1416
          %v1824 = vunpack.c.l.b16 %v1417
          %v1825 = vunpack.c.h.b16 %v1417
          %v1826 = vunpack.c.l.b16 %v1418
          %v1827 = vunpack.c.h.b16 %v1418
          %v1828 = vunpack.c.l.b16 %v1419
          %v1829 = vunpack.c.h.b16 %v1419
          %v1830 = vunpack.c.l.b16 %v1420
          %v1831 = vunpack.c.h.b16 %v1420
          %v1832 = vunpack.c.l.b16 %v1421
          %v1833 = vunpack.c.h.b16 %v1421
          %v1834 = vunpack.c.l.b16 %v1422
          %v1835 = vunpack.c.h.b16 %v1422
          %v1836 = vunpack.c.l.b16 %v1423
          %v1837 = vunpack.c.h.b16 %v1423
          %v1838 = vunpack.c.l.b16 %v1424
          %v1839 = vunpack.c.h.b16 %v1424
          %v1840 = vunpack.c.l.b16 %v1425
          %v1841 = vunpack.c.h.b16 %v1425
          %v1842 = vunpack.c.l.b16 %v1426
          %v1843 = vunpack.c.h.b16 %v1426
          %v1844 = vunpack.c.l.b16 %v1427
          %v1845 = vunpack.c.h.b16 %v1427
          %v1846 = vunpack.c.l.b16 %v1428
          %v1847 = vunpack.c.h.b16 %v1428
          %v1848 = vunpack.c.l.b16 %v1429
          %v1849 = vunpack.c.h.b16 %v1429
          %v1850 = vunpack.c.l.b16 %v1430
          %v1851 = vunpack.c.h.b16 %v1430
          %v1852 = vunpack.c.l.b16 %v1431
          %v1853 = vunpack.c.h.b16 %v1431
          %v1854 = vunpack.c.l.b16 %v1432
          %v1855 = vunpack.c.h.b16 %v1432
          %v1856 = vunpack.c.l.b16 %v1433
          %v1857 = vunpack.c.h.b16 %v1433
          %v1858 = vunpack.c.l.b16 %v1434
          %v1859 = vunpack.c.h.b16 %v1434
          %v1860 = vunpack.c.l.b16 %v1435
          %v1861 = vunpack.c.h.b16 %v1435
          %v1862 = vunpack.c.l.b16 %v1436
          %v1863 = vunpack.c.h.b16 %v1436
          %v1864 = vunpack.c.l.b16 %v1437
          %v1865 = vunpack.c.h.b16 %v1437
          %v1866 = vunpack.c.l.b16 %v1438
          %v1867 = vunpack.c.h.b16 %v1438
          %v1868 = vunpack.c.l.b16 %v1439
          %v1869 = vunpack.c.h.b16 %v1439
          %v1870 = vunpack.c.l.b16 %v1440
          %v1871 = vunpack.c.h.b16 %v1440
          %v1872 = vunpack.c.l.b16 %v1441
          %v1873 = vunpack.c.h.b16 %v1441
          %v1874 = vunpack.c.l.b16 %v1442
          %v1875 = vunpack.c.h.b16 %v1442
          %v1876 = vunpack.c.l.b16 %v1443
          %v1877 = vunpack.c.h.b16 %v1443
          %v1878 = vunpack.c.l.b16 %v1444
          %v1879 = vunpack.c.h.b16 %v1444
          %v1880 = vunpack.c.l.b16 %v1445
          %v1881 = vunpack.c.h.b16 %v1445
          %v1882 = vunpack.c.l.b16 %v1446
          %v1883 = vunpack.c.h.b16 %v1446
          %v1884 = vunpack.c.l.b16 %v1447
          %v1885 = vunpack.c.h.b16 %v1447
          %v1886 = vunpack.c.l.b16 %v1448
          %v1887 = vunpack.c.h.b16 %v1448
          %v1888 = vunpack.c.l.b16 %v1449
          %v1889 = vunpack.c.h.b16 %v1449
          %v1890 = vunpack.c.l.b16 %v1450
          %v1891 = vunpack.c.h.b16 %v1450
          %v1892 = vunpack.c.l.b16 %v1451
          %v1893 = vunpack.c.h.b16 %v1451
          %v1894 = vunpack.c.l.b16 %v1452
          %v1895 = vunpack.c.h.b16 %v1452
          %v1896 = vunpack.c.l.b16 %v1453
          %v1897 = vunpack.c.h.b16 %v1453
          %v1898 = vunpack.c.l.b16 %v1454
          %v1899 = vunpack.c.h.b16 %v1454
          %v1900 = vunpack.c.l.b16 %v1455
          %v1901 = vunpack.c.h.b16 %v1455
          %v1902 = vunpack.c.l.b16 %v1456
          %v1903 = vunpack.c.h.b16 %v1456
          %v1904 = vunpack.c.l.b16 %v1457
          %v1905 = vunpack.c.h.b16 %v1457
          %v1906 = vunpack.c.l.b16 %v1458
          %v1907 = vunpack.c.h.b16 %v1458
          %v1908 = vunpack.c.l.b16 %v1459
          %v1909 = vunpack.c.h.b16 %v1459
          %v1910 = vunpack.c.l.b16 %v1460
          %v1911 = vunpack.c.h.b16 %v1460
          %v1912 = vunpack.c.l.b16 %v1461
          %v1913 = vunpack.c.h.b16 %v1461
          %v1914 = vunpack.c.l.b16 %v1462
          %v1915 = vunpack.c.h.b16 %v1462
          %v1916 = vunpack.c.l.b16 %v1463
          %v1917 = vunpack.c.h.b16 %v1463
          %v1918 = vunpack.c.l.b16 %v1464
          %v1919 = vunpack.c.h.b16 %v1464
          %v1920 = vunpack.c.l.b16 %v1465
          %v1921 = vunpack.c.h.b16 %v1465
          %v1922 = vunpack.c.l.b16 %v1466
          %v1923 = vunpack.c.h.b16 %v1466
          %v1924 = vunpack.c.l.b16 %v1467
          %v1925 = vunpack.c.h.b16 %v1467
          %v1926 = vunpack.c.l.b16 %v1468
          %v1927 = vunpack.c.h.b16 %v1468
          %v1928 = vunpack.c.l.b16 %v1469
          %v1929 = vunpack.c.h.b16 %v1469
          %v1930 = vunpack.c.l.b16 %v1470
          %v1931 = vunpack.c.h.b16 %v1470
          %v1932 = vunpack.c.l.b16 %v1471
          %v1933 = vunpack.c.h.b16 %v1471
          %v1934 = vunpack.c.l.b16 %v1472
          %v1935 = vunpack.c.h.b16 %v1472
          %v1936 = vunpack.c.l.b16 %v1473
          %v1937 = vunpack.c.h.b16 %v1473
          %v1938 = vunpack.c.l.b16 %v1474
          %v1939 = vunpack.c.h.b16 %v1474
          %v1940 = vunpack.c.l.b16 %v1475
          %v1941 = vunpack.c.h.b16 %v1475
          %v1942 = vunpack.c.l.b16 %v1476
          %v1943 = vunpack.c.h.b16 %v1476
          %v1944 = vunpack.c.l.b16 %v1477
          %v1945 = vunpack.c.h.b16 %v1477
          %v1946 = vunpack.c.l.b16 %v1478
          %v1947 = vunpack.c.h.b16 %v1478
          %v1948 = vunpack.c.l.b16 %v1479
          %v1949 = vunpack.c.h.b16 %v1479
          %v1950 = vunpack.c.l.b16 %v1480
          %v1951 = vunpack.c.h.b16 %v1480
          %v1952 = vunpack.c.l.b16 %v1481
          %v1953 = vunpack.c.h.b16 %v1481
          %v1954 = vunpack.c.l.b16 %v1482
          %v1955 = vunpack.c.h.b16 %v1482
          %v1956 = vunpack.c.l.b16 %v1483
          %v1957 = vunpack.c.h.b16 %v1483
          %v1958 = vunpack.c.l.b16 %v1484
          %v1959 = vunpack.c.h.b16 %v1484
          %v1960 = vunpack.c.l.b16 %v1485
          %v1961 = vunpack.c.h.b16 %v1485
          %v1962 = vunpack.c.l.b16 %v1486
          %v1963 = vunpack.c.h.b16 %v1486
          %v1964 = vunpack.c.l.b16 %v1487
          %v1965 = vunpack.c.h.b16 %v1487
          %v1966 = vunpack.c.l.b16 %v1488
          %v1967 = vunpack.c.h.b16 %v1488
          %v1968 = vunpack.c.l.b16 %v1489
          %v1969 = vunpack.c.h.b16 %v1489
          %v1970 = vunpack.c.l.b16 %v1490
          %v1971 = vunpack.c.h.b16 %v1490
          %v1972 = vunpack.c.l.b16 %v1491
          %v1973 = vunpack.c.h.b16 %v1491
          %v1974 = vunpack.c.l.b16 %v1492
          %v1975 = vunpack.c.h.b16 %v1492
          %v1976 = vunpack.c.l.b16 %v1493
          %v1977 = vunpack.c.h.b16 %v1493
          %v1978 = vunpack.c.l.b16 %v1494
          %v1979 = vunpack.c.h.b16 %v1494
          %v1980 = vunpack.c.l.b16 %v1495
          %v1981 = vunpack.c.h.b16 %v1495
          %v1982 = vunpack.c.l.b16 %v1496
          %v1983 = vunpack.c.h.b16 %v1496
          %v1984 = vunpack.c.l.b16 %v1497
          %v1985 = vunpack.c.h.b16 %v1497
          %v1986 = vunpack.c.l.b16 %v1498
          %v1987 = vunpack.c.h.b16 %v1498
          %v1988 = vunpack.c.l.b16 %v1499
          %v1989 = vunpack.c.h.b16 %v1499
          %v1990 = vunpack.c.l.b16 %v1500
          %v1991 = vunpack.c.h.b16 %v1500
          %v1992 = vunpack.c.l.b16 %v1501
          %v1993 = vunpack.c.h.b16 %v1501
          %v1994 = vunpack.c.l.b16 %v1502
          %v1995 = vunpack.c.h.b16 %v1502
          %v1996 = vunpack.c.l.b16 %v1503
          %v1997 = vunpack.c.h.b16 %v1503
          %v1998 = vunpack.c.l.b16 %v1504
          %v1999 = vunpack.c.h.b16 %v1504
          %v2000 = vunpack.c.l.b16 %v1505
          %v2001 = vunpack.c.h.b16 %v1505
          %v2002 = vunpack.c.l.b16 %v1506
          %v2003 = vunpack.c.h.b16 %v1506
          %v2004 = vunpack.c.l.b16 %v1507
          %v2005 = vunpack.c.h.b16 %v1507
          %v2006 = vunpack.c.l.b16 %v1508
          %v2007 = vunpack.c.h.b16 %v1508
          %v2008 = vunpack.c.l.b16 %v1509
          %v2009 = vunpack.c.h.b16 %v1509
          %v2010 = vunpack.c.l.b16 %v1510
          %v2011 = vunpack.c.h.b16 %v1510
          %v2012 = vunpack.c.l.b16 %v1511
          %v2013 = vunpack.c.h.b16 %v1511
          %v2014 = vunpack.c.l.b16 %v1512
          %v2015 = vunpack.c.h.b16 %v1512
          %v2016 = vunpack.c.l.b16 %v1513
          %v2017 = vunpack.c.h.b16 %v1513
          %v2018 = vunpack.c.l.b16 %v1514
          %v2019 = vunpack.c.h.b16 %v1514
          %v2020 = vunpack.c.l.b16 %v1515
          %v2021 = vunpack.c.h.b16 %v1515
          %v2022 = vunpack.c.l.b16 %v1516
          %v2023 = vunpack.c.h.b16 %v1516
          %v2024 = vunpack.c.l.b16 %v1517
          %v2025 = vunpack.c.h.b16 %v1517
          %v2026 = vunpack.c.l.b16 %v1518
          %v2027 = vunpack.c.h.b16 %v1518
          %v2028 = vunpack.c.l.b16 %v1519
          %v2029 = vunpack.c.h.b16 %v1519
          %v2030 = vunpack.c.l.b16 %v1520
          %v2031 = vunpack.c.h.b16 %v1520
          %v2032 = vunpack.c.l.b16 %v1521
          %v2033 = vunpack.c.h.b16 %v1521
          %v2034 = vunpack.c.l.b16 %v1522
          %v2035 = vunpack.c.h.b16 %v1522
          %v2036 = vunpack.c.l.b16 %v1523
          %v2037 = vunpack.c.h.b16 %v1523
          %v2038 = vunpack.c.l.b16 %v1524
          %v2039 = vunpack.c.h.b16 %v1524
          %v2040 = vunpack.c.l.b16 %v1525
          %v2041 = vunpack.c.h.b16 %v1525
          %v2042 = vunpack.c.l.b16 %v1526
          %v2043 = vunpack.c.h.b16 %v1526
          %v2044 = vunpack.c.l.b16 %v1527
          %v2045 = vunpack.c.h.b16 %v1527
          %v2046 = vunpack.c.l.b16 %v1528
          %v2047 = vunpack.c.h.b16 %v1528
          %v2048 = vunpack.c.l.b16 %v1529
          %v2049 = vunpack.c.h.b16 %v1529
          %v2050 = vunpack.c.l.b16 %v1530
          %v2051 = vunpack.c.h.b16 %v1530
          %v2052 = vunpack.c.l.b16 %v1531
          %v2053 = vunpack.c.h.b16 %v1531
          %v2054 = vunpack.c.l.b16 %v1532
          %v2055 = vunpack.c.h.b16 %v1532
          %v2056 = vunpack.c.l.b16 %v1533
          %v2057 = vunpack.c.h.b16 %v1533
          %v2058 = vunpack.c.l.b16 %v1534
          %v2059 = vunpack.c.h.b16 %v1534
          %v2060 = vunpack.c.l.b16 %v1535
          %v2061 = vunpack.c.h.b16 %v1535
          %v2062 = vunpack.c.l.b16 %v1536
          %v2063 = vunpack.c.h.b16 %v1536
          %v2064 = vunpack.c.l.b16 %v1537
          %v2065 = vunpack.c.h.b16 %v1537
          %v2066 = vunpack.c.l.b16 %v1538
          %v2067 = vunpack.c.h.b16 %v1538
          %v2068 = vunpack.c.l.b16 %v1539
          %v2069 = vunpack.c.h.b16 %v1539
          %v2070 = vunpack.c.l.b16 %v1540
          %v2071 = vunpack.c.h.b16 %v1540
          %v2072 = vunpack.c.l.b16 %v1541
          %v2073 = vunpack.c.h.b16 %v1541
          %v2074 = vunpack.c.l.b16 %v1542
          %v2075 = vunpack.c.h.b16 %v1542
          %v2076 = vunpack.c.l.b16 %v1543
          %v2077 = vunpack.c.h.b16 %v1543
          %v2078 = vunpack.c.l.b16 %v1544
          %v2079 = vunpack.c.h.b16 %v1544
          %v2080 = vunpack.c.l.b16 %v1545
          %v2081 = vunpack.c.h.b16 %v1545
          %v2082 = vunpack.c.l.b16 %v1546
          %v2083 = vunpack.c.h.b16 %v1546
          %v2084 = vunpack.c.l.b16 %v1547
          %v2085 = vunpack.c.h.b16 %v1547
          %v2086 = vunpack.c.l.b16 %v1548
          %v2087 = vunpack.c.h.b16 %v1548
          %v2088 = vunpack.c.l.b16 %v1549
          %v2089 = vunpack.c.h.b16 %v1549
          %v2090 = vunpack.c.l.b16 %v1550
          %v2091 = vunpack.c.h.b16 %v1550
          %v2092 = vunpack.c.l.b16 %v1551
          %v2093 = vunpack.c.h.b16 %v1551
          %v2094 = vunpack.c.l.b16 %v1552
          %v2095 = vunpack.c.h.b16 %v1552
          %v2096 = vunpack.c.l.b16 %v1553
          %v2097 = vunpack.c.h.b16 %v1553
          %v2098 = vunpack.c.l.b16 %v1554
          %v2099 = vunpack.c.h.b16 %v1554
          %v2100 = vunpack.c.l.b16 %v1555
          %v2101 = vunpack.c.h.b16 %v1555
          %v2102 = vunpack.c.l.b16 %v1556
          %v2103 = vunpack.c.h.b16 %v1556
          %v2104 = vunpack.c.l.b16 %v1557
          %v2105 = vunpack.c.h.b16 %v1557
          %v2106 = vunpack.c.l.b16 %v1558
          %v2107 = vunpack.c.h.b16 %v1558
          %v2108 = vunpack.c.l.b16 %v1559
          %v2109 = vunpack.c.h.b16 %v1559
          %v2110 = vunpack.c.l.b16 %v1560
          %v2111 = vunpack.c.h.b16 %v1560
          %v2112 = vunpack.c.l.b16 %v1561
          %v2113 = vunpack.c.h.b16 %v1561
          %v2114 = vunpack.c.l.b16 %v1562
          %v2115 = vunpack.c.h.b16 %v1562
          %v2116 = vunpack.c.l.b16 %v1563
          %v2117 = vunpack.c.h.b16 %v1563
          %v2118 = vunpack.c.l.b16 %v1564
          %v2119 = vunpack.c.h.b16 %v1564
          %v2120 = vunpack.c.l.b16 %v1565
          %v2121 = vunpack.c.h.b16 %v1565
          %v2122 = vunpack.c.l.b16 %v1566
          %v2123 = vunpack.c.h.b16 %v1566
          %v2124 = vunpack.c.l.b16 %v1567
          %v2125 = vunpack.c.h.b16 %v1567
          %v2126 = vunpack.c.l.b16 %v1568
          %v2127 = vunpack.c.h.b16 %v1568
          %v2128 = vunpack.c.l.b16 %v1569
          %v2129 = vunpack.c.h.b16 %v1569
          %v2130 = vunpack.c.l.b16 %v1570
          %v2131 = vunpack.c.h.b16 %v1570
          %v2132 = vunpack.c.l.b16 %v1571
          %v2133 = vunpack.c.h.b16 %v1571
          %v2134 = vunpack.c.l.b16 %v1572
          %v2135 = vunpack.c.h.b16 %v1572
          %v2136 = vunpack.c.l.b16 %v1573
          %v2137 = vunpack.c.h.b16 %v1573
          %v2138 = vunpack.c.l.b16 %v1574
          %v2139 = vunpack.c.h.b16 %v1574
          %v2140 = vunpack.c.l.b16 %v1575
          %v2141 = vunpack.c.h.b16 %v1575
          %v2142 = vunpack.c.l.b16 %v1576
          %v2143 = vunpack.c.h.b16 %v1576
          %v2144 = vunpack.c.l.b16 %v1577
          %v2145 = vunpack.c.h.b16 %v1577
          %v2146 = vunpack.c.l.b16 %v1578
          %v2147 = vunpack.c.h.b16 %v1578
          %v2148 = vunpack.c.l.b16 %v1579
          %v2149 = vunpack.c.h.b16 %v1579
          %v2150 = vunpack.c.l.b16 %v1580
          %v2151 = vunpack.c.h.b16 %v1580
          %v2152 = vunpack.c.l.b16 %v1581
          %v2153 = vunpack.c.h.b16 %v1581
          %v2154 = vunpack.c.l.b16 %v1582
          %v2155 = vunpack.c.h.b16 %v1582
          %v2156 = vunpack.c.l.b16 %v1583
          %v2157 = vunpack.c.h.b16 %v1583
          %v2158 = vunpack.c.l.b16 %v1584
          %v2159 = vunpack.c.h.b16 %v1584
          %v2160 = vunpack.c.l.b16 %v1585
          %v2161 = vunpack.c.h.b16 %v1585
          %v2162 = vunpack.c.l.b16 %v1586
          %v2163 = vunpack.c.h.b16 %v1586
          %v2164 = vunpack.c.l.b16 %v1587
          %v2165 = vunpack.c.h.b16 %v1587
          %v2166 = vunpack.c.l.b16 %v1588
          %v2167 = vunpack.c.h.b16 %v1588
          %v2168 = vunpack.c.l.b16 %v1589
          %v2169 = vunpack.c.h.b16 %v1589
          %v2170 = vunpack.c.l.b16 %v1590
          %v2171 = vunpack.c.h.b16 %v1590
          %v2172 = vunpack.c.l.b16 %v1591
          %v2173 = vunpack.c.h.b16 %v1591
          %v2174 = vunpack.c.l.b16 %v1592
          %v2175 = vunpack.c.h.b16 %v1592
          %v2176 = vunpack.c.l.b16 %v1593
          %v2177 = vunpack.c.h.b16 %v1593
          %v2178 = vunpack.c.l.b16 %v1594
          %v2179 = vunpack.c.h.b16 %v1594
          %v2180 = vunpack.c.l.b16 %v1595
          %v2181 = vunpack.c.h.b16 %v1595
          %v2182 = vunpack.c.l.b16 %v1596
          %v2183 = vunpack.c.h.b16 %v1596
          %v2184 = vunpack.c.l.b16 %v1597
          %v2185 = vunpack.c.h.b16 %v1597
          %v2186 = vunpack.c.l.b16 %v1598
          %v2187 = vunpack.c.h.b16 %v1598
          %v2188 = vunpack.c.l.b16 %v1599
          %v2189 = vunpack.c.h.b16 %v1599
          %v2190 = vunpack.c.l.b16 %v1600
          %v2191 = vunpack.c.h.b16 %v1600
          %v2192 = vunpack.c.l.b16 %v1601
          %v2193 = vunpack.c.h.b16 %v1601
          %v2194 = vunpack.c.l.b16 %v1602
          %v2195 = vunpack.c.h.b16 %v1602
          %v2196 = vunpack.c.l.b16 %v1603
          %v2197 = vunpack.c.h.b16 %v1603
          %v2198 = vunpack.c.l.b16 %v1604
          %v2199 = vunpack.c.h.b16 %v1604
          %v2200 = vunpack.c.l.b16 %v1605
          %v2201 = vunpack.c.h.b16 %v1605
          %v2202 = vunpack.c.l.b16 %v1606
          %v2203 = vunpack.c.h.b16 %v1606
          %v2204 = vunpack.c.l.b16 %v1607
          %v2205 = vunpack.c.h.b16 %v1607
          %v2206 = vpack.c.b16 %v1826, %v1822
          %v2207 = vpack.c.b16 %v1827, %v1823
          %v2208 = vpack.c.b16 %v1828, %v1824
          %v2209 = vpack.c.b16 %v1829, %v1825
          %v2210 = vpack.c.b16 %v1834, %v1830
          %v2211 = vpack.c.b16 %v1835, %v1831
          %v2212 = vpack.c.b16 %v1836, %v1832
          %v2213 = vpack.c.b16 %v1837, %v1833
          %v2214 = vpack.c.b16 %v1842, %v1838
          %v2215 = vpack.c.b16 %v1843, %v1839
          %v2216 = vpack.c.b16 %v1844, %v1840
          %v2217 = vpack.c.b16 %v1845, %v1841
          %v2218 = vpack.c.b16 %v1850, %v1846
          %v2219 = vpack.c.b16 %v1851, %v1847
          %v2220 = vpack.c.b16 %v1852, %v1848
          %v2221 = vpack.c.b16 %v1853, %v1849
          %v2222 = vpack.c.b16 %v1858, %v1854
          %v2223 = vpack.c.b16 %v1859, %v1855
          %v2224 = vpack.c.b16 %v1860, %v1856
          %v2225 = vpack.c.b16 %v1861, %v1857
          %v2226 = vpack.c.b16 %v1866, %v1862
          %v2227 = vpack.c.b16 %v1867, %v1863
          %v2228 = vpack.c.b16 %v1868, %v1864
          %v2229 = vpack.c.b16 %v1869, %v1865
          %v2230 = vpack.c.b16 %v1874, %v1870
          %v2231 = vpack.c.b16 %v1875, %v1871
          %v2232 = vpack.c.b16 %v1876, %v1872
          %v2233 = vpack.c.b16 %v1877, %v1873
          %v2234 = vpack.c.b16 %v1882, %v1878
          %v2235 = vpack.c.b16 %v1883, %v1879
          %v2236 = vpack.c.b16 %v1884, %v1880
          %v2237 = vpack.c.b16 %v1885, %v1881
          %v2238 = vpack.c.b16 %v1890, %v1886
          %v2239 = vpack.c.b16 %v1891, %v1887
          %v2240 = vpack.c.b16 %v1892, %v1888
          %v2241 = vpack.c.b16 %v1893, %v1889
          %v2242 = vpack.c.b16 %v1898, %v1894
          %v2243 = vpack.c.b16 %v1899, %v1895
          %v2244 = vpack.c.b16 %v1900, %v1896
          %v2245 = vpack.c.b16 %v1901, %v1897
          %v2246 = vpack.c.b16 %v1906, %v1902
          %v2247 = vpack.c.b16 %v1907, %v1903
          %v2248 = vpack.c.b16 %v1908, %v1904
          %v2249 = vpack.c.b16 %v1909, %v1905
          %v2250 = vpack.c.b16 %v1914, %v1910
          %v2251 = vpack.c.b16 %v1915, %v1911
          %v2252 = vpack.c.b16 %v1916, %v1912
          %v2253 = vpack.c.b16 %v1917, %v1913
          %v2254 = vpack.c.b16 %v1922, %v1918
          %v2255 = vpack.c.b16 %v1923, %v1919
          %v2256 = vpack.c.b16 %v1924, %v1920
          %v2257 = vpack.c.b16 %v1925, %v1921
          %v2258 = vpack.c.b16 %v1930, %v1926
          %v2259 = vpack.c.b16 %v1931, %v1927
          %v2260 = vpack.c.b16 %v1932, %v1928
          %v2261 = vpack.c.b16 %v1933, %v1929
          %v2262 = vpack.c.b16 %v1938, %v1934
          %v2263 = vpack.c.b16 %v1939, %v1935
          %v2264 = vpack.c.b16 %v1940, %v1936
          %v2265 = vpack.c.b16 %v1941, %v1937
          %v2266 = vpack.c.b16 %v1946, %v1942
          %v2267 = vpack.c.b16 %v1947, %v1943
          %v2268 = vpack.c.b16 %v1948, %v1944
          %v2269 = vpack.c.b16 %v1949, %v1945
          %v2270 = vpack.c.b16 %v1954, %v1950
          %v2271 = vpack.c.b16 %v1955, %v1951
          %v2272 = vpack.c.b16 %v1956, %v1952
          %v2273 = vpack.c.b16 %v1957, %v1953
          %v2274 = vpack.c.b16 %v1962, %v1958
          %v2275 = vpack.c.b16 %v1963, %v1959
          %v2276 = vpack.c.b16 %v1964, %v1960
          %v2277 = vpack.c.b16 %v1965, %v1961
          %v2278 = vpack.c.b16 %v1970, %v1966
          %v2279 = vpack.c.b16 %v1971, %v1967
          %v2280 = vpack.c.b16 %v1972, %v1968
          %v2281 = vpack.c.b16 %v1973, %v1969
          %v2282 = vpack.c.b16 %v1978, %v1974
          %v2283 = vpack.c.b16 %v1979, %v1975
          %v2284 = vpack.c.b16 %v1980, %v1976
          %v2285 = vpack.c.b16 %v1981, %v1977
          %v2286 = vpack.c.b16 %v1986, %v1982
          %v2287 = vpack.c.b16 %v1987, %v1983
          %v2288 = vpack.c.b16 %v1988, %v1984
          %v2289 = vpack.c.b16 %v1989, %v1985
          %v2290 = vpack.c.b16 %v1994, %v1990
          %v2291 = vpack.c.b16 %v1995, %v1991
          %v2292 = vpack.c.b16 %v1996, %v1992
          %v2293 = vpack.c.b16 %v1997, %v1993
          %v2294 = vpack.c.b16 %v2002, %v1998
          %v2295 = vpack.c.b16 %v2003, %v1999
          %v2296 = vpack.c.b16 %v2004, %v2000
          %v2297 = vpack.c.b16 %v2005, %v2001
          %v2298 = vpack.c.b16 %v2010, %v2006
          %v2299 = vpack.c.b16 %v2011, %v2007
          %v2300 = vpack.c.b16 %v2012, %v2008
          %v2301 = vpack.c.b16 %v2013, %v2009
          %v2302 = vpack.c.b16 %v2018, %v2014
          %v2303 = vpack.c.b16 %v2019, %v2015
          %v2304 = vpack.c.b16 %v2020, %v2016
          %v2305 = vpack.c.b16 %v2021, %v2017
          %v2306 = vpack.c.b16 %v2026, %v2022
          %v2307 = vpack.c.b16 %v2027, %v2023
          %v2308 = vpack.c.b16 %v2028, %v2024
          %v2309 = vpack.c.b16 %v2029, %v2025
          %v2310 = vpack.c.b16 %v2034, %v2030
          %v2311 = vpack.c.b16 %v2035, %v2031
          %v2312 = vpack.c.b16 %v2036, %v2032
          %v2313 = vpack.c.b16 %v2037, %v2033
          %v2314 = vpack.c.b16 %v2042, %v2038
          %v2315 = vpack.c.b16 %v2043, %v2039
          %v2316 = vpack.c.b16 %v2044, %v2040
          %v2317 = vpack.c.b16 %v2045, %v2041
          %v2318 = vpack.c.b16 %v2050, %v2046
          %v2319 = vpack.c.b16 %v2051, %v2047
          %v2320 = vpack.c.b16 %v2052, %v2048
          %v2321 = vpack.c.b16 %v2053, %v2049
          %v2322 = vpack.c.b16 %v2058, %v2054
          %v2323 = vpack.c.b16 %v2059, %v2055
          %v2324 = vpack.c.b16 %v2060, %v2056
          %v2325 = vpack.c.b16 %v2061, %v2057
          %v2326 = vpack.c.b16 %v2066, %v2062
          %v2327 = vpack.c.b16 %v2067, %v2063
          %v2328 = vpack.c.b16 %v2068, %v2064
          %v2329 = vpack.c.b16 %v2069, %v2065
          %v2330 = vpack.c.b16 %v2074, %v2070
          %v2331 = vpack.c.b16 %v2075, %v2071
          %v2332 = vpack.c.b16 %v2076, %v2072
          %v2333 = vpack.c.b16 %v2077, %v2073
          %v2334 = vpack.c.b16 %v2082, %v2078
          %v2335 = vpack.c.b16 %v2083, %v2079
          %v2336 = vpack.c.b16 %v2084, %v2080
          %v2337 = vpack.c.b16 %v2085, %v2081
          %v2338 = vpack.c.b16 %v2090, %v2086
          %v2339 = vpack.c.b16 %v2091, %v2087
          %v2340 = vpack.c.b16 %v2092, %v2088
          %v2341 = vpack.c.b16 %v2093, %v2089
          %v2342 = vpack.c.b16 %v2098, %v2094
          %v2343 = vpack.c.b16 %v2099, %v2095
          %v2344 = vpack.c.b16 %v2100, %v2096
          %v2345 = vpack.c.b16 %v2101, %v2097
          %v2346 = vpack.c.b16 %v2106, %v2102
          %v2347 = vpack.c.b16 %v2107, %v2103
          %v2348 = vpack.c.b16 %v2108, %v2104
          %v2349 = vpack.c.b16 %v2109, %v2105
          %v2350 = vpack.c.b16 %v2114, %v2110
          %v2351 = vpack.c.b16 %v2115, %v2111
          %v2352 = vpack.c.b16 %v2116, %v2112
          %v2353 = vpack.c.b16 %v2117, %v2113
          %v2354 = vpack.c.b16 %v2122, %v2118
          %v2355 = vpack.c.b16 %v2123, %v2119
          %v2356 = vpack.c.b16 %v2124, %v2120
          %v2357 = vpack.c.b16 %v2125, %v2121
          %v2358 = vpack.c.b16 %v2130, %v2126
          %v2359 = vpack.c.b16 %v2131, %v2127
          %v2360 = vpack.c.b16 %v2132, %v2128
          %v2361 = vpack.c.b16 %v2133, %v2129
          %v2362 = vpack.c.b16 %v2138, %v2134
          %v2363 = vpack.c.b16 %v2139, %v2135
          %v2364 = vpack.c.b16 %v2140, %v2136
          %v2365 = vpack.c.b16 %v2141, %v2137
          %v2366 = vpack.c.b16 %v2146, %v2142
          %v2367 = vpack.c.b16 %v2147, %v2143
          %v2368 = vpack.c.b16 %v2148, %v2144
          %v2369 = vpack.c.b16 %v2149, %v2145
          %v2370 = vpack.c.b16 %v2154, %v2150
          %v2371 = vpack.c.b16 %v2155, %v2151
          %v2372 = vpack.c.b16 %v2156, %v2152
          %v2373 = vpack.c.b16 %v2157, %v2153
          %v2374 = vpack.c.b16 %v2162, %v2158
          %v2375 = vpack.c.b16 %v2163, %v2159
          %v2376 = vpack.c.b16 %v2164, %v2160
          %v2377 = vpack.c.b16 %v2165, %v2161
          %v2378 = vpack.c.b16 %v2170, %v2166
          %v2379 = vpack.c.b16 %v2171, %v2167
          %v2380 = vpack.c.b16 %v2172, %v2168
          %v2381 = vpack.c.b16 %v2173, %v2169
          %v2382 = vpack.c.b16 %v2178, %v2174
          %v2383 = vpack.c.b16 %v2179, %v2175
          %v2384 = vpack.c.b16 %v2180, %v2176
          %v2385 = vpack.c.b16 %v2181, %v2177
          %v2386 = vpack.c.b16 %v2186, %v2182
          %v2387 = vpack.c.b16 %v2187, %v2183
          %v2388 = vpack.c.b16 %v2188, %v2184
          %v2389 = vpack.c.b16 %v2189, %v2185
          %v2390 = vpack.c.b16 %v2194, %v2190
          %v2391 = vpack.c.b16 %v2195, %v2191
          %v2392 = vpack.c.b16 %v2196, %v2192
          %v2393 = vpack.c.b16 %v2197, %v2193
          %v2394 = vpack.c.b16 %v2202, %v2198
          %v2395 = vpack.c.b16 %v2203, %v2199
          %v2396 = vpack.c.b16 %v2204, %v2200
          %v2397 = vpack.c.b16 %v2205, %v2201
          %2590 = vmatprep.subr.bf16.mxu0 %v2235
          %2591 = vmatpush1.bf16.msra.mxu0 %v2234
          %2592 = vmatprep.subr.bf16.mxu0 %v2231
          %2593 = vmatpush1.bf16.msra.mxu0 %v2230
          %2594 = vmatprep.subr.bf16.mxu0 %v2227
          %2595 = vmatpush1.bf16.msra.mxu0 %v2226
          %2596 = vmatprep.subr.bf16.mxu0 %v2223
          %2597 = vmatpush1.bf16.msra.mxu0 %v2222
          %2598 = vmatprep.subr.bf16.mxu0 %v2219
          %2599 = vmatpush1.bf16.msra.mxu0 %v2218
          %2600 = vmatprep.subr.bf16.mxu0 %v2215
          %2601 = vmatpush1.bf16.msra.mxu0 %v2214
          %2602 = vmatprep.subr.bf16.mxu0 %v2211
          %2603 = vmatpush1.bf16.msra.mxu0 %v2210
          %2604 = vmatprep.subr.bf16.mxu0 %v2207
          %2605 = vmatpush1.bf16.msra.mxu0 %v2206
          %2606 = vmatprep.subr.bf16.mxu0 %v2267
          %2607 = vmatpush2.bf16.msra.mxu0 %v2266
          %2608 = vmatprep.subr.bf16.mxu0 %v2263
          %2609 = vmatpush2.bf16.msra.mxu0 %v2262
          %2610 = vmatprep.subr.bf16.mxu0 %v2259
          %2611 = vmatpush2.bf16.msra.mxu0 %v2258
          %2612 = vmatprep.subr.bf16.mxu0 %v2255
          %2613 = vmatpush2.bf16.msra.mxu0 %v2254
          %2614 = vmatprep.subr.bf16.mxu0 %v2251
          %2615 = vmatpush2.bf16.msra.mxu0 %v2250
          %2616 = vmatprep.subr.bf16.mxu0 %v2247
          %2617 = vmatpush2.bf16.msra.mxu0 %v2246
          %2618 = vmatprep.subr.bf16.mxu0 %v2243
          %2619 = vmatpush2.bf16.msra.mxu0 %v2242
          %2620 = vmatprep.subr.bf16.mxu0 %v2239
          %2621 = vmatpush2.bf16.msra.mxu0 %v2238
          %2622 = vmatprep.mubr.bf16.mxu0 %v1411
          %2623 = vmatmul.mubr.bf16.gmra.mxu0 %v1410
          %v2624 = vpop.f32.mrf.mxu0
          %v2625 = vadd.f32 %v1613, %v2624
          %v2626 = vpop.f32.mrf.mxu0
          %v2627 = vadd.f32 %v1617, %v2626
          %v2628 = vpop.f32.mrf.mxu0
          %v2629 = vpop.f32.mrf.mxu0
          %2630 = vdwg.mxu0
          %2631 = vmatprep.subr.bf16.mxu0 %v2299
          %2632 = vmatpush1.bf16.msra.mxu0 %v2298
          %2633 = vmatprep.subr.bf16.mxu0 %v2295
          %2634 = vmatpush1.bf16.msra.mxu0 %v2294
          %2635 = vmatprep.subr.bf16.mxu0 %v2291
          %2636 = vmatpush1.bf16.msra.mxu0 %v2290
          %2637 = vmatprep.subr.bf16.mxu0 %v2287
          %2638 = vmatpush1.bf16.msra.mxu0 %v2286
          %2639 = vmatprep.subr.bf16.mxu0 %v2283
          %2640 = vmatpush1.bf16.msra.mxu0 %v2282
          %2641 = vmatprep.subr.bf16.mxu0 %v2279
          %2642 = vmatpush1.bf16.msra.mxu0 %v2278
          %2643 = vmatprep.subr.bf16.mxu0 %v2275
          %2644 = vmatpush1.bf16.msra.mxu0 %v2274
          %2645 = vmatprep.subr.bf16.mxu0 %v2271
          %2646 = vmatpush1.bf16.msra.mxu0 %v2270
          %2647 = vmatprep.subr.bf16.mxu0 %v2331
          %2648 = vmatpush2.bf16.msra.mxu0 %v2330
          %2649 = vmatprep.subr.bf16.mxu0 %v2327
          %2650 = vmatpush2.bf16.msra.mxu0 %v2326
          %2651 = vmatprep.subr.bf16.mxu0 %v2323
          %2652 = vmatpush2.bf16.msra.mxu0 %v2322
          %2653 = vmatprep.subr.bf16.mxu0 %v2319
          %2654 = vmatpush2.bf16.msra.mxu0 %v2318
          %2655 = vmatprep.subr.bf16.mxu0 %v2315
          %2656 = vmatpush2.bf16.msra.mxu0 %v2314
          %2657 = vmatprep.subr.bf16.mxu0 %v2311
          %2658 = vmatpush2.bf16.msra.mxu0 %v2310
          %2659 = vmatprep.subr.bf16.mxu0 %v2307
          %2660 = vmatpush2.bf16.msra.mxu0 %v2306
          %2661 = vmatprep.subr.bf16.mxu0 %v2303
          %2662 = vmatpush2.bf16.msra.mxu0 %v2302
          %2663 = vmatprep.mubr.bf16.mxu0 %v1413
          %2664 = vmatmul.mubr.bf16.gmra.mxu0 %v1412
          %v2665 = vpop.f32.mrf.mxu0
          %v2666 = vadd.f32 %v2625, %v2665
          %v2667 = vpop.f32.mrf.mxu0
          %v2668 = vadd.f32 %v2627, %v2667
          %v2669 = vpop.f32.mrf.mxu0
          %v2670 = vpop.f32.mrf.mxu0
          %2671 = vdwg.mxu0
          %2672 = vmatprep.subr.bf16.mxu0 %v2363
          %2673 = vmatpush1.bf16.msra.mxu0 %v2362
          %2674 = vmatprep.subr.bf16.mxu0 %v2359
          %2675 = vmatpush1.bf16.msra.mxu0 %v2358
          %2676 = vmatprep.subr.bf16.mxu0 %v2355
          %2677 = vmatpush1.bf16.msra.mxu0 %v2354
          %2678 = vmatprep.subr.bf16.mxu0 %v2351
          %2679 = vmatpush1.bf16.msra.mxu0 %v2350
          %2680 = vmatprep.subr.bf16.mxu0 %v2347
          %2681 = vmatpush1.bf16.msra.mxu0 %v2346
          %2682 = vmatprep.subr.bf16.mxu0 %v2343
          %2683 = vmatpush1.bf16.msra.mxu0 %v2342
          %2684 = vmatprep.subr.bf16.mxu0 %v2339
          %2685 = vmatpush1.bf16.msra.mxu0 %v2338
          %2686 = vmatprep.subr.bf16.mxu0 %v2335
          %2687 = vmatpush1.bf16.msra.mxu0 %v2334
          %2688 = vmatprep.subr.bf16.mxu0 %v2395
          %2689 = vmatpush2.bf16.msra.mxu0 %v2394
          %2690 = vmatprep.subr.bf16.mxu0 %v2391
          %2691 = vmatpush2.bf16.msra.mxu0 %v2390
          %2692 = vmatprep.subr.bf16.mxu0 %v2387
          %2693 = vmatpush2.bf16.msra.mxu0 %v2386
          %2694 = vmatprep.subr.bf16.mxu0 %v2383
          %2695 = vmatpush2.bf16.msra.mxu0 %v2382
          %2696 = vmatprep.subr.bf16.mxu0 %v2379
          %2697 = vmatpush2.bf16.msra.mxu0 %v2378
          %2698 = vmatprep.subr.bf16.mxu0 %v2375
          %2699 = vmatpush2.bf16.msra.mxu0 %v2374
          %2700 = vmatprep.subr.bf16.mxu0 %v2371
          %2701 = vmatpush2.bf16.msra.mxu0 %v2370
          %2702 = vmatprep.subr.bf16.mxu0 %v2367
          %2703 = vmatpush2.bf16.msra.mxu0 %v2366
          %2704 = vmatprep.mubr.bf16.mxu0 %v1415
          %2705 = vmatmul.mubr.bf16.gmra.mxu0 %v1414
          %v2706 = vpop.f32.mrf.mxu0
          %v2707 = vadd.f32 %v2666, %v2706
          %v2708 = vpop.f32.mrf.mxu0
          %v2709 = vadd.f32 %v2668, %v2708
          %v2710 = vpop.f32.mrf.mxu0
          %v2711 = vpop.f32.mrf.mxu0
          %2712 = vdwg.mxu0
          %2713 = vmatprep.subr.bf16.mxu0 %v2237
          %2714 = vmatpush1.bf16.msra.mxu0 %v2236
          %2715 = vmatprep.subr.bf16.mxu0 %v2233
          %2716 = vmatpush1.bf16.msra.mxu0 %v2232
          %2717 = vmatprep.subr.bf16.mxu0 %v2229
          %2718 = vmatpush1.bf16.msra.mxu0 %v2228
          %2719 = vmatprep.subr.bf16.mxu0 %v2225
          %2720 = vmatpush1.bf16.msra.mxu0 %v2224
          %2721 = vmatprep.subr.bf16.mxu0 %v2221
          %2722 = vmatpush1.bf16.msra.mxu0 %v2220
          %2723 = vmatprep.subr.bf16.mxu0 %v2217
          %2724 = vmatpush1.bf16.msra.mxu0 %v2216
          %2725 = vmatprep.subr.bf16.mxu0 %v2213
          %2726 = vmatpush1.bf16.msra.mxu0 %v2212
          %2727 = vmatprep.subr.bf16.mxu0 %v2209
          %2728 = vmatpush1.bf16.msra.mxu0 %v2208
          %2729 = vmatprep.subr.bf16.mxu0 %v2269
          %2730 = vmatpush2.bf16.msra.mxu0 %v2268
          %2731 = vmatprep.subr.bf16.mxu0 %v2265
          %2732 = vmatpush2.bf16.msra.mxu0 %v2264
          %2733 = vmatprep.subr.bf16.mxu0 %v2261
          %2734 = vmatpush2.bf16.msra.mxu0 %v2260
          %2735 = vmatprep.subr.bf16.mxu0 %v2257
          %2736 = vmatpush2.bf16.msra.mxu0 %v2256
          %2737 = vmatprep.subr.bf16.mxu0 %v2253
          %2738 = vmatpush2.bf16.msra.mxu0 %v2252
          %2739 = vmatprep.subr.bf16.mxu0 %v2249
          %2740 = vmatpush2.bf16.msra.mxu0 %v2248
          %2741 = vmatprep.subr.bf16.mxu0 %v2245
          %2742 = vmatpush2.bf16.msra.mxu0 %v2244
          %2743 = vmatprep.subr.bf16.mxu0 %v2241
          %2744 = vmatpush2.bf16.msra.mxu0 %v2240
          %2745 = vmatprep.mubr.bf16.mxu0 %v1411
          %2746 = vmatmul.mubr.bf16.gmra.mxu0 %v1410
          %v2747 = vpop.f32.mrf.mxu0
          %v2748 = vadd.f32 %v1621, %v2747
          %v2749 = vpop.f32.mrf.mxu0
          %v2750 = vadd.f32 %v1625, %v2749
          %v2751 = vpop.f32.mrf.mxu0
          %v2752 = vpop.f32.mrf.mxu0
          %2753 = vdwg.mxu0
          %2754 = vmatprep.subr.bf16.mxu0 %v2301
          %2755 = vmatpush1.bf16.msra.mxu0 %v2300
          %2756 = vmatprep.subr.bf16.mxu0 %v2297
          %2757 = vmatpush1.bf16.msra.mxu0 %v2296
          %2758 = vmatprep.subr.bf16.mxu0 %v2293
          %2759 = vmatpush1.bf16.msra.mxu0 %v2292
          %2760 = vmatprep.subr.bf16.mxu0 %v2289
          %2761 = vmatpush1.bf16.msra.mxu0 %v2288
          %2762 = vmatprep.subr.bf16.mxu0 %v2285
          %2763 = vmatpush1.bf16.msra.mxu0 %v2284
          %2764 = vmatprep.subr.bf16.mxu0 %v2281
          %2765 = vmatpush1.bf16.msra.mxu0 %v2280
          %2766 = vmatprep.subr.bf16.mxu0 %v2277
          %2767 = vmatpush1.bf16.msra.mxu0 %v2276
          %2768 = vmatprep.subr.bf16.mxu0 %v2273
          %2769 = vmatpush1.bf16.msra.mxu0 %v2272
          %2770 = vmatprep.subr.bf16.mxu0 %v2333
          %2771 = vmatpush2.bf16.msra.mxu0 %v2332
          %2772 = vmatprep.subr.bf16.mxu0 %v2329
          %2773 = vmatpush2.bf16.msra.mxu0 %v2328
          %2774 = vmatprep.subr.bf16.mxu0 %v2325
          %2775 = vmatpush2.bf16.msra.mxu0 %v2324
          %2776 = vmatprep.subr.bf16.mxu0 %v2321
          %2777 = vmatpush2.bf16.msra.mxu0 %v2320
          %2778 = vmatprep.subr.bf16.mxu0 %v2317
          %2779 = vmatpush2.bf16.msra.mxu0 %v2316
          %2780 = vmatprep.subr.bf16.mxu0 %v2313
          %2781 = vmatpush2.bf16.msra.mxu0 %v2312
          %2782 = vmatprep.subr.bf16.mxu0 %v2309
          %2783 = vmatpush2.bf16.msra.mxu0 %v2308
          %2784 = vmatprep.subr.bf16.mxu0 %v2305
          %2785 = vmatpush2.bf16.msra.mxu0 %v2304
          %2786 = vmatprep.mubr.bf16.mxu0 %v1413
          %2787 = vmatmul.mubr.bf16.gmra.mxu0 %v1412
          %v2788 = vpop.f32.mrf.mxu0
          %v2789 = vadd.f32 %v2748, %v2788
          %v2790 = vpop.f32.mrf.mxu0
          %v2791 = vadd.f32 %v2750, %v2790
          %v2792 = vpop.f32.mrf.mxu0
          %v2793 = vpop.f32.mrf.mxu0
          %2794 = vdwg.mxu0
          %2795 = vmatprep.subr.bf16.mxu0 %v2365
          %2796 = vmatpush1.bf16.msra.mxu0 %v2364
          %2797 = vmatprep.subr.bf16.mxu0 %v2361
          %2798 = vmatpush1.bf16.msra.mxu0 %v2360
          %2799 = vmatprep.subr.bf16.mxu0 %v2357
          %2800 = vmatpush1.bf16.msra.mxu0 %v2356
          %2801 = vmatprep.subr.bf16.mxu0 %v2353
          %2802 = vmatpush1.bf16.msra.mxu0 %v2352
          %2803 = vmatprep.subr.bf16.mxu0 %v2349
          %2804 = vmatpush1.bf16.msra.mxu0 %v2348
          %2805 = vmatprep.subr.bf16.mxu0 %v2345
          %2806 = vmatpush1.bf16.msra.mxu0 %v2344
          %2807 = vmatprep.subr.bf16.mxu0 %v2341
          %2808 = vmatpush1.bf16.msra.mxu0 %v2340
          %2809 = vmatprep.subr.bf16.mxu0 %v2337
          %2810 = vmatpush1.bf16.msra.mxu0 %v2336
          %2811 = vmatprep.subr.bf16.mxu0 %v2397
          %2812 = vmatpush2.bf16.msra.mxu0 %v2396
          %2813 = vmatprep.subr.bf16.mxu0 %v2393
          %2814 = vmatpush2.bf16.msra.mxu0 %v2392
          %2815 = vmatprep.subr.bf16.mxu0 %v2389
          %2816 = vmatpush2.bf16.msra.mxu0 %v2388
          %2817 = vmatprep.subr.bf16.mxu0 %v2385
          %2818 = vmatpush2.bf16.msra.mxu0 %v2384
          %2819 = vmatprep.subr.bf16.mxu0 %v2381
          %2820 = vmatpush2.bf16.msra.mxu0 %v2380
          %2821 = vmatprep.subr.bf16.mxu0 %v2377
          %2822 = vmatpush2.bf16.msra.mxu0 %v2376
          %2823 = vmatprep.subr.bf16.mxu0 %v2373
          %2824 = vmatpush2.bf16.msra.mxu0 %v2372
          %2825 = vmatprep.subr.bf16.mxu0 %v2369
          %2826 = vmatpush2.bf16.msra.mxu0 %v2368
          %2827 = vmatprep.mubr.bf16.mxu0 %v1415
          %2828 = vmatmul.mubr.bf16.gmra.mxu0 %v1414
          %v2829 = vpop.f32.mrf.mxu0
          %v2830 = vadd.f32 %v2789, %v2829
          %v2831 = vpop.f32.mrf.mxu0
          %v2832 = vadd.f32 %v2791, %v2831
          %v2833 = vpop.f32.mrf.mxu0
          %v2834 = vpop.f32.mrf.mxu0
          %2835 = vdwg.mxu0
          %v2840 = vcombine.low %v2707, %v2709
          %v2841 = vcombine.low %v2830, %v2832
          %v2843 = vunpack.c.l.s4 1983009808
          %v2844 = vunpack.c.0.s8 %v2843
          %v2845 = vlaneseq
          %v2846 = vshrl.u32 %v2845, 7
          %v2847 = vsub.s32 %v2844, %v2846
          %v2848 = vrot.slane %v2840, %v2847
          %v2850 = vunpack.c.l.s4 1983009808
          %v2851 = vunpack.c.0.s8 %v2850
          %v2852 = vlaneseq
          %v2853 = vshrl.u32 %v2852, 7
          %v2854 = vsub.s32 %v2851, %v2853
          %v2855 = vrot.slane %v2841, %v2854
          %v2856 = vcombine.low %v2848, %v2855
          %2858 = vst [vmem:[%s298] sm:$0xff] %v2856
          %v2859 = vld [vmem:[%s675] sm:$0xff]
          %v2860 = vld [vmem:[%s675 + $0x8] sm:$0xf]
          %v2861 = vld [vmem:[%s832] sm:$0xff]
          %v2862 = vld [vmem:[%s832 + $0x8] sm:$0xf]
          %v2863 = vmul.f32 %v2859, 0.125
          %v2864 = vmul.f32 %v2860, 0.125
          %v2865 = vmul.f32 %v2863, %v2859
          %v2866 = vmul.f32 %v2864, %v2860
          %v2867 = vsub.f32 %v2861, %v2865
          %v2868 = vsub.f32 %v2862, %v2866
          %v2869 = vmax.f32 %v2867, 0.0
          %v2870 = vmax.f32 %v2868, 0.0
          %v2871 = vadd.f32 %v2869, 2.3e-08
          %v2872 = vadd.f32 %v2870, 2.3e-08
          %v2873 = vmul.f32 %v2871, 0.125
          %v2874 = vmul.f32 %v2872, 0.125
          %v2875 = vrsqrt.pop %v2873
          %v2876 = vmul.f32 %v2873, %v2875
          %vm2877 = vcmp.eq.f32.partialorder %v2873, inf
          %v2878 = vsel %vm2877, %v2873, %v2876
          %vm2879 = vcmp.eq.f32.partialorder %v2873, 0.0
          %v2880 = vand.u32 %v2873, 2147483648
          %v2881 = vsel %vm2879, %v2880, %v2878
          %v2882 = vrsqrt.pop %v2874
          %v2883 = vmul.f32 %v2874, %v2882
          %vm2884 = vcmp.eq.f32.partialorder %v2874, inf
          %v2885 = vsel %vm2884, %v2874, %v2883
          %vm2886 = vcmp.eq.f32.partialorder %v2874, 0.0
          %v2887 = vand.u32 %v2874, 2147483648
          %v2888 = vsel %vm2886, %v2887, %v2885
          %v2889 = vadd.f32 %v2863, %v2881
          %v2890 = vadd.f32 %v2864, %v2888
          %v2891 = vmul.f32 %v2889, 0.5
          %v2892 = vmul.f32 %v2890, 0.5
          %v2895 = vcombine.high %v2891, %v2891
          %v2897 = vunpack.c.l.s4 1983009808
          %v2898 = vunpack.c.0.s8 %v2897
          %v2899 = vlaneseq
          %v2900 = vshrl.u32 %v2899, 7
          %v2901 = vsub.s32 %v2898, %v2900
          %v2902 = vrot.slane %v2891, %v2901
          %v2904 = vunpack.c.l.s4 1983009808
          %v2905 = vunpack.c.0.s8 %v2904
          %v2906 = vlaneseq
          %v2907 = vshrl.u32 %v2906, 7
          %v2908 = vsub.s32 %v2905, %v2907
          %v2909 = vrot.slane %v2895, %v2908
          %v2910 = vcombine.high %v2902, %v2902
          %v2911 = vcombine.high %v2909, %v2909
          %v2913 = vunpack.c.l.s4 1983009808
          %v2914 = vunpack.c.0.s8 %v2913
          %v2915 = vlaneseq
          %v2916 = vshrl.u32 %v2915, 7
          %v2917 = vsub.s32 %v2914, %v2916
          %v2918 = vrot.slane %v2892, %v2917
          %v2919 = vcombine.high %v2918, %v2918
          %v2926 = vpack.c.bf16 %v2902, %v2902
          %v2927 = vpack.c.bf16 %v2910, %v2910
          %v2928 = vpack.c.bf16 %v2909, %v2909
          %v2929 = vpack.c.bf16 %v2911, %v2911
          %v2930 = vpack.c.bf16 %v2918, %v2918
          %v2931 = vpack.c.bf16 %v2919, %v2919
          %s2932 = scalar_lea.vmem %s257, 1536 [#allocation7]
          %v2933 = vld [vmem:[%s2932] sm:$0xff]
          %v2934 = vld [vmem:[%s2932 + $0x8] sm:$0xff]
          %v2935 = vld [vmem:[%s2932 + $0x10] sm:$0xff]
          %v2936 = vld [vmem:[%s2932 + $0x18] sm:$0xff]
          %v2937 = vld [vmem:[%s2932 + $0x20] sm:$0xff]
          %v2938 = vld [vmem:[%s2932 + $0x28] sm:$0xff]
          %v2939 = vld [vmem:[%s2932 + $0x30] sm:$0xff]
          %v2940 = vld [vmem:[%s2932 + $0x38] sm:$0xff]
          %v2941 = vld [vmem:[%s2932 + $0x40] sm:$0xff]
          %v2942 = vld [vmem:[%s2932 + $0x48] sm:$0xff]
          %v2943 = vld [vmem:[%s2932 + $0x50] sm:$0xff]
          %v2944 = vld [vmem:[%s2932 + $0x58] sm:$0xff]
          %v2945 = vld [vmem:[%s2932 + $0x60] sm:$0xff]
          %v2946 = vld [vmem:[%s2932 + $0x68] sm:$0xff]
          %v2947 = vld [vmem:[%s2932 + $0x70] sm:$0xff]
          %v2948 = vld [vmem:[%s2932 + $0x78] sm:$0xff]
          %v2949 = vld [vmem:[%s2932 + $0x80] sm:$0xff]
          %v2950 = vld [vmem:[%s2932 + $0x88] sm:$0xff]
          %v2951 = vld [vmem:[%s2932 + $0x90] sm:$0xff]
          %v2952 = vld [vmem:[%s2932 + $0x98] sm:$0xff]
          %v2953 = vld [vmem:[%s2932 + $0xa0] sm:$0xff]
          %v2954 = vld [vmem:[%s2932 + $0xa8] sm:$0xff]
          %v2955 = vld [vmem:[%s2932 + $0xb0] sm:$0xff]
          %v2956 = vld [vmem:[%s2932 + $0xb8] sm:$0xff]
          %v2957 = vld [vmem:[%s2932 + $0xc0] sm:$0xff]
          %v2958 = vld [vmem:[%s2932 + $0xc8] sm:$0xff]
          %v2959 = vld [vmem:[%s2932 + $0xd0] sm:$0xff]
          %v2960 = vld [vmem:[%s2932 + $0xd8] sm:$0xff]
          %v2961 = vld [vmem:[%s2932 + $0xe0] sm:$0xff]
          %v2962 = vld [vmem:[%s2932 + $0xe8] sm:$0xff]
          %v2963 = vld [vmem:[%s2932 + $0xf0] sm:$0xff]
          %v2964 = vld [vmem:[%s2932 + $0xf8] sm:$0xff]
          %v2965 = vld [vmem:[%s2932 + $0x100] sm:$0xff]
          %v2966 = vld [vmem:[%s2932 + $0x108] sm:$0xff]
          %v2967 = vld [vmem:[%s2932 + $0x110] sm:$0xff]
          %v2968 = vld [vmem:[%s2932 + $0x118] sm:$0xff]
          %v2969 = vld [vmem:[%s2932 + $0x120] sm:$0xff]
          %v2970 = vld [vmem:[%s2932 + $0x128] sm:$0xff]
          %v2971 = vld [vmem:[%s2932 + $0x130] sm:$0xff]
          %v2972 = vld [vmem:[%s2932 + $0x138] sm:$0xff]
          %v2973 = vld [vmem:[%s2932 + $0x140] sm:$0xff]
          %v2974 = vld [vmem:[%s2932 + $0x148] sm:$0xff]
          %v2975 = vld [vmem:[%s2932 + $0x150] sm:$0xff]
          %v2976 = vld [vmem:[%s2932 + $0x158] sm:$0xff]
          %v2977 = vld [vmem:[%s2932 + $0x160] sm:$0xff]
          %v2978 = vld [vmem:[%s2932 + $0x168] sm:$0xff]
          %v2979 = vld [vmem:[%s2932 + $0x170] sm:$0xff]
          %v2980 = vld [vmem:[%s2932 + $0x178] sm:$0xff]
          %v2981 = vld [vmem:[%s2932 + $0x180] sm:$0xff]
          %v2982 = vld [vmem:[%s2932 + $0x188] sm:$0xff]
          %v2983 = vld [vmem:[%s2932 + $0x190] sm:$0xff]
          %v2984 = vld [vmem:[%s2932 + $0x198] sm:$0xff]
          %v2985 = vld [vmem:[%s2932 + $0x1a0] sm:$0xff]
          %v2986 = vld [vmem:[%s2932 + $0x1a8] sm:$0xff]
          %v2987 = vld [vmem:[%s2932 + $0x1b0] sm:$0xff]
          %v2988 = vld [vmem:[%s2932 + $0x1b8] sm:$0xff]
          %v2989 = vld [vmem:[%s2932 + $0x1c0] sm:$0xff]
          %v2990 = vld [vmem:[%s2932 + $0x1c8] sm:$0xff]
          %v2991 = vld [vmem:[%s2932 + $0x1d0] sm:$0xff]
          %v2992 = vld [vmem:[%s2932 + $0x1d8] sm:$0xff]
          %v2993 = vld [vmem:[%s2932 + $0x1e0] sm:$0xff]
          %v2994 = vld [vmem:[%s2932 + $0x1e8] sm:$0xff]
          %v2995 = vld [vmem:[%s2932 + $0x1f0] sm:$0xff]
          %v2996 = vld [vmem:[%s2932 + $0x1f8] sm:$0xff]
          %v2997 = vld [vmem:[%s2932 + $0x200] sm:$0xff]
          %v2998 = vld [vmem:[%s2932 + $0x208] sm:$0xff]
          %v2999 = vld [vmem:[%s2932 + $0x210] sm:$0xff]
          %v3000 = vld [vmem:[%s2932 + $0x218] sm:$0xff]
          %v3001 = vld [vmem:[%s2932 + $0x220] sm:$0xff]
          %v3002 = vld [vmem:[%s2932 + $0x228] sm:$0xff]
          %v3003 = vld [vmem:[%s2932 + $0x230] sm:$0xff]
          %v3004 = vld [vmem:[%s2932 + $0x238] sm:$0xff]
          %v3005 = vld [vmem:[%s2932 + $0x240] sm:$0xff]
          %v3006 = vld [vmem:[%s2932 + $0x248] sm:$0xff]
          %v3007 = vld [vmem:[%s2932 + $0x250] sm:$0xff]
          %v3008 = vld [vmem:[%s2932 + $0x258] sm:$0xff]
          %v3009 = vld [vmem:[%s2932 + $0x260] sm:$0xff]
          %v3010 = vld [vmem:[%s2932 + $0x268] sm:$0xff]
          %v3011 = vld [vmem:[%s2932 + $0x270] sm:$0xff]
          %v3012 = vld [vmem:[%s2932 + $0x278] sm:$0xff]
          %v3013 = vld [vmem:[%s2932 + $0x280] sm:$0xff]
          %v3014 = vld [vmem:[%s2932 + $0x288] sm:$0xff]
          %v3015 = vld [vmem:[%s2932 + $0x290] sm:$0xff]
          %v3016 = vld [vmem:[%s2932 + $0x298] sm:$0xff]
          %v3017 = vld [vmem:[%s2932 + $0x2a0] sm:$0xff]
          %v3018 = vld [vmem:[%s2932 + $0x2a8] sm:$0xff]
          %v3019 = vld [vmem:[%s2932 + $0x2b0] sm:$0xff]
          %v3020 = vld [vmem:[%s2932 + $0x2b8] sm:$0xff]
          %v3021 = vld [vmem:[%s2932 + $0x2c0] sm:$0xff]
          %v3022 = vld [vmem:[%s2932 + $0x2c8] sm:$0xff]
          %v3023 = vld [vmem:[%s2932 + $0x2d0] sm:$0xff]
          %v3024 = vld [vmem:[%s2932 + $0x2d8] sm:$0xff]
          %v3025 = vld [vmem:[%s2932 + $0x2e0] sm:$0xff]
          %v3026 = vld [vmem:[%s2932 + $0x2e8] sm:$0xff]
          %v3027 = vld [vmem:[%s2932 + $0x2f0] sm:$0xff]
          %v3028 = vld [vmem:[%s2932 + $0x2f8] sm:$0xff]
          %v3029 = vld [vmem:[%s2932 + $0x300] sm:$0xff]
          %v3030 = vld [vmem:[%s2932 + $0x308] sm:$0xff]
          %v3031 = vld [vmem:[%s2932 + $0x310] sm:$0xff]
          %v3032 = vld [vmem:[%s2932 + $0x318] sm:$0xff]
          %v3033 = vld [vmem:[%s2932 + $0x320] sm:$0xff]
          %v3034 = vld [vmem:[%s2932 + $0x328] sm:$0xff]
          %v3035 = vld [vmem:[%s2932 + $0x330] sm:$0xff]
          %v3036 = vld [vmem:[%s2932 + $0x338] sm:$0xff]
          %v3037 = vld [vmem:[%s2932 + $0x340] sm:$0xff]
          %v3038 = vld [vmem:[%s2932 + $0x348] sm:$0xff]
          %v3039 = vld [vmem:[%s2932 + $0x350] sm:$0xff]
          %v3040 = vld [vmem:[%s2932 + $0x358] sm:$0xff]
          %v3041 = vld [vmem:[%s2932 + $0x360] sm:$0xff]
          %v3042 = vld [vmem:[%s2932 + $0x368] sm:$0xff]
          %v3043 = vld [vmem:[%s2932 + $0x370] sm:$0xff]
          %v3044 = vld [vmem:[%s2932 + $0x378] sm:$0xff]
          %v3045 = vld [vmem:[%s2932 + $0x380] sm:$0xff]
          %v3046 = vld [vmem:[%s2932 + $0x388] sm:$0xff]
          %v3047 = vld [vmem:[%s2932 + $0x390] sm:$0xff]
          %v3048 = vld [vmem:[%s2932 + $0x398] sm:$0xff]
          %v3049 = vld [vmem:[%s2932 + $0x3a0] sm:$0xff]
          %v3050 = vld [vmem:[%s2932 + $0x3a8] sm:$0xff]
          %v3051 = vld [vmem:[%s2932 + $0x3b0] sm:$0xff]
          %v3052 = vld [vmem:[%s2932 + $0x3b8] sm:$0xff]
          %v3053 = vld [vmem:[%s2932 + $0x3c0] sm:$0xff]
          %v3054 = vld [vmem:[%s2932 + $0x3c8] sm:$0xff]
          %v3055 = vld [vmem:[%s2932 + $0x3d0] sm:$0xff]
          %v3056 = vld [vmem:[%s2932 + $0x3d8] sm:$0xff]
          %v3057 = vld [vmem:[%s2932 + $0x3e0] sm:$0xff]
          %v3058 = vld [vmem:[%s2932 + $0x3e8] sm:$0xff]
          %v3059 = vld [vmem:[%s2932 + $0x3f0] sm:$0xff]
          %v3060 = vld [vmem:[%s2932 + $0x3f8] sm:$0xff]
          %v3061 = vld [vmem:[%s2932 + $0x400] sm:$0xff]
          %v3062 = vld [vmem:[%s2932 + $0x408] sm:$0xff]
          %v3063 = vld [vmem:[%s2932 + $0x410] sm:$0xff]
          %v3064 = vld [vmem:[%s2932 + $0x418] sm:$0xff]
          %v3065 = vld [vmem:[%s2932 + $0x420] sm:$0xff]
          %v3066 = vld [vmem:[%s2932 + $0x428] sm:$0xff]
          %v3067 = vld [vmem:[%s2932 + $0x430] sm:$0xff]
          %v3068 = vld [vmem:[%s2932 + $0x438] sm:$0xff]
          %v3069 = vld [vmem:[%s2932 + $0x440] sm:$0xff]
          %v3070 = vld [vmem:[%s2932 + $0x448] sm:$0xff]
          %v3071 = vld [vmem:[%s2932 + $0x450] sm:$0xff]
          %v3072 = vld [vmem:[%s2932 + $0x458] sm:$0xff]
          %v3073 = vld [vmem:[%s2932 + $0x460] sm:$0xff]
          %v3074 = vld [vmem:[%s2932 + $0x468] sm:$0xff]
          %v3075 = vld [vmem:[%s2932 + $0x470] sm:$0xff]
          %v3076 = vld [vmem:[%s2932 + $0x478] sm:$0xff]
          %v3077 = vld [vmem:[%s2932 + $0x480] sm:$0xff]
          %v3078 = vld [vmem:[%s2932 + $0x488] sm:$0xff]
          %v3079 = vld [vmem:[%s2932 + $0x490] sm:$0xff]
          %v3080 = vld [vmem:[%s2932 + $0x498] sm:$0xff]
          %v3081 = vld [vmem:[%s2932 + $0x4a0] sm:$0xff]
          %v3082 = vld [vmem:[%s2932 + $0x4a8] sm:$0xff]
          %v3083 = vld [vmem:[%s2932 + $0x4b0] sm:$0xff]
          %v3084 = vld [vmem:[%s2932 + $0x4b8] sm:$0xff]
          %v3085 = vld [vmem:[%s2932 + $0x4c0] sm:$0xff]
          %v3086 = vld [vmem:[%s2932 + $0x4c8] sm:$0xff]
          %v3087 = vld [vmem:[%s2932 + $0x4d0] sm:$0xff]
          %v3088 = vld [vmem:[%s2932 + $0x4d8] sm:$0xff]
          %v3089 = vld [vmem:[%s2932 + $0x4e0] sm:$0xff]
          %v3090 = vld [vmem:[%s2932 + $0x4e8] sm:$0xff]
          %v3091 = vld [vmem:[%s2932 + $0x4f0] sm:$0xff]
          %v3092 = vld [vmem:[%s2932 + $0x4f8] sm:$0xff]
          %v3093 = vld [vmem:[%s2932 + $0x500] sm:$0xff]
          %v3094 = vld [vmem:[%s2932 + $0x508] sm:$0xff]
          %v3095 = vld [vmem:[%s2932 + $0x510] sm:$0xff]
          %v3096 = vld [vmem:[%s2932 + $0x518] sm:$0xff]
          %v3097 = vld [vmem:[%s2932 + $0x520] sm:$0xff]
          %v3098 = vld [vmem:[%s2932 + $0x528] sm:$0xff]
          %v3099 = vld [vmem:[%s2932 + $0x530] sm:$0xff]
          %v3100 = vld [vmem:[%s2932 + $0x538] sm:$0xff]
          %v3101 = vld [vmem:[%s2932 + $0x540] sm:$0xff]
          %v3102 = vld [vmem:[%s2932 + $0x548] sm:$0xff]
          %v3103 = vld [vmem:[%s2932 + $0x550] sm:$0xff]
          %v3104 = vld [vmem:[%s2932 + $0x558] sm:$0xff]
          %v3105 = vld [vmem:[%s2932 + $0x560] sm:$0xff]
          %v3106 = vld [vmem:[%s2932 + $0x568] sm:$0xff]
          %v3107 = vld [vmem:[%s2932 + $0x570] sm:$0xff]
          %v3108 = vld [vmem:[%s2932 + $0x578] sm:$0xff]
          %v3109 = vld [vmem:[%s2932 + $0x580] sm:$0xff]
          %v3110 = vld [vmem:[%s2932 + $0x588] sm:$0xff]
          %v3111 = vld [vmem:[%s2932 + $0x590] sm:$0xff]
          %v3112 = vld [vmem:[%s2932 + $0x598] sm:$0xff]
          %v3113 = vld [vmem:[%s2932 + $0x5a0] sm:$0xff]
          %v3114 = vld [vmem:[%s2932 + $0x5a8] sm:$0xff]
          %v3115 = vld [vmem:[%s2932 + $0x5b0] sm:$0xff]
          %v3116 = vld [vmem:[%s2932 + $0x5b8] sm:$0xff]
          %v3117 = vld [vmem:[%s2932 + $0x5c0] sm:$0xff]
          %v3118 = vld [vmem:[%s2932 + $0x5c8] sm:$0xff]
          %v3119 = vld [vmem:[%s2932 + $0x5d0] sm:$0xff]
          %v3120 = vld [vmem:[%s2932 + $0x5d8] sm:$0xff]
          %v3121 = vld [vmem:[%s2932 + $0x5e0] sm:$0xff]
          %v3122 = vld [vmem:[%s2932 + $0x5e8] sm:$0xff]
          %v3123 = vld [vmem:[%s2932 + $0x5f0] sm:$0xff]
          %v3124 = vld [vmem:[%s2932 + $0x5f8] sm:$0xff]
          %s3125 = scalar_lea.vmem %s266, 4 [#allocation9]
          %v3126 = vld [vmem:[%s3125] sm:$0xf]
          %v3128 = vlaneseq
          %v3129 = vshrl.u32 %v3128, 7
          %v3130 = vsub.s32 0, %v3129
          %v3131 = vrot.slane %v3126, %v3130
          %v3132 = vlaneseq
          %v3133 = vshrl.u32 %v3132, 7
          %v3134 = vsub.s32 1, %v3133
          %v3135 = vrot.slane %v3126, %v3134
          %v3136 = vlaneseq
          %v3137 = vshrl.u32 %v3136, 7
          %v3138 = vsub.s32 2, %v3137
          %v3139 = vrot.slane %v3126, %v3138
          %v3140 = vlaneseq
          %v3141 = vshrl.u32 %v3140, 7
          %v3142 = vsub.s32 3, %v3141
          %v3143 = vrot.slane %v3126, %v3142
          %v3340 = vunpack.c.l.b16 %v2933
          %v3341 = vunpack.c.h.b16 %v2933
          %v3342 = vunpack.c.l.b16 %v2934
          %v3343 = vunpack.c.h.b16 %v2934
          %v3344 = vunpack.c.l.b16 %v2935
          %v3345 = vunpack.c.h.b16 %v2935
          %v3346 = vunpack.c.l.b16 %v2936
          %v3347 = vunpack.c.h.b16 %v2936
          %v3348 = vunpack.c.l.b16 %v2937
          %v3349 = vunpack.c.h.b16 %v2937
          %v3350 = vunpack.c.l.b16 %v2938
          %v3351 = vunpack.c.h.b16 %v2938
          %v3352 = vunpack.c.l.b16 %v2939
          %v3353 = vunpack.c.h.b16 %v2939
          %v3354 = vunpack.c.l.b16 %v2940
          %v3355 = vunpack.c.h.b16 %v2940
          %v3356 = vunpack.c.l.b16 %v2941
          %v3357 = vunpack.c.h.b16 %v2941
          %v3358 = vunpack.c.l.b16 %v2942
          %v3359 = vunpack.c.h.b16 %v2942
          %v3360 = vunpack.c.l.b16 %v2943
          %v3361 = vunpack.c.h.b16 %v2943
          %v3362 = vunpack.c.l.b16 %v2944
          %v3363 = vunpack.c.h.b16 %v2944
          %v3364 = vunpack.c.l.b16 %v2945
          %v3365 = vunpack.c.h.b16 %v2945
          %v3366 = vunpack.c.l.b16 %v2946
          %v3367 = vunpack.c.h.b16 %v2946
          %v3368 = vunpack.c.l.b16 %v2947
          %v3369 = vunpack.c.h.b16 %v2947
          %v3370 = vunpack.c.l.b16 %v2948
          %v3371 = vunpack.c.h.b16 %v2948
          %v3372 = vunpack.c.l.b16 %v2949
          %v3373 = vunpack.c.h.b16 %v2949
          %v3374 = vunpack.c.l.b16 %v2950
          %v3375 = vunpack.c.h.b16 %v2950
          %v3376 = vunpack.c.l.b16 %v2951
          %v3377 = vunpack.c.h.b16 %v2951
          %v3378 = vunpack.c.l.b16 %v2952
          %v3379 = vunpack.c.h.b16 %v2952
          %v3380 = vunpack.c.l.b16 %v2953
          %v3381 = vunpack.c.h.b16 %v2953
          %v3382 = vunpack.c.l.b16 %v2954
          %v3383 = vunpack.c.h.b16 %v2954
          %v3384 = vunpack.c.l.b16 %v2955
          %v3385 = vunpack.c.h.b16 %v2955
          %v3386 = vunpack.c.l.b16 %v2956
          %v3387 = vunpack.c.h.b16 %v2956
          %v3388 = vunpack.c.l.b16 %v2957
          %v3389 = vunpack.c.h.b16 %v2957
          %v3390 = vunpack.c.l.b16 %v2958
          %v3391 = vunpack.c.h.b16 %v2958
          %v3392 = vunpack.c.l.b16 %v2959
          %v3393 = vunpack.c.h.b16 %v2959
          %v3394 = vunpack.c.l.b16 %v2960
          %v3395 = vunpack.c.h.b16 %v2960
          %v3396 = vunpack.c.l.b16 %v2961
          %v3397 = vunpack.c.h.b16 %v2961
          %v3398 = vunpack.c.l.b16 %v2962
          %v3399 = vunpack.c.h.b16 %v2962
          %v3400 = vunpack.c.l.b16 %v2963
          %v3401 = vunpack.c.h.b16 %v2963
          %v3402 = vunpack.c.l.b16 %v2964
          %v3403 = vunpack.c.h.b16 %v2964
          %v3404 = vunpack.c.l.b16 %v2965
          %v3405 = vunpack.c.h.b16 %v2965
          %v3406 = vunpack.c.l.b16 %v2966
          %v3407 = vunpack.c.h.b16 %v2966
          %v3408 = vunpack.c.l.b16 %v2967
          %v3409 = vunpack.c.h.b16 %v2967
          %v3410 = vunpack.c.l.b16 %v2968
          %v3411 = vunpack.c.h.b16 %v2968
          %v3412 = vunpack.c.l.b16 %v2969
          %v3413 = vunpack.c.h.b16 %v2969
          %v3414 = vunpack.c.l.b16 %v2970
          %v3415 = vunpack.c.h.b16 %v2970
          %v3416 = vunpack.c.l.b16 %v2971
          %v3417 = vunpack.c.h.b16 %v2971
          %v3418 = vunpack.c.l.b16 %v2972
          %v3419 = vunpack.c.h.b16 %v2972
          %v3420 = vunpack.c.l.b16 %v2973
          %v3421 = vunpack.c.h.b16 %v2973
          %v3422 = vunpack.c.l.b16 %v2974
          %v3423 = vunpack.c.h.b16 %v2974
          %v3424 = vunpack.c.l.b16 %v2975
          %v3425 = vunpack.c.h.b16 %v2975
          %v3426 = vunpack.c.l.b16 %v2976
          %v3427 = vunpack.c.h.b16 %v2976
          %v3428 = vunpack.c.l.b16 %v2977
          %v3429 = vunpack.c.h.b16 %v2977
          %v3430 = vunpack.c.l.b16 %v2978
          %v3431 = vunpack.c.h.b16 %v2978
          %v3432 = vunpack.c.l.b16 %v2979
          %v3433 = vunpack.c.h.b16 %v2979
          %v3434 = vunpack.c.l.b16 %v2980
          %v3435 = vunpack.c.h.b16 %v2980
          %v3436 = vunpack.c.l.b16 %v2981
          %v3437 = vunpack.c.h.b16 %v2981
          %v3438 = vunpack.c.l.b16 %v2982
          %v3439 = vunpack.c.h.b16 %v2982
          %v3440 = vunpack.c.l.b16 %v2983
          %v3441 = vunpack.c.h.b16 %v2983
          %v3442 = vunpack.c.l.b16 %v2984
          %v3443 = vunpack.c.h.b16 %v2984
          %v3444 = vunpack.c.l.b16 %v2985
          %v3445 = vunpack.c.h.b16 %v2985
          %v3446 = vunpack.c.l.b16 %v2986
          %v3447 = vunpack.c.h.b16 %v2986
          %v3448 = vunpack.c.l.b16 %v2987
          %v3449 = vunpack.c.h.b16 %v2987
          %v3450 = vunpack.c.l.b16 %v2988
          %v3451 = vunpack.c.h.b16 %v2988
          %v3452 = vunpack.c.l.b16 %v2989
          %v3453 = vunpack.c.h.b16 %v2989
          %v3454 = vunpack.c.l.b16 %v2990
          %v3455 = vunpack.c.h.b16 %v2990
          %v3456 = vunpack.c.l.b16 %v2991
          %v3457 = vunpack.c.h.b16 %v2991
          %v3458 = vunpack.c.l.b16 %v2992
          %v3459 = vunpack.c.h.b16 %v2992
          %v3460 = vunpack.c.l.b16 %v2993
          %v3461 = vunpack.c.h.b16 %v2993
          %v3462 = vunpack.c.l.b16 %v2994
          %v3463 = vunpack.c.h.b16 %v2994
          %v3464 = vunpack.c.l.b16 %v2995
          %v3465 = vunpack.c.h.b16 %v2995
          %v3466 = vunpack.c.l.b16 %v2996
          %v3467 = vunpack.c.h.b16 %v2996
          %v3468 = vunpack.c.l.b16 %v2997
          %v3469 = vunpack.c.h.b16 %v2997
          %v3470 = vunpack.c.l.b16 %v2998
          %v3471 = vunpack.c.h.b16 %v2998
          %v3472 = vunpack.c.l.b16 %v2999
          %v3473 = vunpack.c.h.b16 %v2999
          %v3474 = vunpack.c.l.b16 %v3000
          %v3475 = vunpack.c.h.b16 %v3000
          %v3476 = vunpack.c.l.b16 %v3001
          %v3477 = vunpack.c.h.b16 %v3001
          %v3478 = vunpack.c.l.b16 %v3002
          %v3479 = vunpack.c.h.b16 %v3002
          %v3480 = vunpack.c.l.b16 %v3003
          %v3481 = vunpack.c.h.b16 %v3003
          %v3482 = vunpack.c.l.b16 %v3004
          %v3483 = vunpack.c.h.b16 %v3004
          %v3484 = vunpack.c.l.b16 %v3005
          %v3485 = vunpack.c.h.b16 %v3005
          %v3486 = vunpack.c.l.b16 %v3006
          %v3487 = vunpack.c.h.b16 %v3006
          %v3488 = vunpack.c.l.b16 %v3007
          %v3489 = vunpack.c.h.b16 %v3007
          %v3490 = vunpack.c.l.b16 %v3008
          %v3491 = vunpack.c.h.b16 %v3008
          %v3492 = vunpack.c.l.b16 %v3009
          %v3493 = vunpack.c.h.b16 %v3009
          %v3494 = vunpack.c.l.b16 %v3010
          %v3495 = vunpack.c.h.b16 %v3010
          %v3496 = vunpack.c.l.b16 %v3011
          %v3497 = vunpack.c.h.b16 %v3011
          %v3498 = vunpack.c.l.b16 %v3012
          %v3499 = vunpack.c.h.b16 %v3012
          %v3500 = vunpack.c.l.b16 %v3013
          %v3501 = vunpack.c.h.b16 %v3013
          %v3502 = vunpack.c.l.b16 %v3014
          %v3503 = vunpack.c.h.b16 %v3014
          %v3504 = vunpack.c.l.b16 %v3015
          %v3505 = vunpack.c.h.b16 %v3015
          %v3506 = vunpack.c.l.b16 %v3016
          %v3507 = vunpack.c.h.b16 %v3016
          %v3508 = vunpack.c.l.b16 %v3017
          %v3509 = vunpack.c.h.b16 %v3017
          %v3510 = vunpack.c.l.b16 %v3018
          %v3511 = vunpack.c.h.b16 %v3018
          %v3512 = vunpack.c.l.b16 %v3019
          %v3513 = vunpack.c.h.b16 %v3019
          %v3514 = vunpack.c.l.b16 %v3020
          %v3515 = vunpack.c.h.b16 %v3020
          %v3516 = vunpack.c.l.b16 %v3021
          %v3517 = vunpack.c.h.b16 %v3021
          %v3518 = vunpack.c.l.b16 %v3022
          %v3519 = vunpack.c.h.b16 %v3022
          %v3520 = vunpack.c.l.b16 %v3023
          %v3521 = vunpack.c.h.b16 %v3023
          %v3522 = vunpack.c.l.b16 %v3024
          %v3523 = vunpack.c.h.b16 %v3024
          %v3524 = vunpack.c.l.b16 %v3025
          %v3525 = vunpack.c.h.b16 %v3025
          %v3526 = vunpack.c.l.b16 %v3026
          %v3527 = vunpack.c.h.b16 %v3026
          %v3528 = vunpack.c.l.b16 %v3027
          %v3529 = vunpack.c.h.b16 %v3027
          %v3530 = vunpack.c.l.b16 %v3028
          %v3531 = vunpack.c.h.b16 %v3028
          %v3532 = vunpack.c.l.b16 %v3029
          %v3533 = vunpack.c.h.b16 %v3029
          %v3534 = vunpack.c.l.b16 %v3030
          %v3535 = vunpack.c.h.b16 %v3030
          %v3536 = vunpack.c.l.b16 %v3031
          %v3537 = vunpack.c.h.b16 %v3031
          %v3538 = vunpack.c.l.b16 %v3032
          %v3539 = vunpack.c.h.b16 %v3032
          %v3540 = vunpack.c.l.b16 %v3033
          %v3541 = vunpack.c.h.b16 %v3033
          %v3542 = vunpack.c.l.b16 %v3034
          %v3543 = vunpack.c.h.b16 %v3034
          %v3544 = vunpack.c.l.b16 %v3035
          %v3545 = vunpack.c.h.b16 %v3035
          %v3546 = vunpack.c.l.b16 %v3036
          %v3547 = vunpack.c.h.b16 %v3036
          %v3548 = vunpack.c.l.b16 %v3037
          %v3549 = vunpack.c.h.b16 %v3037
          %v3550 = vunpack.c.l.b16 %v3038
          %v3551 = vunpack.c.h.b16 %v3038
          %v3552 = vunpack.c.l.b16 %v3039
          %v3553 = vunpack.c.h.b16 %v3039
          %v3554 = vunpack.c.l.b16 %v3040
          %v3555 = vunpack.c.h.b16 %v3040
          %v3556 = vunpack.c.l.b16 %v3041
          %v3557 = vunpack.c.h.b16 %v3041
          %v3558 = vunpack.c.l.b16 %v3042
          %v3559 = vunpack.c.h.b16 %v3042
          %v3560 = vunpack.c.l.b16 %v3043
          %v3561 = vunpack.c.h.b16 %v3043
          %v3562 = vunpack.c.l.b16 %v3044
          %v3563 = vunpack.c.h.b16 %v3044
          %v3564 = vunpack.c.l.b16 %v3045
          %v3565 = vunpack.c.h.b16 %v3045
          %v3566 = vunpack.c.l.b16 %v3046
          %v3567 = vunpack.c.h.b16 %v3046
          %v3568 = vunpack.c.l.b16 %v3047
          %v3569 = vunpack.c.h.b16 %v3047
          %v3570 = vunpack.c.l.b16 %v3048
          %v3571 = vunpack.c.h.b16 %v3048
          %v3572 = vunpack.c.l.b16 %v3049
          %v3573 = vunpack.c.h.b16 %v3049
          %v3574 = vunpack.c.l.b16 %v3050
          %v3575 = vunpack.c.h.b16 %v3050
          %v3576 = vunpack.c.l.b16 %v3051
          %v3577 = vunpack.c.h.b16 %v3051
          %v3578 = vunpack.c.l.b16 %v3052
          %v3579 = vunpack.c.h.b16 %v3052
          %v3580 = vunpack.c.l.b16 %v3053
          %v3581 = vunpack.c.h.b16 %v3053
          %v3582 = vunpack.c.l.b16 %v3054
          %v3583 = vunpack.c.h.b16 %v3054
          %v3584 = vunpack.c.l.b16 %v3055
          %v3585 = vunpack.c.h.b16 %v3055
          %v3586 = vunpack.c.l.b16 %v3056
          %v3587 = vunpack.c.h.b16 %v3056
          %v3588 = vunpack.c.l.b16 %v3057
          %v3589 = vunpack.c.h.b16 %v3057
          %v3590 = vunpack.c.l.b16 %v3058
          %v3591 = vunpack.c.h.b16 %v3058
          %v3592 = vunpack.c.l.b16 %v3059
          %v3593 = vunpack.c.h.b16 %v3059
          %v3594 = vunpack.c.l.b16 %v3060
          %v3595 = vunpack.c.h.b16 %v3060
          %v3596 = vunpack.c.l.b16 %v3061
          %v3597 = vunpack.c.h.b16 %v3061
          %v3598 = vunpack.c.l.b16 %v3062
          %v3599 = vunpack.c.h.b16 %v3062
          %v3600 = vunpack.c.l.b16 %v3063
          %v3601 = vunpack.c.h.b16 %v3063
          %v3602 = vunpack.c.l.b16 %v3064
          %v3603 = vunpack.c.h.b16 %v3064
          %v3604 = vunpack.c.l.b16 %v3065
          %v3605 = vunpack.c.h.b16 %v3065
          %v3606 = vunpack.c.l.b16 %v3066
          %v3607 = vunpack.c.h.b16 %v3066
          %v3608 = vunpack.c.l.b16 %v3067
          %v3609 = vunpack.c.h.b16 %v3067
          %v3610 = vunpack.c.l.b16 %v3068
          %v3611 = vunpack.c.h.b16 %v3068
          %v3612 = vunpack.c.l.b16 %v3069
          %v3613 = vunpack.c.h.b16 %v3069
          %v3614 = vunpack.c.l.b16 %v3070
          %v3615 = vunpack.c.h.b16 %v3070
          %v3616 = vunpack.c.l.b16 %v3071
          %v3617 = vunpack.c.h.b16 %v3071
          %v3618 = vunpack.c.l.b16 %v3072
          %v3619 = vunpack.c.h.b16 %v3072
          %v3620 = vunpack.c.l.b16 %v3073
          %v3621 = vunpack.c.h.b16 %v3073
          %v3622 = vunpack.c.l.b16 %v3074
          %v3623 = vunpack.c.h.b16 %v3074
          %v3624 = vunpack.c.l.b16 %v3075
          %v3625 = vunpack.c.h.b16 %v3075
          %v3626 = vunpack.c.l.b16 %v3076
          %v3627 = vunpack.c.h.b16 %v3076
          %v3628 = vunpack.c.l.b16 %v3077
          %v3629 = vunpack.c.h.b16 %v3077
          %v3630 = vunpack.c.l.b16 %v3078
          %v3631 = vunpack.c.h.b16 %v3078
          %v3632 = vunpack.c.l.b16 %v3079
          %v3633 = vunpack.c.h.b16 %v3079
          %v3634 = vunpack.c.l.b16 %v3080
          %v3635 = vunpack.c.h.b16 %v3080
          %v3636 = vunpack.c.l.b16 %v3081
          %v3637 = vunpack.c.h.b16 %v3081
          %v3638 = vunpack.c.l.b16 %v3082
          %v3639 = vunpack.c.h.b16 %v3082
          %v3640 = vunpack.c.l.b16 %v3083
          %v3641 = vunpack.c.h.b16 %v3083
          %v3642 = vunpack.c.l.b16 %v3084
          %v3643 = vunpack.c.h.b16 %v3084
          %v3644 = vunpack.c.l.b16 %v3085
          %v3645 = vunpack.c.h.b16 %v3085
          %v3646 = vunpack.c.l.b16 %v3086
          %v3647 = vunpack.c.h.b16 %v3086
          %v3648 = vunpack.c.l.b16 %v3087
          %v3649 = vunpack.c.h.b16 %v3087
          %v3650 = vunpack.c.l.b16 %v3088
          %v3651 = vunpack.c.h.b16 %v3088
          %v3652 = vunpack.c.l.b16 %v3089
          %v3653 = vunpack.c.h.b16 %v3089
          %v3654 = vunpack.c.l.b16 %v3090
          %v3655 = vunpack.c.h.b16 %v3090
          %v3656 = vunpack.c.l.b16 %v3091
          %v3657 = vunpack.c.h.b16 %v3091
          %v3658 = vunpack.c.l.b16 %v3092
          %v3659 = vunpack.c.h.b16 %v3092
          %v3660 = vunpack.c.l.b16 %v3093
          %v3661 = vunpack.c.h.b16 %v3093
          %v3662 = vunpack.c.l.b16 %v3094
          %v3663 = vunpack.c.h.b16 %v3094
          %v3664 = vunpack.c.l.b16 %v3095
          %v3665 = vunpack.c.h.b16 %v3095
          %v3666 = vunpack.c.l.b16 %v3096
          %v3667 = vunpack.c.h.b16 %v3096
          %v3668 = vunpack.c.l.b16 %v3097
          %v3669 = vunpack.c.h.b16 %v3097
          %v3670 = vunpack.c.l.b16 %v3098
          %v3671 = vunpack.c.h.b16 %v3098
          %v3672 = vunpack.c.l.b16 %v3099
          %v3673 = vunpack.c.h.b16 %v3099
          %v3674 = vunpack.c.l.b16 %v3100
          %v3675 = vunpack.c.h.b16 %v3100
          %v3676 = vunpack.c.l.b16 %v3101
          %v3677 = vunpack.c.h.b16 %v3101
          %v3678 = vunpack.c.l.b16 %v3102
          %v3679 = vunpack.c.h.b16 %v3102
          %v3680 = vunpack.c.l.b16 %v3103
          %v3681 = vunpack.c.h.b16 %v3103
          %v3682 = vunpack.c.l.b16 %v3104
          %v3683 = vunpack.c.h.b16 %v3104
          %v3684 = vunpack.c.l.b16 %v3105
          %v3685 = vunpack.c.h.b16 %v3105
          %v3686 = vunpack.c.l.b16 %v3106
          %v3687 = vunpack.c.h.b16 %v3106
          %v3688 = vunpack.c.l.b16 %v3107
          %v3689 = vunpack.c.h.b16 %v3107
          %v3690 = vunpack.c.l.b16 %v3108
          %v3691 = vunpack.c.h.b16 %v3108
          %v3692 = vunpack.c.l.b16 %v3109
          %v3693 = vunpack.c.h.b16 %v3109
          %v3694 = vunpack.c.l.b16 %v3110
          %v3695 = vunpack.c.h.b16 %v3110
          %v3696 = vunpack.c.l.b16 %v3111
          %v3697 = vunpack.c.h.b16 %v3111
          %v3698 = vunpack.c.l.b16 %v3112
          %v3699 = vunpack.c.h.b16 %v3112
          %v3700 = vunpack.c.l.b16 %v3113
          %v3701 = vunpack.c.h.b16 %v3113
          %v3702 = vunpack.c.l.b16 %v3114
          %v3703 = vunpack.c.h.b16 %v3114
          %v3704 = vunpack.c.l.b16 %v3115
          %v3705 = vunpack.c.h.b16 %v3115
          %v3706 = vunpack.c.l.b16 %v3116
          %v3707 = vunpack.c.h.b16 %v3116
          %v3708 = vunpack.c.l.b16 %v3117
          %v3709 = vunpack.c.h.b16 %v3117
          %v3710 = vunpack.c.l.b16 %v3118
          %v3711 = vunpack.c.h.b16 %v3118
          %v3712 = vunpack.c.l.b16 %v3119
          %v3713 = vunpack.c.h.b16 %v3119
          %v3714 = vunpack.c.l.b16 %v3120
          %v3715 = vunpack.c.h.b16 %v3120
          %v3716 = vunpack.c.l.b16 %v3121
          %v3717 = vunpack.c.h.b16 %v3121
          %v3718 = vunpack.c.l.b16 %v3122
          %v3719 = vunpack.c.h.b16 %v3122
          %v3720 = vunpack.c.l.b16 %v3123
          %v3721 = vunpack.c.h.b16 %v3123
          %v3722 = vunpack.c.l.b16 %v3124
          %v3723 = vunpack.c.h.b16 %v3124
          %v3724 = vpack.c.b16 %v3344, %v3340
          %v3725 = vpack.c.b16 %v3345, %v3341
          %v3726 = vpack.c.b16 %v3346, %v3342
          %v3727 = vpack.c.b16 %v3347, %v3343
          %v3728 = vpack.c.b16 %v3352, %v3348
          %v3729 = vpack.c.b16 %v3353, %v3349
          %v3730 = vpack.c.b16 %v3354, %v3350
          %v3731 = vpack.c.b16 %v3355, %v3351
          %v3732 = vpack.c.b16 %v3360, %v3356
          %v3733 = vpack.c.b16 %v3361, %v3357
          %v3734 = vpack.c.b16 %v3362, %v3358
          %v3735 = vpack.c.b16 %v3363, %v3359
          %v3736 = vpack.c.b16 %v3368, %v3364
          %v3737 = vpack.c.b16 %v3369, %v3365
          %v3738 = vpack.c.b16 %v3370, %v3366
          %v3739 = vpack.c.b16 %v3371, %v3367
          %v3740 = vpack.c.b16 %v3376, %v3372
          %v3741 = vpack.c.b16 %v3377, %v3373
          %v3742 = vpack.c.b16 %v3378, %v3374
          %v3743 = vpack.c.b16 %v3379, %v3375
          %v3744 = vpack.c.b16 %v3384, %v3380
          %v3745 = vpack.c.b16 %v3385, %v3381
          %v3746 = vpack.c.b16 %v3386, %v3382
          %v3747 = vpack.c.b16 %v3387, %v3383
          %v3748 = vpack.c.b16 %v3392, %v3388
          %v3749 = vpack.c.b16 %v3393, %v3389
          %v3750 = vpack.c.b16 %v3394, %v3390
          %v3751 = vpack.c.b16 %v3395, %v3391
          %v3752 = vpack.c.b16 %v3400, %v3396
          %v3753 = vpack.c.b16 %v3401, %v3397
          %v3754 = vpack.c.b16 %v3402, %v3398
          %v3755 = vpack.c.b16 %v3403, %v3399
          %v3756 = vpack.c.b16 %v3408, %v3404
          %v3757 = vpack.c.b16 %v3409, %v3405
          %v3758 = vpack.c.b16 %v3410, %v3406
          %v3759 = vpack.c.b16 %v3411, %v3407
          %v3760 = vpack.c.b16 %v3416, %v3412
          %v3761 = vpack.c.b16 %v3417, %v3413
          %v3762 = vpack.c.b16 %v3418, %v3414
          %v3763 = vpack.c.b16 %v3419, %v3415
          %v3764 = vpack.c.b16 %v3424, %v3420
          %v3765 = vpack.c.b16 %v3425, %v3421
          %v3766 = vpack.c.b16 %v3426, %v3422
          %v3767 = vpack.c.b16 %v3427, %v3423
          %v3768 = vpack.c.b16 %v3432, %v3428
          %v3769 = vpack.c.b16 %v3433, %v3429
          %v3770 = vpack.c.b16 %v3434, %v3430
          %v3771 = vpack.c.b16 %v3435, %v3431
          %v3772 = vpack.c.b16 %v3440, %v3436
          %v3773 = vpack.c.b16 %v3441, %v3437
          %v3774 = vpack.c.b16 %v3442, %v3438
          %v3775 = vpack.c.b16 %v3443, %v3439
          %v3776 = vpack.c.b16 %v3448, %v3444
          %v3777 = vpack.c.b16 %v3449, %v3445
          %v3778 = vpack.c.b16 %v3450, %v3446
          %v3779 = vpack.c.b16 %v3451, %v3447
          %v3780 = vpack.c.b16 %v3456, %v3452
          %v3781 = vpack.c.b16 %v3457, %v3453
          %v3782 = vpack.c.b16 %v3458, %v3454
          %v3783 = vpack.c.b16 %v3459, %v3455
          %v3784 = vpack.c.b16 %v3464, %v3460
          %v3785 = vpack.c.b16 %v3465, %v3461
          %v3786 = vpack.c.b16 %v3466, %v3462
          %v3787 = vpack.c.b16 %v3467, %v3463
          %v3788 = vpack.c.b16 %v3472, %v3468
          %v3789 = vpack.c.b16 %v3473, %v3469
          %v3790 = vpack.c.b16 %v3474, %v3470
          %v3791 = vpack.c.b16 %v3475, %v3471
          %v3792 = vpack.c.b16 %v3480, %v3476
          %v3793 = vpack.c.b16 %v3481, %v3477
          %v3794 = vpack.c.b16 %v3482, %v3478
          %v3795 = vpack.c.b16 %v3483, %v3479
          %v3796 = vpack.c.b16 %v3488, %v3484
          %v3797 = vpack.c.b16 %v3489, %v3485
          %v3798 = vpack.c.b16 %v3490, %v3486
          %v3799 = vpack.c.b16 %v3491, %v3487
          %v3800 = vpack.c.b16 %v3496, %v3492
          %v3801 = vpack.c.b16 %v3497, %v3493
          %v3802 = vpack.c.b16 %v3498, %v3494
          %v3803 = vpack.c.b16 %v3499, %v3495
          %v3804 = vpack.c.b16 %v3504, %v3500
          %v3805 = vpack.c.b16 %v3505, %v3501
          %v3806 = vpack.c.b16 %v3506, %v3502
          %v3807 = vpack.c.b16 %v3507, %v3503
          %v3808 = vpack.c.b16 %v3512, %v3508
          %v3809 = vpack.c.b16 %v3513, %v3509
          %v3810 = vpack.c.b16 %v3514, %v3510
          %v3811 = vpack.c.b16 %v3515, %v3511
          %v3812 = vpack.c.b16 %v3520, %v3516
          %v3813 = vpack.c.b16 %v3521, %v3517
          %v3814 = vpack.c.b16 %v3522, %v3518
          %v3815 = vpack.c.b16 %v3523, %v3519
          %v3816 = vpack.c.b16 %v3528, %v3524
          %v3817 = vpack.c.b16 %v3529, %v3525
          %v3818 = vpack.c.b16 %v3530, %v3526
          %v3819 = vpack.c.b16 %v3531, %v3527
          %v3820 = vpack.c.b16 %v3536, %v3532
          %v3821 = vpack.c.b16 %v3537, %v3533
          %v3822 = vpack.c.b16 %v3538, %v3534
          %v3823 = vpack.c.b16 %v3539, %v3535
          %v3824 = vpack.c.b16 %v3544, %v3540
          %v3825 = vpack.c.b16 %v3545, %v3541
          %v3826 = vpack.c.b16 %v3546, %v3542
          %v3827 = vpack.c.b16 %v3547, %v3543
          %v3828 = vpack.c.b16 %v3552, %v3548
          %v3829 = vpack.c.b16 %v3553, %v3549
          %v3830 = vpack.c.b16 %v3554, %v3550
          %v3831 = vpack.c.b16 %v3555, %v3551
          %v3832 = vpack.c.b16 %v3560, %v3556
          %v3833 = vpack.c.b16 %v3561, %v3557
          %v3834 = vpack.c.b16 %v3562, %v3558
          %v3835 = vpack.c.b16 %v3563, %v3559
          %v3836 = vpack.c.b16 %v3568, %v3564
          %v3837 = vpack.c.b16 %v3569, %v3565
          %v3838 = vpack.c.b16 %v3570, %v3566
          %v3839 = vpack.c.b16 %v3571, %v3567
          %v3840 = vpack.c.b16 %v3576, %v3572
          %v3841 = vpack.c.b16 %v3577, %v3573
          %v3842 = vpack.c.b16 %v3578, %v3574
          %v3843 = vpack.c.b16 %v3579, %v3575
          %v3844 = vpack.c.b16 %v3584, %v3580
          %v3845 = vpack.c.b16 %v3585, %v3581
          %v3846 = vpack.c.b16 %v3586, %v3582
          %v3847 = vpack.c.b16 %v3587, %v3583
          %v3848 = vpack.c.b16 %v3592, %v3588
          %v3849 = vpack.c.b16 %v3593, %v3589
          %v3850 = vpack.c.b16 %v3594, %v3590
          %v3851 = vpack.c.b16 %v3595, %v3591
          %v3852 = vpack.c.b16 %v3600, %v3596
          %v3853 = vpack.c.b16 %v3601, %v3597
          %v3854 = vpack.c.b16 %v3602, %v3598
          %v3855 = vpack.c.b16 %v3603, %v3599
          %v3856 = vpack.c.b16 %v3608, %v3604
          %v3857 = vpack.c.b16 %v3609, %v3605
          %v3858 = vpack.c.b16 %v3610, %v3606
          %v3859 = vpack.c.b16 %v3611, %v3607
          %v3860 = vpack.c.b16 %v3616, %v3612
          %v3861 = vpack.c.b16 %v3617, %v3613
          %v3862 = vpack.c.b16 %v3618, %v3614
          %v3863 = vpack.c.b16 %v3619, %v3615
          %v3864 = vpack.c.b16 %v3624, %v3620
          %v3865 = vpack.c.b16 %v3625, %v3621
          %v3866 = vpack.c.b16 %v3626, %v3622
          %v3867 = vpack.c.b16 %v3627, %v3623
          %v3868 = vpack.c.b16 %v3632, %v3628
          %v3869 = vpack.c.b16 %v3633, %v3629
          %v3870 = vpack.c.b16 %v3634, %v3630
          %v3871 = vpack.c.b16 %v3635, %v3631
          %v3872 = vpack.c.b16 %v3640, %v3636
          %v3873 = vpack.c.b16 %v3641, %v3637
          %v3874 = vpack.c.b16 %v3642, %v3638
          %v3875 = vpack.c.b16 %v3643, %v3639
          %v3876 = vpack.c.b16 %v3648, %v3644
          %v3877 = vpack.c.b16 %v3649, %v3645
          %v3878 = vpack.c.b16 %v3650, %v3646
          %v3879 = vpack.c.b16 %v3651, %v3647
          %v3880 = vpack.c.b16 %v3656, %v3652
          %v3881 = vpack.c.b16 %v3657, %v3653
          %v3882 = vpack.c.b16 %v3658, %v3654
          %v3883 = vpack.c.b16 %v3659, %v3655
          %v3884 = vpack.c.b16 %v3664, %v3660
          %v3885 = vpack.c.b16 %v3665, %v3661
          %v3886 = vpack.c.b16 %v3666, %v3662
          %v3887 = vpack.c.b16 %v3667, %v3663
          %v3888 = vpack.c.b16 %v3672, %v3668
          %v3889 = vpack.c.b16 %v3673, %v3669
          %v3890 = vpack.c.b16 %v3674, %v3670
          %v3891 = vpack.c.b16 %v3675, %v3671
          %v3892 = vpack.c.b16 %v3680, %v3676
          %v3893 = vpack.c.b16 %v3681, %v3677
          %v3894 = vpack.c.b16 %v3682, %v3678
          %v3895 = vpack.c.b16 %v3683, %v3679
          %v3896 = vpack.c.b16 %v3688, %v3684
          %v3897 = vpack.c.b16 %v3689, %v3685
          %v3898 = vpack.c.b16 %v3690, %v3686
          %v3899 = vpack.c.b16 %v3691, %v3687
          %v3900 = vpack.c.b16 %v3696, %v3692
          %v3901 = vpack.c.b16 %v3697, %v3693
          %v3902 = vpack.c.b16 %v3698, %v3694
          %v3903 = vpack.c.b16 %v3699, %v3695
          %v3904 = vpack.c.b16 %v3704, %v3700
          %v3905 = vpack.c.b16 %v3705, %v3701
          %v3906 = vpack.c.b16 %v3706, %v3702
          %v3907 = vpack.c.b16 %v3707, %v3703
          %v3908 = vpack.c.b16 %v3712, %v3708
          %v3909 = vpack.c.b16 %v3713, %v3709
          %v3910 = vpack.c.b16 %v3714, %v3710
          %v3911 = vpack.c.b16 %v3715, %v3711
          %v3912 = vpack.c.b16 %v3720, %v3716
          %v3913 = vpack.c.b16 %v3721, %v3717
          %v3914 = vpack.c.b16 %v3722, %v3718
          %v3915 = vpack.c.b16 %v3723, %v3719
          %4108 = vmatprep.subr.bf16.mxu0 %v3753
          %4109 = vmatpush1.bf16.msra.mxu0 %v3752
          %4110 = vmatprep.subr.bf16.mxu0 %v3749
          %4111 = vmatpush1.bf16.msra.mxu0 %v3748
          %4112 = vmatprep.subr.bf16.mxu0 %v3745
          %4113 = vmatpush1.bf16.msra.mxu0 %v3744
          %4114 = vmatprep.subr.bf16.mxu0 %v3741
          %4115 = vmatpush1.bf16.msra.mxu0 %v3740
          %4116 = vmatprep.subr.bf16.mxu0 %v3737
          %4117 = vmatpush1.bf16.msra.mxu0 %v3736
          %4118 = vmatprep.subr.bf16.mxu0 %v3733
          %4119 = vmatpush1.bf16.msra.mxu0 %v3732
          %4120 = vmatprep.subr.bf16.mxu0 %v3729
          %4121 = vmatpush1.bf16.msra.mxu0 %v3728
          %4122 = vmatprep.subr.bf16.mxu0 %v3725
          %4123 = vmatpush1.bf16.msra.mxu0 %v3724
          %4124 = vmatprep.subr.bf16.mxu0 %v3785
          %4125 = vmatpush2.bf16.msra.mxu0 %v3784
          %4126 = vmatprep.subr.bf16.mxu0 %v3781
          %4127 = vmatpush2.bf16.msra.mxu0 %v3780
          %4128 = vmatprep.subr.bf16.mxu0 %v3777
          %4129 = vmatpush2.bf16.msra.mxu0 %v3776
          %4130 = vmatprep.subr.bf16.mxu0 %v3773
          %4131 = vmatpush2.bf16.msra.mxu0 %v3772
          %4132 = vmatprep.subr.bf16.mxu0 %v3769
          %4133 = vmatpush2.bf16.msra.mxu0 %v3768
          %4134 = vmatprep.subr.bf16.mxu0 %v3765
          %4135 = vmatpush2.bf16.msra.mxu0 %v3764
          %4136 = vmatprep.subr.bf16.mxu0 %v3761
          %4137 = vmatpush2.bf16.msra.mxu0 %v3760
          %4138 = vmatprep.subr.bf16.mxu0 %v3757
          %4139 = vmatpush2.bf16.msra.mxu0 %v3756
          %4140 = vmatprep.mubr.bf16.mxu0 %v2927
          %4141 = vmatmul.mubr.bf16.gmra.mxu0 %v2926
          %v4142 = vpop.f32.mrf.mxu0
          %v4143 = vadd.f32 %v3131, %v4142
          %v4144 = vpop.f32.mrf.mxu0
          %v4145 = vadd.f32 %v3135, %v4144
          %v4146 = vpop.f32.mrf.mxu0
          %v4147 = vpop.f32.mrf.mxu0
          %4148 = vdwg.mxu0
          %4149 = vmatprep.subr.bf16.mxu0 %v3817
          %4150 = vmatpush1.bf16.msra.mxu0 %v3816
          %4151 = vmatprep.subr.bf16.mxu0 %v3813
          %4152 = vmatpush1.bf16.msra.mxu0 %v3812
          %4153 = vmatprep.subr.bf16.mxu0 %v3809
          %4154 = vmatpush1.bf16.msra.mxu0 %v3808
          %4155 = vmatprep.subr.bf16.mxu0 %v3805
          %4156 = vmatpush1.bf16.msra.mxu0 %v3804
          %4157 = vmatprep.subr.bf16.mxu0 %v3801
          %4158 = vmatpush1.bf16.msra.mxu0 %v3800
          %4159 = vmatprep.subr.bf16.mxu0 %v3797
          %4160 = vmatpush1.bf16.msra.mxu0 %v3796
          %4161 = vmatprep.subr.bf16.mxu0 %v3793
          %4162 = vmatpush1.bf16.msra.mxu0 %v3792
          %4163 = vmatprep.subr.bf16.mxu0 %v3789
          %4164 = vmatpush1.bf16.msra.mxu0 %v3788
          %4165 = vmatprep.subr.bf16.mxu0 %v3849
          %4166 = vmatpush2.bf16.msra.mxu0 %v3848
          %4167 = vmatprep.subr.bf16.mxu0 %v3845
          %4168 = vmatpush2.bf16.msra.mxu0 %v3844
          %4169 = vmatprep.subr.bf16.mxu0 %v3841
          %4170 = vmatpush2.bf16.msra.mxu0 %v3840
          %4171 = vmatprep.subr.bf16.mxu0 %v3837
          %4172 = vmatpush2.bf16.msra.mxu0 %v3836
          %4173 = vmatprep.subr.bf16.mxu0 %v3833
          %4174 = vmatpush2.bf16.msra.mxu0 %v3832
          %4175 = vmatprep.subr.bf16.mxu0 %v3829
          %4176 = vmatpush2.bf16.msra.mxu0 %v3828
          %4177 = vmatprep.subr.bf16.mxu0 %v3825
          %4178 = vmatpush2.bf16.msra.mxu0 %v3824
          %4179 = vmatprep.subr.bf16.mxu0 %v3821
          %4180 = vmatpush2.bf16.msra.mxu0 %v3820
          %4181 = vmatprep.mubr.bf16.mxu0 %v2929
          %4182 = vmatmul.mubr.bf16.gmra.mxu0 %v2928
          %v4183 = vpop.f32.mrf.mxu0
          %v4184 = vadd.f32 %v4143, %v4183
          %v4185 = vpop.f32.mrf.mxu0
          %v4186 = vadd.f32 %v4145, %v4185
          %v4187 = vpop.f32.mrf.mxu0
          %v4188 = vpop.f32.mrf.mxu0
          %4189 = vdwg.mxu0
          %4190 = vmatprep.subr.bf16.mxu0 %v3881
          %4191 = vmatpush1.bf16.msra.mxu0 %v3880
          %4192 = vmatprep.subr.bf16.mxu0 %v3877
          %4193 = vmatpush1.bf16.msra.mxu0 %v3876
          %4194 = vmatprep.subr.bf16.mxu0 %v3873
          %4195 = vmatpush1.bf16.msra.mxu0 %v3872
          %4196 = vmatprep.subr.bf16.mxu0 %v3869
          %4197 = vmatpush1.bf16.msra.mxu0 %v3868
          %4198 = vmatprep.subr.bf16.mxu0 %v3865
          %4199 = vmatpush1.bf16.msra.mxu0 %v3864
          %4200 = vmatprep.subr.bf16.mxu0 %v3861
          %4201 = vmatpush1.bf16.msra.mxu0 %v3860
          %4202 = vmatprep.subr.bf16.mxu0 %v3857
          %4203 = vmatpush1.bf16.msra.mxu0 %v3856
          %4204 = vmatprep.subr.bf16.mxu0 %v3853
          %4205 = vmatpush1.bf16.msra.mxu0 %v3852
          %4206 = vmatprep.subr.bf16.mxu0 %v3913
          %4207 = vmatpush2.bf16.msra.mxu0 %v3912
          %4208 = vmatprep.subr.bf16.mxu0 %v3909
          %4209 = vmatpush2.bf16.msra.mxu0 %v3908
          %4210 = vmatprep.subr.bf16.mxu0 %v3905
          %4211 = vmatpush2.bf16.msra.mxu0 %v3904
          %4212 = vmatprep.subr.bf16.mxu0 %v3901
          %4213 = vmatpush2.bf16.msra.mxu0 %v3900
          %4214 = vmatprep.subr.bf16.mxu0 %v3897
          %4215 = vmatpush2.bf16.msra.mxu0 %v3896
          %4216 = vmatprep.subr.bf16.mxu0 %v3893
          %4217 = vmatpush2.bf16.msra.mxu0 %v3892
          %4218 = vmatprep.subr.bf16.mxu0 %v3889
          %4219 = vmatpush2.bf16.msra.mxu0 %v3888
          %4220 = vmatprep.subr.bf16.mxu0 %v3885
          %4221 = vmatpush2.bf16.msra.mxu0 %v3884
          %4222 = vmatprep.mubr.bf16.mxu0 %v2931
          %4223 = vmatmul.mubr.bf16.gmra.mxu0 %v2930
          %v4224 = vpop.f32.mrf.mxu0
          %v4225 = vadd.f32 %v4184, %v4224
          %v4226 = vpop.f32.mrf.mxu0
          %v4227 = vadd.f32 %v4186, %v4226
          %v4228 = vpop.f32.mrf.mxu0
          %v4229 = vpop.f32.mrf.mxu0
          %4230 = vdwg.mxu0
          %4231 = vmatprep.subr.bf16.mxu0 %v3755
          %4232 = vmatpush1.bf16.msra.mxu0 %v3754
          %4233 = vmatprep.subr.bf16.mxu0 %v3751
          %4234 = vmatpush1.bf16.msra.mxu0 %v3750
          %4235 = vmatprep.subr.bf16.mxu0 %v3747
          %4236 = vmatpush1.bf16.msra.mxu0 %v3746
          %4237 = vmatprep.subr.bf16.mxu0 %v3743
          %4238 = vmatpush1.bf16.msra.mxu0 %v3742
          %4239 = vmatprep.subr.bf16.mxu0 %v3739
          %4240 = vmatpush1.bf16.msra.mxu0 %v3738
          %4241 = vmatprep.subr.bf16.mxu0 %v3735
          %4242 = vmatpush1.bf16.msra.mxu0 %v3734
          %4243 = vmatprep.subr.bf16.mxu0 %v3731
          %4244 = vmatpush1.bf16.msra.mxu0 %v3730
          %4245 = vmatprep.subr.bf16.mxu0 %v3727
          %4246 = vmatpush1.bf16.msra.mxu0 %v3726
          %4247 = vmatprep.subr.bf16.mxu0 %v3787
          %4248 = vmatpush2.bf16.msra.mxu0 %v3786
          %4249 = vmatprep.subr.bf16.mxu0 %v3783
          %4250 = vmatpush2.bf16.msra.mxu0 %v3782
          %4251 = vmatprep.subr.bf16.mxu0 %v3779
          %4252 = vmatpush2.bf16.msra.mxu0 %v3778
          %4253 = vmatprep.subr.bf16.mxu0 %v3775
          %4254 = vmatpush2.bf16.msra.mxu0 %v3774
          %4255 = vmatprep.subr.bf16.mxu0 %v3771
          %4256 = vmatpush2.bf16.msra.mxu0 %v3770
          %4257 = vmatprep.subr.bf16.mxu0 %v3767
          %4258 = vmatpush2.bf16.msra.mxu0 %v3766
          %4259 = vmatprep.subr.bf16.mxu0 %v3763
          %4260 = vmatpush2.bf16.msra.mxu0 %v3762
          %4261 = vmatprep.subr.bf16.mxu0 %v3759
          %4262 = vmatpush2.bf16.msra.mxu0 %v3758
          %4263 = vmatprep.mubr.bf16.mxu0 %v2927
          %4264 = vmatmul.mubr.bf16.gmra.mxu0 %v2926
          %v4265 = vpop.f32.mrf.mxu0
          %v4266 = vadd.f32 %v3139, %v4265
          %v4267 = vpop.f32.mrf.mxu0
          %v4268 = vadd.f32 %v3143, %v4267
          %v4269 = vpop.f32.mrf.mxu0
          %v4270 = vpop.f32.mrf.mxu0
          %4271 = vdwg.mxu0
          %4272 = vmatprep.subr.bf16.mxu0 %v3819
          %4273 = vmatpush1.bf16.msra.mxu0 %v3818
          %4274 = vmatprep.subr.bf16.mxu0 %v3815
          %4275 = vmatpush1.bf16.msra.mxu0 %v3814
          %4276 = vmatprep.subr.bf16.mxu0 %v3811
          %4277 = vmatpush1.bf16.msra.mxu0 %v3810
          %4278 = vmatprep.subr.bf16.mxu0 %v3807
          %4279 = vmatpush1.bf16.msra.mxu0 %v3806
          %4280 = vmatprep.subr.bf16.mxu0 %v3803
          %4281 = vmatpush1.bf16.msra.mxu0 %v3802
          %4282 = vmatprep.subr.bf16.mxu0 %v3799
          %4283 = vmatpush1.bf16.msra.mxu0 %v3798
          %4284 = vmatprep.subr.bf16.mxu0 %v3795
          %4285 = vmatpush1.bf16.msra.mxu0 %v3794
          %4286 = vmatprep.subr.bf16.mxu0 %v3791
          %4287 = vmatpush1.bf16.msra.mxu0 %v3790
          %4288 = vmatprep.subr.bf16.mxu0 %v3851
          %4289 = vmatpush2.bf16.msra.mxu0 %v3850
          %4290 = vmatprep.subr.bf16.mxu0 %v3847
          %4291 = vmatpush2.bf16.msra.mxu0 %v3846
          %4292 = vmatprep.subr.bf16.mxu0 %v3843
          %4293 = vmatpush2.bf16.msra.mxu0 %v3842
          %4294 = vmatprep.subr.bf16.mxu0 %v3839
          %4295 = vmatpush2.bf16.msra.mxu0 %v3838
          %4296 = vmatprep.subr.bf16.mxu0 %v3835
          %4297 = vmatpush2.bf16.msra.mxu0 %v3834
          %4298 = vmatprep.subr.bf16.mxu0 %v3831
          %4299 = vmatpush2.bf16.msra.mxu0 %v3830
          %4300 = vmatprep.subr.bf16.mxu0 %v3827
          %4301 = vmatpush2.bf16.msra.mxu0 %v3826
          %4302 = vmatprep.subr.bf16.mxu0 %v3823
          %4303 = vmatpush2.bf16.msra.mxu0 %v3822
          %4304 = vmatprep.mubr.bf16.mxu0 %v2929
          %4305 = vmatmul.mubr.bf16.gmra.mxu0 %v2928
          %v4306 = vpop.f32.mrf.mxu0
          %v4307 = vadd.f32 %v4266, %v4306
          %v4308 = vpop.f32.mrf.mxu0
          %v4309 = vadd.f32 %v4268, %v4308
          %v4310 = vpop.f32.mrf.mxu0
          %v4311 = vpop.f32.mrf.mxu0
          %4312 = vdwg.mxu0
          %4313 = vmatprep.subr.bf16.mxu0 %v3883
          %4314 = vmatpush1.bf16.msra.mxu0 %v3882
          %4315 = vmatprep.subr.bf16.mxu0 %v3879
          %4316 = vmatpush1.bf16.msra.mxu0 %v3878
          %4317 = vmatprep.subr.bf16.mxu0 %v3875
          %4318 = vmatpush1.bf16.msra.mxu0 %v3874
          %4319 = vmatprep.subr.bf16.mxu0 %v3871
          %4320 = vmatpush1.bf16.msra.mxu0 %v3870
          %4321 = vmatprep.subr.bf16.mxu0 %v3867
          %4322 = vmatpush1.bf16.msra.mxu0 %v3866
          %4323 = vmatprep.subr.bf16.mxu0 %v3863
          %4324 = vmatpush1.bf16.msra.mxu0 %v3862
          %4325 = vmatprep.subr.bf16.mxu0 %v3859
          %4326 = vmatpush1.bf16.msra.mxu0 %v3858
          %4327 = vmatprep.subr.bf16.mxu0 %v3855
          %4328 = vmatpush1.bf16.msra.mxu0 %v3854
          %4329 = vmatprep.subr.bf16.mxu0 %v3915
          %4330 = vmatpush2.bf16.msra.mxu0 %v3914
          %4331 = vmatprep.subr.bf16.mxu0 %v3911
          %4332 = vmatpush2.bf16.msra.mxu0 %v3910
          %4333 = vmatprep.subr.bf16.mxu0 %v3907
          %4334 = vmatpush2.bf16.msra.mxu0 %v3906
          %4335 = vmatprep.subr.bf16.mxu0 %v3903
          %4336 = vmatpush2.bf16.msra.mxu0 %v3902
          %4337 = vmatprep.subr.bf16.mxu0 %v3899
          %4338 = vmatpush2.bf16.msra.mxu0 %v3898
          %4339 = vmatprep.subr.bf16.mxu0 %v3895
          %4340 = vmatpush2.bf16.msra.mxu0 %v3894
          %4341 = vmatprep.subr.bf16.mxu0 %v3891
          %4342 = vmatpush2.bf16.msra.mxu0 %v3890
          %4343 = vmatprep.subr.bf16.mxu0 %v3887
          %4344 = vmatpush2.bf16.msra.mxu0 %v3886
          %4345 = vmatprep.mubr.bf16.mxu0 %v2931
          %4346 = vmatmul.mubr.bf16.gmra.mxu0 %v2930
          %v4347 = vpop.f32.mrf.mxu0
          %v4348 = vadd.f32 %v4307, %v4347
          %v4349 = vpop.f32.mrf.mxu0
          %v4350 = vadd.f32 %v4309, %v4349
          %v4351 = vpop.f32.mrf.mxu0
          %v4352 = vpop.f32.mrf.mxu0
          %4353 = vdwg.mxu0
          %v4358 = vcombine.low %v4225, %v4227
          %v4359 = vcombine.low %v4348, %v4350
          %v4361 = vunpack.c.l.s4 1983009808
          %v4362 = vunpack.c.0.s8 %v4361
          %v4363 = vlaneseq
          %v4364 = vshrl.u32 %v4363, 7
          %v4365 = vsub.s32 %v4362, %v4364
          %v4366 = vrot.slane %v4358, %v4365
          %v4368 = vunpack.c.l.s4 1983009808
          %v4369 = vunpack.c.0.s8 %v4368
          %v4370 = vlaneseq
          %v4371 = vshrl.u32 %v4370, 7
          %v4372 = vsub.s32 %v4369, %v4371
          %v4373 = vrot.slane %v4359, %v4372
          %v4374 = vcombine.low %v4366, %v4373
          %4376 = vst [vmem:[%s298 + $0x8] sm:$0xff] %v4374
          %v4377 = vld [vmem:[%s1014] sm:$0xff]
          %v4378 = vld [vmem:[%s1014 + $0x8] sm:$0xf]
          %v4379 = vld [vmem:[%s1171] sm:$0xff]
          %v4380 = vld [vmem:[%s1171 + $0x8] sm:$0xf]
          %v4381 = vmul.f32 %v4377, 0.125
          %v4382 = vmul.f32 %v4378, 0.125
          %v4383 = vmul.f32 %v4381, %v4377
          %v4384 = vmul.f32 %v4382, %v4378
          %v4385 = vsub.f32 %v4379, %v4383
          %v4386 = vsub.f32 %v4380, %v4384
          %v4387 = vmax.f32 %v4385, 0.0
          %v4388 = vmax.f32 %v4386, 0.0
          %v4389 = vadd.f32 %v4387, 2.3e-08
          %v4390 = vadd.f32 %v4388, 2.3e-08
          %v4391 = vmul.f32 %v4389, 0.125
          %v4392 = vmul.f32 %v4390, 0.125
          %v4393 = vrsqrt.pop %v4391
          %v4394 = vmul.f32 %v4391, %v4393
          %vm4395 = vcmp.eq.f32.partialorder %v4391, inf
          %v4396 = vsel %vm4395, %v4391, %v4394
          %vm4397 = vcmp.eq.f32.partialorder %v4391, 0.0
          %v4398 = vand.u32 %v4391, 2147483648
          %v4399 = vsel %vm4397, %v4398, %v4396
          %v4400 = vrsqrt.pop %v4392
          %v4401 = vmul.f32 %v4392, %v4400
          %vm4402 = vcmp.eq.f32.partialorder %v4392, inf
          %v4403 = vsel %vm4402, %v4392, %v4401
          %vm4404 = vcmp.eq.f32.partialorder %v4392, 0.0
          %v4405 = vand.u32 %v4392, 2147483648
          %v4406 = vsel %vm4404, %v4405, %v4403
          %v4407 = vadd.f32 %v4381, %v4399
          %v4408 = vadd.f32 %v4382, %v4406
          %v4409 = vmul.f32 %v4407, 0.5
          %v4410 = vmul.f32 %v4408, 0.5
          %v4413 = vcombine.high %v4409, %v4409
          %v4415 = vunpack.c.l.s4 1983009808
          %v4416 = vunpack.c.0.s8 %v4415
          %v4417 = vlaneseq
          %v4418 = vshrl.u32 %v4417, 7
          %v4419 = vsub.s32 %v4416, %v4418
          %v4420 = vrot.slane %v4409, %v4419
          %v4422 = vunpack.c.l.s4 1983009808
          %v4423 = vunpack.c.0.s8 %v4422
          %v4424 = vlaneseq
          %v4425 = vshrl.u32 %v4424, 7
          %v4426 = vsub.s32 %v4423, %v4425
          %v4427 = vrot.slane %v4413, %v4426
          %v4428 = vcombine.high %v4420, %v4420
          %v4429 = vcombine.high %v4427, %v4427
          %v4431 = vunpack.c.l.s4 1983009808
          %v4432 = vunpack.c.0.s8 %v4431
          %v4433 = vlaneseq
          %v4434 = vshrl.u32 %v4433, 7
          %v4435 = vsub.s32 %v4432, %v4434
          %v4436 = vrot.slane %v4410, %v4435
          %v4437 = vcombine.high %v4436, %v4436
          %v4444 = vpack.c.bf16 %v4420, %v4420
          %v4445 = vpack.c.bf16 %v4428, %v4428
          %v4446 = vpack.c.bf16 %v4427, %v4427
          %v4447 = vpack.c.bf16 %v4429, %v4429
          %v4448 = vpack.c.bf16 %v4436, %v4436
          %v4449 = vpack.c.bf16 %v4437, %v4437
          %s4450 = scalar_lea.vmem %s257, 3072 [#allocation7]
          %v4451 = vld [vmem:[%s4450] sm:$0xff]
          %v4452 = vld [vmem:[%s4450 + $0x8] sm:$0xff]
          %v4453 = vld [vmem:[%s4450 + $0x10] sm:$0xff]
          %v4454 = vld [vmem:[%s4450 + $0x18] sm:$0xff]
          %v4455 = vld [vmem:[%s4450 + $0x20] sm:$0xff]
          %v4456 = vld [vmem:[%s4450 + $0x28] sm:$0xff]
          %v4457 = vld [vmem:[%s4450 + $0x30] sm:$0xff]
          %v4458 = vld [vmem:[%s4450 + $0x38] sm:$0xff]
          %v4459 = vld [vmem:[%s4450 + $0x40] sm:$0xff]
          %v4460 = vld [vmem:[%s4450 + $0x48] sm:$0xff]
          %v4461 = vld [vmem:[%s4450 + $0x50] sm:$0xff]
          %v4462 = vld [vmem:[%s4450 + $0x58] sm:$0xff]
          %v4463 = vld [vmem:[%s4450 + $0x60] sm:$0xff]
          %v4464 = vld [vmem:[%s4450 + $0x68] sm:$0xff]
          %v4465 = vld [vmem:[%s4450 + $0x70] sm:$0xff]
          %v4466 = vld [vmem:[%s4450 + $0x78] sm:$0xff]
          %v4467 = vld [vmem:[%s4450 + $0x80] sm:$0xff]
          %v4468 = vld [vmem:[%s4450 + $0x88] sm:$0xff]
          %v4469 = vld [vmem:[%s4450 + $0x90] sm:$0xff]
          %v4470 = vld [vmem:[%s4450 + $0x98] sm:$0xff]
          %v4471 = vld [vmem:[%s4450 + $0xa0] sm:$0xff]
          %v4472 = vld [vmem:[%s4450 + $0xa8] sm:$0xff]
          %v4473 = vld [vmem:[%s4450 + $0xb0] sm:$0xff]
          %v4474 = vld [vmem:[%s4450 + $0xb8] sm:$0xff]
          %v4475 = vld [vmem:[%s4450 + $0xc0] sm:$0xff]
          %v4476 = vld [vmem:[%s4450 + $0xc8] sm:$0xff]
          %v4477 = vld [vmem:[%s4450 + $0xd0] sm:$0xff]
          %v4478 = vld [vmem:[%s4450 + $0xd8] sm:$0xff]
          %v4479 = vld [vmem:[%s4450 + $0xe0] sm:$0xff]
          %v4480 = vld [vmem:[%s4450 + $0xe8] sm:$0xff]
          %v4481 = vld [vmem:[%s4450 + $0xf0] sm:$0xff]
          %v4482 = vld [vmem:[%s4450 + $0xf8] sm:$0xff]
          %v4483 = vld [vmem:[%s4450 + $0x100] sm:$0xff]
          %v4484 = vld [vmem:[%s4450 + $0x108] sm:$0xff]
          %v4485 = vld [vmem:[%s4450 + $0x110] sm:$0xff]
          %v4486 = vld [vmem:[%s4450 + $0x118] sm:$0xff]
          %v4487 = vld [vmem:[%s4450 + $0x120] sm:$0xff]
          %v4488 = vld [vmem:[%s4450 + $0x128] sm:$0xff]
          %v4489 = vld [vmem:[%s4450 + $0x130] sm:$0xff]
          %v4490 = vld [vmem:[%s4450 + $0x138] sm:$0xff]
          %v4491 = vld [vmem:[%s4450 + $0x140] sm:$0xff]
          %v4492 = vld [vmem:[%s4450 + $0x148] sm:$0xff]
          %v4493 = vld [vmem:[%s4450 + $0x150] sm:$0xff]
          %v4494 = vld [vmem:[%s4450 + $0x158] sm:$0xff]
          %v4495 = vld [vmem:[%s4450 + $0x160] sm:$0xff]
          %v4496 = vld [vmem:[%s4450 + $0x168] sm:$0xff]
          %v4497 = vld [vmem:[%s4450 + $0x170] sm:$0xff]
          %v4498 = vld [vmem:[%s4450 + $0x178] sm:$0xff]
          %v4499 = vld [vmem:[%s4450 + $0x180] sm:$0xff]
          %v4500 = vld [vmem:[%s4450 + $0x188] sm:$0xff]
          %v4501 = vld [vmem:[%s4450 + $0x190] sm:$0xff]
          %v4502 = vld [vmem:[%s4450 + $0x198] sm:$0xff]
          %v4503 = vld [vmem:[%s4450 + $0x1a0] sm:$0xff]
          %v4504 = vld [vmem:[%s4450 + $0x1a8] sm:$0xff]
          %v4505 = vld [vmem:[%s4450 + $0x1b0] sm:$0xff]
          %v4506 = vld [vmem:[%s4450 + $0x1b8] sm:$0xff]
          %v4507 = vld [vmem:[%s4450 + $0x1c0] sm:$0xff]
          %v4508 = vld [vmem:[%s4450 + $0x1c8] sm:$0xff]
          %v4509 = vld [vmem:[%s4450 + $0x1d0] sm:$0xff]
          %v4510 = vld [vmem:[%s4450 + $0x1d8] sm:$0xff]
          %v4511 = vld [vmem:[%s4450 + $0x1e0] sm:$0xff]
          %v4512 = vld [vmem:[%s4450 + $0x1e8] sm:$0xff]
          %v4513 = vld [vmem:[%s4450 + $0x1f0] sm:$0xff]
          %v4514 = vld [vmem:[%s4450 + $0x1f8] sm:$0xff]
          %v4515 = vld [vmem:[%s4450 + $0x200] sm:$0xff]
          %v4516 = vld [vmem:[%s4450 + $0x208] sm:$0xff]
          %v4517 = vld [vmem:[%s4450 + $0x210] sm:$0xff]
          %v4518 = vld [vmem:[%s4450 + $0x218] sm:$0xff]
          %v4519 = vld [vmem:[%s4450 + $0x220] sm:$0xff]
          %v4520 = vld [vmem:[%s4450 + $0x228] sm:$0xff]
          %v4521 = vld [vmem:[%s4450 + $0x230] sm:$0xff]
          %v4522 = vld [vmem:[%s4450 + $0x238] sm:$0xff]
          %v4523 = vld [vmem:[%s4450 + $0x240] sm:$0xff]
          %v4524 = vld [vmem:[%s4450 + $0x248] sm:$0xff]
          %v4525 = vld [vmem:[%s4450 + $0x250] sm:$0xff]
          %v4526 = vld [vmem:[%s4450 + $0x258] sm:$0xff]
          %v4527 = vld [vmem:[%s4450 + $0x260] sm:$0xff]
          %v4528 = vld [vmem:[%s4450 + $0x268] sm:$0xff]
          %v4529 = vld [vmem:[%s4450 + $0x270] sm:$0xff]
          %v4530 = vld [vmem:[%s4450 + $0x278] sm:$0xff]
          %v4531 = vld [vmem:[%s4450 + $0x280] sm:$0xff]
          %v4532 = vld [vmem:[%s4450 + $0x288] sm:$0xff]
          %v4533 = vld [vmem:[%s4450 + $0x290] sm:$0xff]
          %v4534 = vld [vmem:[%s4450 + $0x298] sm:$0xff]
          %v4535 = vld [vmem:[%s4450 + $0x2a0] sm:$0xff]
          %v4536 = vld [vmem:[%s4450 + $0x2a8] sm:$0xff]
          %v4537 = vld [vmem:[%s4450 + $0x2b0] sm:$0xff]
          %v4538 = vld [vmem:[%s4450 + $0x2b8] sm:$0xff]
          %v4539 = vld [vmem:[%s4450 + $0x2c0] sm:$0xff]
          %v4540 = vld [vmem:[%s4450 + $0x2c8] sm:$0xff]
          %v4541 = vld [vmem:[%s4450 + $0x2d0] sm:$0xff]
          %v4542 = vld [vmem:[%s4450 + $0x2d8] sm:$0xff]
          %v4543 = vld [vmem:[%s4450 + $0x2e0] sm:$0xff]
          %v4544 = vld [vmem:[%s4450 + $0x2e8] sm:$0xff]
          %v4545 = vld [vmem:[%s4450 + $0x2f0] sm:$0xff]
          %v4546 = vld [vmem:[%s4450 + $0x2f8] sm:$0xff]
          %v4547 = vld [vmem:[%s4450 + $0x300] sm:$0xff]
          %v4548 = vld [vmem:[%s4450 + $0x308] sm:$0xff]
          %v4549 = vld [vmem:[%s4450 + $0x310] sm:$0xff]
          %v4550 = vld [vmem:[%s4450 + $0x318] sm:$0xff]
          %v4551 = vld [vmem:[%s4450 + $0x320] sm:$0xff]
          %v4552 = vld [vmem:[%s4450 + $0x328] sm:$0xff]
          %v4553 = vld [vmem:[%s4450 + $0x330] sm:$0xff]
          %v4554 = vld [vmem:[%s4450 + $0x338] sm:$0xff]
          %v4555 = vld [vmem:[%s4450 + $0x340] sm:$0xff]
          %v4556 = vld [vmem:[%s4450 + $0x348] sm:$0xff]
          %v4557 = vld [vmem:[%s4450 + $0x350] sm:$0xff]
          %v4558 = vld [vmem:[%s4450 + $0x358] sm:$0xff]
          %v4559 = vld [vmem:[%s4450 + $0x360] sm:$0xff]
          %v4560 = vld [vmem:[%s4450 + $0x368] sm:$0xff]
          %v4561 = vld [vmem:[%s4450 + $0x370] sm:$0xff]
          %v4562 = vld [vmem:[%s4450 + $0x378] sm:$0xff]
          %v4563 = vld [vmem:[%s4450 + $0x380] sm:$0xff]
          %v4564 = vld [vmem:[%s4450 + $0x388] sm:$0xff]
          %v4565 = vld [vmem:[%s4450 + $0x390] sm:$0xff]
          %v4566 = vld [vmem:[%s4450 + $0x398] sm:$0xff]
          %v4567 = vld [vmem:[%s4450 + $0x3a0] sm:$0xff]
          %v4568 = vld [vmem:[%s4450 + $0x3a8] sm:$0xff]
          %v4569 = vld [vmem:[%s4450 + $0x3b0] sm:$0xff]
          %v4570 = vld [vmem:[%s4450 + $0x3b8] sm:$0xff]
          %v4571 = vld [vmem:[%s4450 + $0x3c0] sm:$0xff]
          %v4572 = vld [vmem:[%s4450 + $0x3c8] sm:$0xff]
          %v4573 = vld [vmem:[%s4450 + $0x3d0] sm:$0xff]
          %v4574 = vld [vmem:[%s4450 + $0x3d8] sm:$0xff]
          %v4575 = vld [vmem:[%s4450 + $0x3e0] sm:$0xff]
          %v4576 = vld [vmem:[%s4450 + $0x3e8] sm:$0xff]
          %v4577 = vld [vmem:[%s4450 + $0x3f0] sm:$0xff]
          %v4578 = vld [vmem:[%s4450 + $0x3f8] sm:$0xff]
          %v4579 = vld [vmem:[%s4450 + $0x400] sm:$0xff]
          %v4580 = vld [vmem:[%s4450 + $0x408] sm:$0xff]
          %v4581 = vld [vmem:[%s4450 + $0x410] sm:$0xff]
          %v4582 = vld [vmem:[%s4450 + $0x418] sm:$0xff]
          %v4583 = vld [vmem:[%s4450 + $0x420] sm:$0xff]
          %v4584 = vld [vmem:[%s4450 + $0x428] sm:$0xff]
          %v4585 = vld [vmem:[%s4450 + $0x430] sm:$0xff]
          %v4586 = vld [vmem:[%s4450 + $0x438] sm:$0xff]
          %v4587 = vld [vmem:[%s4450 + $0x440] sm:$0xff]
          %v4588 = vld [vmem:[%s4450 + $0x448] sm:$0xff]
          %v4589 = vld [vmem:[%s4450 + $0x450] sm:$0xff]
          %v4590 = vld [vmem:[%s4450 + $0x458] sm:$0xff]
          %v4591 = vld [vmem:[%s4450 + $0x460] sm:$0xff]
          %v4592 = vld [vmem:[%s4450 + $0x468] sm:$0xff]
          %v4593 = vld [vmem:[%s4450 + $0x470] sm:$0xff]
          %v4594 = vld [vmem:[%s4450 + $0x478] sm:$0xff]
          %v4595 = vld [vmem:[%s4450 + $0x480] sm:$0xff]
          %v4596 = vld [vmem:[%s4450 + $0x488] sm:$0xff]
          %v4597 = vld [vmem:[%s4450 + $0x490] sm:$0xff]
          %v4598 = vld [vmem:[%s4450 + $0x498] sm:$0xff]
          %v4599 = vld [vmem:[%s4450 + $0x4a0] sm:$0xff]
          %v4600 = vld [vmem:[%s4450 + $0x4a8] sm:$0xff]
          %v4601 = vld [vmem:[%s4450 + $0x4b0] sm:$0xff]
          %v4602 = vld [vmem:[%s4450 + $0x4b8] sm:$0xff]
          %v4603 = vld [vmem:[%s4450 + $0x4c0] sm:$0xff]
          %v4604 = vld [vmem:[%s4450 + $0x4c8] sm:$0xff]
          %v4605 = vld [vmem:[%s4450 + $0x4d0] sm:$0xff]
          %v4606 = vld [vmem:[%s4450 + $0x4d8] sm:$0xff]
          %v4607 = vld [vmem:[%s4450 + $0x4e0] sm:$0xff]
          %v4608 = vld [vmem:[%s4450 + $0x4e8] sm:$0xff]
          %v4609 = vld [vmem:[%s4450 + $0x4f0] sm:$0xff]
          %v4610 = vld [vmem:[%s4450 + $0x4f8] sm:$0xff]
          %v4611 = vld [vmem:[%s4450 + $0x500] sm:$0xff]
          %v4612 = vld [vmem:[%s4450 + $0x508] sm:$0xff]
          %v4613 = vld [vmem:[%s4450 + $0x510] sm:$0xff]
          %v4614 = vld [vmem:[%s4450 + $0x518] sm:$0xff]
          %v4615 = vld [vmem:[%s4450 + $0x520] sm:$0xff]
          %v4616 = vld [vmem:[%s4450 + $0x528] sm:$0xff]
          %v4617 = vld [vmem:[%s4450 + $0x530] sm:$0xff]
          %v4618 = vld [vmem:[%s4450 + $0x538] sm:$0xff]
          %v4619 = vld [vmem:[%s4450 + $0x540] sm:$0xff]
          %v4620 = vld [vmem:[%s4450 + $0x548] sm:$0xff]
          %v4621 = vld [vmem:[%s4450 + $0x550] sm:$0xff]
          %v4622 = vld [vmem:[%s4450 + $0x558] sm:$0xff]
          %v4623 = vld [vmem:[%s4450 + $0x560] sm:$0xff]
          %v4624 = vld [vmem:[%s4450 + $0x568] sm:$0xff]
          %v4625 = vld [vmem:[%s4450 + $0x570] sm:$0xff]
          %v4626 = vld [vmem:[%s4450 + $0x578] sm:$0xff]
          %v4627 = vld [vmem:[%s4450 + $0x580] sm:$0xff]
          %v4628 = vld [vmem:[%s4450 + $0x588] sm:$0xff]
          %v4629 = vld [vmem:[%s4450 + $0x590] sm:$0xff]
          %v4630 = vld [vmem:[%s4450 + $0x598] sm:$0xff]
          %v4631 = vld [vmem:[%s4450 + $0x5a0] sm:$0xff]
          %v4632 = vld [vmem:[%s4450 + $0x5a8] sm:$0xff]
          %v4633 = vld [vmem:[%s4450 + $0x5b0] sm:$0xff]
          %v4634 = vld [vmem:[%s4450 + $0x5b8] sm:$0xff]
          %v4635 = vld [vmem:[%s4450 + $0x5c0] sm:$0xff]
          %v4636 = vld [vmem:[%s4450 + $0x5c8] sm:$0xff]
          %v4637 = vld [vmem:[%s4450 + $0x5d0] sm:$0xff]
          %v4638 = vld [vmem:[%s4450 + $0x5d8] sm:$0xff]
          %v4639 = vld [vmem:[%s4450 + $0x5e0] sm:$0xff]
          %v4640 = vld [vmem:[%s4450 + $0x5e8] sm:$0xff]
          %v4641 = vld [vmem:[%s4450 + $0x5f0] sm:$0xff]
          %v4642 = vld [vmem:[%s4450 + $0x5f8] sm:$0xff]
          %s4643 = scalar_lea.vmem %s266, 8 [#allocation9]
          %v4644 = vld [vmem:[%s4643] sm:$0xf]
          %v4646 = vlaneseq
          %v4647 = vshrl.u32 %v4646, 7
          %v4648 = vsub.s32 0, %v4647
          %v4649 = vrot.slane %v4644, %v4648
          %v4650 = vlaneseq
          %v4651 = vshrl.u32 %v4650, 7
          %v4652 = vsub.s32 1, %v4651
          %v4653 = vrot.slane %v4644, %v4652
          %v4654 = vlaneseq
          %v4655 = vshrl.u32 %v4654, 7
          %v4656 = vsub.s32 2, %v4655
          %v4657 = vrot.slane %v4644, %v4656
          %v4658 = vlaneseq
          %v4659 = vshrl.u32 %v4658, 7
          %v4660 = vsub.s32 3, %v4659
          %v4661 = vrot.slane %v4644, %v4660
          %v4858 = vunpack.c.l.b16 %v4451
          %v4859 = vunpack.c.h.b16 %v4451
          %v4860 = vunpack.c.l.b16 %v4452
          %v4861 = vunpack.c.h.b16 %v4452
          %v4862 = vunpack.c.l.b16 %v4453
          %v4863 = vunpack.c.h.b16 %v4453
          %v4864 = vunpack.c.l.b16 %v4454
          %v4865 = vunpack.c.h.b16 %v4454
          %v4866 = vunpack.c.l.b16 %v4455
          %v4867 = vunpack.c.h.b16 %v4455
          %v4868 = vunpack.c.l.b16 %v4456
          %v4869 = vunpack.c.h.b16 %v4456
          %v4870 = vunpack.c.l.b16 %v4457
          %v4871 = vunpack.c.h.b16 %v4457
          %v4872 = vunpack.c.l.b16 %v4458
          %v4873 = vunpack.c.h.b16 %v4458
          %v4874 = vunpack.c.l.b16 %v4459
          %v4875 = vunpack.c.h.b16 %v4459
          %v4876 = vunpack.c.l.b16 %v4460
          %v4877 = vunpack.c.h.b16 %v4460
          %v4878 = vunpack.c.l.b16 %v4461
          %v4879 = vunpack.c.h.b16 %v4461
          %v4880 = vunpack.c.l.b16 %v4462
          %v4881 = vunpack.c.h.b16 %v4462
          %v4882 = vunpack.c.l.b16 %v4463
          %v4883 = vunpack.c.h.b16 %v4463
          %v4884 = vunpack.c.l.b16 %v4464
          %v4885 = vunpack.c.h.b16 %v4464
          %v4886 = vunpack.c.l.b16 %v4465
          %v4887 = vunpack.c.h.b16 %v4465
          %v4888 = vunpack.c.l.b16 %v4466
          %v4889 = vunpack.c.h.b16 %v4466
          %v4890 = vunpack.c.l.b16 %v4467
          %v4891 = vunpack.c.h.b16 %v4467
          %v4892 = vunpack.c.l.b16 %v4468
          %v4893 = vunpack.c.h.b16 %v4468
          %v4894 = vunpack.c.l.b16 %v4469
          %v4895 = vunpack.c.h.b16 %v4469
          %v4896 = vunpack.c.l.b16 %v4470
          %v4897 = vunpack.c.h.b16 %v4470
          %v4898 = vunpack.c.l.b16 %v4471
          %v4899 = vunpack.c.h.b16 %v4471
          %v4900 = vunpack.c.l.b16 %v4472
          %v4901 = vunpack.c.h.b16 %v4472
          %v4902 = vunpack.c.l.b16 %v4473
          %v4903 = vunpack.c.h.b16 %v4473
          %v4904 = vunpack.c.l.b16 %v4474
          %v4905 = vunpack.c.h.b16 %v4474
          %v4906 = vunpack.c.l.b16 %v4475
          %v4907 = vunpack.c.h.b16 %v4475
          %v4908 = vunpack.c.l.b16 %v4476
          %v4909 = vunpack.c.h.b16 %v4476
          %v4910 = vunpack.c.l.b16 %v4477
          %v4911 = vunpack.c.h.b16 %v4477
          %v4912 = vunpack.c.l.b16 %v4478
          %v4913 = vunpack.c.h.b16 %v4478
          %v4914 = vunpack.c.l.b16 %v4479
          %v4915 = vunpack.c.h.b16 %v4479
          %v4916 = vunpack.c.l.b16 %v4480
          %v4917 = vunpack.c.h.b16 %v4480
          %v4918 = vunpack.c.l.b16 %v4481
          %v4919 = vunpack.c.h.b16 %v4481
          %v4920 = vunpack.c.l.b16 %v4482
          %v4921 = vunpack.c.h.b16 %v4482
          %v4922 = vunpack.c.l.b16 %v4483
          %v4923 = vunpack.c.h.b16 %v4483
          %v4924 = vunpack.c.l.b16 %v4484
          %v4925 = vunpack.c.h.b16 %v4484
          %v4926 = vunpack.c.l.b16 %v4485
          %v4927 = vunpack.c.h.b16 %v4485
          %v4928 = vunpack.c.l.b16 %v4486
          %v4929 = vunpack.c.h.b16 %v4486
          %v4930 = vunpack.c.l.b16 %v4487
          %v4931 = vunpack.c.h.b16 %v4487
          %v4932 = vunpack.c.l.b16 %v4488
          %v4933 = vunpack.c.h.b16 %v4488
          %v4934 = vunpack.c.l.b16 %v4489
          %v4935 = vunpack.c.h.b16 %v4489
          %v4936 = vunpack.c.l.b16 %v4490
          %v4937 = vunpack.c.h.b16 %v4490
          %v4938 = vunpack.c.l.b16 %v4491
          %v4939 = vunpack.c.h.b16 %v4491
          %v4940 = vunpack.c.l.b16 %v4492
          %v4941 = vunpack.c.h.b16 %v4492
          %v4942 = vunpack.c.l.b16 %v4493
          %v4943 = vunpack.c.h.b16 %v4493
          %v4944 = vunpack.c.l.b16 %v4494
          %v4945 = vunpack.c.h.b16 %v4494
          %v4946 = vunpack.c.l.b16 %v4495
          %v4947 = vunpack.c.h.b16 %v4495
          %v4948 = vunpack.c.l.b16 %v4496
          %v4949 = vunpack.c.h.b16 %v4496
          %v4950 = vunpack.c.l.b16 %v4497
          %v4951 = vunpack.c.h.b16 %v4497
          %v4952 = vunpack.c.l.b16 %v4498
          %v4953 = vunpack.c.h.b16 %v4498
          %v4954 = vunpack.c.l.b16 %v4499
          %v4955 = vunpack.c.h.b16 %v4499
          %v4956 = vunpack.c.l.b16 %v4500
          %v4957 = vunpack.c.h.b16 %v4500
          %v4958 = vunpack.c.l.b16 %v4501
          %v4959 = vunpack.c.h.b16 %v4501
          %v4960 = vunpack.c.l.b16 %v4502
          %v4961 = vunpack.c.h.b16 %v4502
          %v4962 = vunpack.c.l.b16 %v4503
          %v4963 = vunpack.c.h.b16 %v4503
          %v4964 = vunpack.c.l.b16 %v4504
          %v4965 = vunpack.c.h.b16 %v4504
          %v4966 = vunpack.c.l.b16 %v4505
          %v4967 = vunpack.c.h.b16 %v4505
          %v4968 = vunpack.c.l.b16 %v4506
          %v4969 = vunpack.c.h.b16 %v4506
          %v4970 = vunpack.c.l.b16 %v4507
          %v4971 = vunpack.c.h.b16 %v4507
          %v4972 = vunpack.c.l.b16 %v4508
          %v4973 = vunpack.c.h.b16 %v4508
          %v4974 = vunpack.c.l.b16 %v4509
          %v4975 = vunpack.c.h.b16 %v4509
          %v4976 = vunpack.c.l.b16 %v4510
          %v4977 = vunpack.c.h.b16 %v4510
          %v4978 = vunpack.c.l.b16 %v4511
          %v4979 = vunpack.c.h.b16 %v4511
          %v4980 = vunpack.c.l.b16 %v4512
          %v4981 = vunpack.c.h.b16 %v4512
          %v4982 = vunpack.c.l.b16 %v4513
          %v4983 = vunpack.c.h.b16 %v4513
          %v4984 = vunpack.c.l.b16 %v4514
          %v4985 = vunpack.c.h.b16 %v4514
          %v4986 = vunpack.c.l.b16 %v4515
          %v4987 = vunpack.c.h.b16 %v4515
          %v4988 = vunpack.c.l.b16 %v4516
          %v4989 = vunpack.c.h.b16 %v4516
          %v4990 = vunpack.c.l.b16 %v4517
          %v4991 = vunpack.c.h.b16 %v4517
          %v4992 = vunpack.c.l.b16 %v4518
          %v4993 = vunpack.c.h.b16 %v4518
          %v4994 = vunpack.c.l.b16 %v4519
          %v4995 = vunpack.c.h.b16 %v4519
          %v4996 = vunpack.c.l.b16 %v4520
          %v4997 = vunpack.c.h.b16 %v4520
          %v4998 = vunpack.c.l.b16 %v4521
          %v4999 = vunpack.c.h.b16 %v4521
          %v5000 = vunpack.c.l.b16 %v4522
          %v5001 = vunpack.c.h.b16 %v4522
          %v5002 = vunpack.c.l.b16 %v4523
          %v5003 = vunpack.c.h.b16 %v4523
          %v5004 = vunpack.c.l.b16 %v4524
          %v5005 = vunpack.c.h.b16 %v4524
          %v5006 = vunpack.c.l.b16 %v4525
          %v5007 = vunpack.c.h.b16 %v4525
          %v5008 = vunpack.c.l.b16 %v4526
          %v5009 = vunpack.c.h.b16 %v4526
          %v5010 = vunpack.c.l.b16 %v4527
          %v5011 = vunpack.c.h.b16 %v4527
          %v5012 = vunpack.c.l.b16 %v4528
          %v5013 = vunpack.c.h.b16 %v4528
          %v5014 = vunpack.c.l.b16 %v4529
          %v5015 = vunpack.c.h.b16 %v4529
          %v5016 = vunpack.c.l.b16 %v4530
          %v5017 = vunpack.c.h.b16 %v4530
          %v5018 = vunpack.c.l.b16 %v4531
          %v5019 = vunpack.c.h.b16 %v4531
          %v5020 = vunpack.c.l.b16 %v4532
          %v5021 = vunpack.c.h.b16 %v4532
          %v5022 = vunpack.c.l.b16 %v4533
          %v5023 = vunpack.c.h.b16 %v4533
          %v5024 = vunpack.c.l.b16 %v4534
          %v5025 = vunpack.c.h.b16 %v4534
          %v5026 = vunpack.c.l.b16 %v4535
          %v5027 = vunpack.c.h.b16 %v4535
          %v5028 = vunpack.c.l.b16 %v4536
          %v5029 = vunpack.c.h.b16 %v4536
          %v5030 = vunpack.c.l.b16 %v4537
          %v5031 = vunpack.c.h.b16 %v4537
          %v5032 = vunpack.c.l.b16 %v4538
          %v5033 = vunpack.c.h.b16 %v4538
          %v5034 = vunpack.c.l.b16 %v4539
          %v5035 = vunpack.c.h.b16 %v4539
          %v5036 = vunpack.c.l.b16 %v4540
          %v5037 = vunpack.c.h.b16 %v4540
          %v5038 = vunpack.c.l.b16 %v4541
          %v5039 = vunpack.c.h.b16 %v4541
          %v5040 = vunpack.c.l.b16 %v4542
          %v5041 = vunpack.c.h.b16 %v4542
          %v5042 = vunpack.c.l.b16 %v4543
          %v5043 = vunpack.c.h.b16 %v4543
          %v5044 = vunpack.c.l.b16 %v4544
          %v5045 = vunpack.c.h.b16 %v4544
          %v5046 = vunpack.c.l.b16 %v4545
          %v5047 = vunpack.c.h.b16 %v4545
          %v5048 = vunpack.c.l.b16 %v4546
          %v5049 = vunpack.c.h.b16 %v4546
          %v5050 = vunpack.c.l.b16 %v4547
          %v5051 = vunpack.c.h.b16 %v4547
          %v5052 = vunpack.c.l.b16 %v4548
          %v5053 = vunpack.c.h.b16 %v4548
          %v5054 = vunpack.c.l.b16 %v4549
          %v5055 = vunpack.c.h.b16 %v4549
          %v5056 = vunpack.c.l.b16 %v4550
          %v5057 = vunpack.c.h.b16 %v4550
          %v5058 = vunpack.c.l.b16 %v4551
          %v5059 = vunpack.c.h.b16 %v4551
          %v5060 = vunpack.c.l.b16 %v4552
          %v5061 = vunpack.c.h.b16 %v4552
          %v5062 = vunpack.c.l.b16 %v4553
          %v5063 = vunpack.c.h.b16 %v4553
          %v5064 = vunpack.c.l.b16 %v4554
          %v5065 = vunpack.c.h.b16 %v4554
          %v5066 = vunpack.c.l.b16 %v4555
          %v5067 = vunpack.c.h.b16 %v4555
          %v5068 = vunpack.c.l.b16 %v4556
          %v5069 = vunpack.c.h.b16 %v4556
          %v5070 = vunpack.c.l.b16 %v4557
          %v5071 = vunpack.c.h.b16 %v4557
          %v5072 = vunpack.c.l.b16 %v4558
          %v5073 = vunpack.c.h.b16 %v4558
          %v5074 = vunpack.c.l.b16 %v4559
          %v5075 = vunpack.c.h.b16 %v4559
          %v5076 = vunpack.c.l.b16 %v4560
          %v5077 = vunpack.c.h.b16 %v4560
          %v5078 = vunpack.c.l.b16 %v4561
          %v5079 = vunpack.c.h.b16 %v4561
          %v5080 = vunpack.c.l.b16 %v4562
          %v5081 = vunpack.c.h.b16 %v4562
          %v5082 = vunpack.c.l.b16 %v4563
          %v5083 = vunpack.c.h.b16 %v4563
          %v5084 = vunpack.c.l.b16 %v4564
          %v5085 = vunpack.c.h.b16 %v4564
          %v5086 = vunpack.c.l.b16 %v4565
          %v5087 = vunpack.c.h.b16 %v4565
          %v5088 = vunpack.c.l.b16 %v4566
          %v5089 = vunpack.c.h.b16 %v4566
          %v5090 = vunpack.c.l.b16 %v4567
          %v5091 = vunpack.c.h.b16 %v4567
          %v5092 = vunpack.c.l.b16 %v4568
          %v5093 = vunpack.c.h.b16 %v4568
          %v5094 = vunpack.c.l.b16 %v4569
          %v5095 = vunpack.c.h.b16 %v4569
          %v5096 = vunpack.c.l.b16 %v4570
          %v5097 = vunpack.c.h.b16 %v4570
          %v5098 = vunpack.c.l.b16 %v4571
          %v5099 = vunpack.c.h.b16 %v4571
          %v5100 = vunpack.c.l.b16 %v4572
          %v5101 = vunpack.c.h.b16 %v4572
          %v5102 = vunpack.c.l.b16 %v4573
          %v5103 = vunpack.c.h.b16 %v4573
          %v5104 = vunpack.c.l.b16 %v4574
          %v5105 = vunpack.c.h.b16 %v4574
          %v5106 = vunpack.c.l.b16 %v4575
          %v5107 = vunpack.c.h.b16 %v4575
          %v5108 = vunpack.c.l.b16 %v4576
          %v5109 = vunpack.c.h.b16 %v4576
          %v5110 = vunpack.c.l.b16 %v4577
          %v5111 = vunpack.c.h.b16 %v4577
          %v5112 = vunpack.c.l.b16 %v4578
          %v5113 = vunpack.c.h.b16 %v4578
          %v5114 = vunpack.c.l.b16 %v4579
          %v5115 = vunpack.c.h.b16 %v4579
          %v5116 = vunpack.c.l.b16 %v4580
          %v5117 = vunpack.c.h.b16 %v4580
          %v5118 = vunpack.c.l.b16 %v4581
          %v5119 = vunpack.c.h.b16 %v4581
          %v5120 = vunpack.c.l.b16 %v4582
          %v5121 = vunpack.c.h.b16 %v4582
          %v5122 = vunpack.c.l.b16 %v4583
          %v5123 = vunpack.c.h.b16 %v4583
          %v5124 = vunpack.c.l.b16 %v4584
          %v5125 = vunpack.c.h.b16 %v4584
          %v5126 = vunpack.c.l.b16 %v4585
          %v5127 = vunpack.c.h.b16 %v4585
          %v5128 = vunpack.c.l.b16 %v4586
          %v5129 = vunpack.c.h.b16 %v4586
          %v5130 = vunpack.c.l.b16 %v4587
          %v5131 = vunpack.c.h.b16 %v4587
          %v5132 = vunpack.c.l.b16 %v4588
          %v5133 = vunpack.c.h.b16 %v4588
          %v5134 = vunpack.c.l.b16 %v4589
          %v5135 = vunpack.c.h.b16 %v4589
          %v5136 = vunpack.c.l.b16 %v4590
          %v5137 = vunpack.c.h.b16 %v4590
          %v5138 = vunpack.c.l.b16 %v4591
          %v5139 = vunpack.c.h.b16 %v4591
          %v5140 = vunpack.c.l.b16 %v4592
          %v5141 = vunpack.c.h.b16 %v4592
          %v5142 = vunpack.c.l.b16 %v4593
          %v5143 = vunpack.c.h.b16 %v4593
          %v5144 = vunpack.c.l.b16 %v4594
          %v5145 = vunpack.c.h.b16 %v4594
          %v5146 = vunpack.c.l.b16 %v4595
          %v5147 = vunpack.c.h.b16 %v4595
          %v5148 = vunpack.c.l.b16 %v4596
          %v5149 = vunpack.c.h.b16 %v4596
          %v5150 = vunpack.c.l.b16 %v4597
          %v5151 = vunpack.c.h.b16 %v4597
          %v5152 = vunpack.c.l.b16 %v4598
          %v5153 = vunpack.c.h.b16 %v4598
          %v5154 = vunpack.c.l.b16 %v4599
          %v5155 = vunpack.c.h.b16 %v4599
          %v5156 = vunpack.c.l.b16 %v4600
          %v5157 = vunpack.c.h.b16 %v4600
          %v5158 = vunpack.c.l.b16 %v4601
          %v5159 = vunpack.c.h.b16 %v4601
          %v5160 = vunpack.c.l.b16 %v4602
          %v5161 = vunpack.c.h.b16 %v4602
          %v5162 = vunpack.c.l.b16 %v4603
          %v5163 = vunpack.c.h.b16 %v4603
          %v5164 = vunpack.c.l.b16 %v4604
          %v5165 = vunpack.c.h.b16 %v4604
          %v5166 = vunpack.c.l.b16 %v4605
          %v5167 = vunpack.c.h.b16 %v4605
          %v5168 = vunpack.c.l.b16 %v4606
          %v5169 = vunpack.c.h.b16 %v4606
          %v5170 = vunpack.c.l.b16 %v4607
          %v5171 = vunpack.c.h.b16 %v4607
          %v5172 = vunpack.c.l.b16 %v4608
          %v5173 = vunpack.c.h.b16 %v4608
          %v5174 = vunpack.c.l.b16 %v4609
          %v5175 = vunpack.c.h.b16 %v4609
          %v5176 = vunpack.c.l.b16 %v4610
          %v5177 = vunpack.c.h.b16 %v4610
          %v5178 = vunpack.c.l.b16 %v4611
          %v5179 = vunpack.c.h.b16 %v4611
          %v5180 = vunpack.c.l.b16 %v4612
          %v5181 = vunpack.c.h.b16 %v4612
          %v5182 = vunpack.c.l.b16 %v4613
          %v5183 = vunpack.c.h.b16 %v4613
          %v5184 = vunpack.c.l.b16 %v4614
          %v5185 = vunpack.c.h.b16 %v4614
          %v5186 = vunpack.c.l.b16 %v4615
          %v5187 = vunpack.c.h.b16 %v4615
          %v5188 = vunpack.c.l.b16 %v4616
          %v5189 = vunpack.c.h.b16 %v4616
          %v5190 = vunpack.c.l.b16 %v4617
          %v5191 = vunpack.c.h.b16 %v4617
          %v5192 = vunpack.c.l.b16 %v4618
          %v5193 = vunpack.c.h.b16 %v4618
          %v5194 = vunpack.c.l.b16 %v4619
          %v5195 = vunpack.c.h.b16 %v4619
          %v5196 = vunpack.c.l.b16 %v4620
          %v5197 = vunpack.c.h.b16 %v4620
          %v5198 = vunpack.c.l.b16 %v4621
          %v5199 = vunpack.c.h.b16 %v4621
          %v5200 = vunpack.c.l.b16 %v4622
          %v5201 = vunpack.c.h.b16 %v4622
          %v5202 = vunpack.c.l.b16 %v4623
          %v5203 = vunpack.c.h.b16 %v4623
          %v5204 = vunpack.c.l.b16 %v4624
          %v5205 = vunpack.c.h.b16 %v4624
          %v5206 = vunpack.c.l.b16 %v4625
          %v5207 = vunpack.c.h.b16 %v4625
          %v5208 = vunpack.c.l.b16 %v4626
          %v5209 = vunpack.c.h.b16 %v4626
          %v5210 = vunpack.c.l.b16 %v4627
          %v5211 = vunpack.c.h.b16 %v4627
          %v5212 = vunpack.c.l.b16 %v4628
          %v5213 = vunpack.c.h.b16 %v4628
          %v5214 = vunpack.c.l.b16 %v4629
          %v5215 = vunpack.c.h.b16 %v4629
          %v5216 = vunpack.c.l.b16 %v4630
          %v5217 = vunpack.c.h.b16 %v4630
          %v5218 = vunpack.c.l.b16 %v4631
          %v5219 = vunpack.c.h.b16 %v4631
          %v5220 = vunpack.c.l.b16 %v4632
          %v5221 = vunpack.c.h.b16 %v4632
          %v5222 = vunpack.c.l.b16 %v4633
          %v5223 = vunpack.c.h.b16 %v4633
          %v5224 = vunpack.c.l.b16 %v4634
          %v5225 = vunpack.c.h.b16 %v4634
          %v5226 = vunpack.c.l.b16 %v4635
          %v5227 = vunpack.c.h.b16 %v4635
          %v5228 = vunpack.c.l.b16 %v4636
          %v5229 = vunpack.c.h.b16 %v4636
          %v5230 = vunpack.c.l.b16 %v4637
          %v5231 = vunpack.c.h.b16 %v4637
          %v5232 = vunpack.c.l.b16 %v4638
          %v5233 = vunpack.c.h.b16 %v4638
          %v5234 = vunpack.c.l.b16 %v4639
          %v5235 = vunpack.c.h.b16 %v4639
          %v5236 = vunpack.c.l.b16 %v4640
          %v5237 = vunpack.c.h.b16 %v4640
          %v5238 = vunpack.c.l.b16 %v4641
          %v5239 = vunpack.c.h.b16 %v4641
          %v5240 = vunpack.c.l.b16 %v4642
          %v5241 = vunpack.c.h.b16 %v4642
          %v5242 = vpack.c.b16 %v4862, %v4858
          %v5243 = vpack.c.b16 %v4863, %v4859
          %v5244 = vpack.c.b16 %v4864, %v4860
          %v5245 = vpack.c.b16 %v4865, %v4861
          %v5246 = vpack.c.b16 %v4870, %v4866
          %v5247 = vpack.c.b16 %v4871, %v4867
          %v5248 = vpack.c.b16 %v4872, %v4868
          %v5249 = vpack.c.b16 %v4873, %v4869
          %v5250 = vpack.c.b16 %v4878, %v4874
          %v5251 = vpack.c.b16 %v4879, %v4875
          %v5252 = vpack.c.b16 %v4880, %v4876
          %v5253 = vpack.c.b16 %v4881, %v4877
          %v5254 = vpack.c.b16 %v4886, %v4882
          %v5255 = vpack.c.b16 %v4887, %v4883
          %v5256 = vpack.c.b16 %v4888, %v4884
          %v5257 = vpack.c.b16 %v4889, %v4885
          %v5258 = vpack.c.b16 %v4894, %v4890
          %v5259 = vpack.c.b16 %v4895, %v4891
          %v5260 = vpack.c.b16 %v4896, %v4892
          %v5261 = vpack.c.b16 %v4897, %v4893
          %v5262 = vpack.c.b16 %v4902, %v4898
          %v5263 = vpack.c.b16 %v4903, %v4899
          %v5264 = vpack.c.b16 %v4904, %v4900
          %v5265 = vpack.c.b16 %v4905, %v4901
          %v5266 = vpack.c.b16 %v4910, %v4906
          %v5267 = vpack.c.b16 %v4911, %v4907
          %v5268 = vpack.c.b16 %v4912, %v4908
          %v5269 = vpack.c.b16 %v4913, %v4909
          %v5270 = vpack.c.b16 %v4918, %v4914
          %v5271 = vpack.c.b16 %v4919, %v4915
          %v5272 = vpack.c.b16 %v4920, %v4916
          %v5273 = vpack.c.b16 %v4921, %v4917
          %v5274 = vpack.c.b16 %v4926, %v4922
          %v5275 = vpack.c.b16 %v4927, %v4923
          %v5276 = vpack.c.b16 %v4928, %v4924
          %v5277 = vpack.c.b16 %v4929, %v4925
          %v5278 = vpack.c.b16 %v4934, %v4930
          %v5279 = vpack.c.b16 %v4935, %v4931
          %v5280 = vpack.c.b16 %v4936, %v4932
          %v5281 = vpack.c.b16 %v4937, %v4933
          %v5282 = vpack.c.b16 %v4942, %v4938
          %v5283 = vpack.c.b16 %v4943, %v4939
          %v5284 = vpack.c.b16 %v4944, %v4940
          %v5285 = vpack.c.b16 %v4945, %v4941
          %v5286 = vpack.c.b16 %v4950, %v4946
          %v5287 = vpack.c.b16 %v4951, %v4947
          %v5288 = vpack.c.b16 %v4952, %v4948
          %v5289 = vpack.c.b16 %v4953, %v4949
          %v5290 = vpack.c.b16 %v4958, %v4954
          %v5291 = vpack.c.b16 %v4959, %v4955
          %v5292 = vpack.c.b16 %v4960, %v4956
          %v5293 = vpack.c.b16 %v4961, %v4957
          %v5294 = vpack.c.b16 %v4966, %v4962
          %v5295 = vpack.c.b16 %v4967, %v4963
          %v5296 = vpack.c.b16 %v4968, %v4964
          %v5297 = vpack.c.b16 %v4969, %v4965
          %v5298 = vpack.c.b16 %v4974, %v4970
          %v5299 = vpack.c.b16 %v4975, %v4971
          %v5300 = vpack.c.b16 %v4976, %v4972
          %v5301 = vpack.c.b16 %v4977, %v4973
          %v5302 = vpack.c.b16 %v4982, %v4978
          %v5303 = vpack.c.b16 %v4983, %v4979
          %v5304 = vpack.c.b16 %v4984, %v4980
          %v5305 = vpack.c.b16 %v4985, %v4981
          %v5306 = vpack.c.b16 %v4990, %v4986
          %v5307 = vpack.c.b16 %v4991, %v4987
          %v5308 = vpack.c.b16 %v4992, %v4988
          %v5309 = vpack.c.b16 %v4993, %v4989
          %v5310 = vpack.c.b16 %v4998, %v4994
          %v5311 = vpack.c.b16 %v4999, %v4995
          %v5312 = vpack.c.b16 %v5000, %v4996
          %v5313 = vpack.c.b16 %v5001, %v4997
          %v5314 = vpack.c.b16 %v5006, %v5002
          %v5315 = vpack.c.b16 %v5007, %v5003
          %v5316 = vpack.c.b16 %v5008, %v5004
          %v5317 = vpack.c.b16 %v5009, %v5005
          %v5318 = vpack.c.b16 %v5014, %v5010
          %v5319 = vpack.c.b16 %v5015, %v5011
          %v5320 = vpack.c.b16 %v5016, %v5012
          %v5321 = vpack.c.b16 %v5017, %v5013
          %v5322 = vpack.c.b16 %v5022, %v5018
          %v5323 = vpack.c.b16 %v5023, %v5019
          %v5324 = vpack.c.b16 %v5024, %v5020
          %v5325 = vpack.c.b16 %v5025, %v5021
          %v5326 = vpack.c.b16 %v5030, %v5026
          %v5327 = vpack.c.b16 %v5031, %v5027
          %v5328 = vpack.c.b16 %v5032, %v5028
          %v5329 = vpack.c.b16 %v5033, %v5029
          %v5330 = vpack.c.b16 %v5038, %v5034
          %v5331 = vpack.c.b16 %v5039, %v5035
          %v5332 = vpack.c.b16 %v5040, %v5036
          %v5333 = vpack.c.b16 %v5041, %v5037
          %v5334 = vpack.c.b16 %v5046, %v5042
          %v5335 = vpack.c.b16 %v5047, %v5043
          %v5336 = vpack.c.b16 %v5048, %v5044
          %v5337 = vpack.c.b16 %v5049, %v5045
          %v5338 = vpack.c.b16 %v5054, %v5050
          %v5339 = vpack.c.b16 %v5055, %v5051
          %v5340 = vpack.c.b16 %v5056, %v5052
          %v5341 = vpack.c.b16 %v5057, %v5053
          %v5342 = vpack.c.b16 %v5062, %v5058
          %v5343 = vpack.c.b16 %v5063, %v5059
          %v5344 = vpack.c.b16 %v5064, %v5060
          %v5345 = vpack.c.b16 %v5065, %v5061
          %v5346 = vpack.c.b16 %v5070, %v5066
          %v5347 = vpack.c.b16 %v5071, %v5067
          %v5348 = vpack.c.b16 %v5072, %v5068
          %v5349 = vpack.c.b16 %v5073, %v5069
          %v5350 = vpack.c.b16 %v5078, %v5074
          %v5351 = vpack.c.b16 %v5079, %v5075
          %v5352 = vpack.c.b16 %v5080, %v5076
          %v5353 = vpack.c.b16 %v5081, %v5077
          %v5354 = vpack.c.b16 %v5086, %v5082
          %v5355 = vpack.c.b16 %v5087, %v5083
          %v5356 = vpack.c.b16 %v5088, %v5084
          %v5357 = vpack.c.b16 %v5089, %v5085
          %v5358 = vpack.c.b16 %v5094, %v5090
          %v5359 = vpack.c.b16 %v5095, %v5091
          %v5360 = vpack.c.b16 %v5096, %v5092
          %v5361 = vpack.c.b16 %v5097, %v5093
          %v5362 = vpack.c.b16 %v5102, %v5098
          %v5363 = vpack.c.b16 %v5103, %v5099
          %v5364 = vpack.c.b16 %v5104, %v5100
          %v5365 = vpack.c.b16 %v5105, %v5101
          %v5366 = vpack.c.b16 %v5110, %v5106
          %v5367 = vpack.c.b16 %v5111, %v5107
          %v5368 = vpack.c.b16 %v5112, %v5108
          %v5369 = vpack.c.b16 %v5113, %v5109
          %v5370 = vpack.c.b16 %v5118, %v5114
          %v5371 = vpack.c.b16 %v5119, %v5115
          %v5372 = vpack.c.b16 %v5120, %v5116
          %v5373 = vpack.c.b16 %v5121, %v5117
          %v5374 = vpack.c.b16 %v5126, %v5122
          %v5375 = vpack.c.b16 %v5127, %v5123
          %v5376 = vpack.c.b16 %v5128, %v5124
          %v5377 = vpack.c.b16 %v5129, %v5125
          %v5378 = vpack.c.b16 %v5134, %v5130
          %v5379 = vpack.c.b16 %v5135, %v5131
          %v5380 = vpack.c.b16 %v5136, %v5132
          %v5381 = vpack.c.b16 %v5137, %v5133
          %v5382 = vpack.c.b16 %v5142, %v5138
          %v5383 = vpack.c.b16 %v5143, %v5139
          %v5384 = vpack.c.b16 %v5144, %v5140
          %v5385 = vpack.c.b16 %v5145, %v5141
          %v5386 = vpack.c.b16 %v5150, %v5146
          %v5387 = vpack.c.b16 %v5151, %v5147
          %v5388 = vpack.c.b16 %v5152, %v5148
          %v5389 = vpack.c.b16 %v5153, %v5149
          %v5390 = vpack.c.b16 %v5158, %v5154
          %v5391 = vpack.c.b16 %v5159, %v5155
          %v5392 = vpack.c.b16 %v5160, %v5156
          %v5393 = vpack.c.b16 %v5161, %v5157
          %v5394 = vpack.c.b16 %v5166, %v5162
          %v5395 = vpack.c.b16 %v5167, %v5163
          %v5396 = vpack.c.b16 %v5168, %v5164
          %v5397 = vpack.c.b16 %v5169, %v5165
          %v5398 = vpack.c.b16 %v5174, %v5170
          %v5399 = vpack.c.b16 %v5175, %v5171
          %v5400 = vpack.c.b16 %v5176, %v5172
          %v5401 = vpack.c.b16 %v5177, %v5173
          %v5402 = vpack.c.b16 %v5182, %v5178
          %v5403 = vpack.c.b16 %v5183, %v5179
          %v5404 = vpack.c.b16 %v5184, %v5180
          %v5405 = vpack.c.b16 %v5185, %v5181
          %v5406 = vpack.c.b16 %v5190, %v5186
          %v5407 = vpack.c.b16 %v5191, %v5187
          %v5408 = vpack.c.b16 %v5192, %v5188
          %v5409 = vpack.c.b16 %v5193, %v5189
          %v5410 = vpack.c.b16 %v5198, %v5194
          %v5411 = vpack.c.b16 %v5199, %v5195
          %v5412 = vpack.c.b16 %v5200, %v5196
          %v5413 = vpack.c.b16 %v5201, %v5197
          %v5414 = vpack.c.b16 %v5206, %v5202
          %v5415 = vpack.c.b16 %v5207, %v5203
          %v5416 = vpack.c.b16 %v5208, %v5204
          %v5417 = vpack.c.b16 %v5209, %v5205
          %v5418 = vpack.c.b16 %v5214, %v5210
          %v5419 = vpack.c.b16 %v5215, %v5211
          %v5420 = vpack.c.b16 %v5216, %v5212
          %v5421 = vpack.c.b16 %v5217, %v5213
          %v5422 = vpack.c.b16 %v5222, %v5218
          %v5423 = vpack.c.b16 %v5223, %v5219
          %v5424 = vpack.c.b16 %v5224, %v5220
          %v5425 = vpack.c.b16 %v5225, %v5221
          %v5426 = vpack.c.b16 %v5230, %v5226
          %v5427 = vpack.c.b16 %v5231, %v5227
          %v5428 = vpack.c.b16 %v5232, %v5228
          %v5429 = vpack.c.b16 %v5233, %v5229
          %v5430 = vpack.c.b16 %v5238, %v5234
          %v5431 = vpack.c.b16 %v5239, %v5235
          %v5432 = vpack.c.b16 %v5240, %v5236
          %v5433 = vpack.c.b16 %v5241, %v5237
          %5626 = vmatprep.subr.bf16.mxu0 %v5271
          %5627 = vmatpush1.bf16.msra.mxu0 %v5270
          %5628 = vmatprep.subr.bf16.mxu0 %v5267
          %5629 = vmatpush1.bf16.msra.mxu0 %v5266
          %5630 = vmatprep.subr.bf16.mxu0 %v5263
          %5631 = vmatpush1.bf16.msra.mxu0 %v5262
          %5632 = vmatprep.subr.bf16.mxu0 %v5259
          %5633 = vmatpush1.bf16.msra.mxu0 %v5258
          %5634 = vmatprep.subr.bf16.mxu0 %v5255
          %5635 = vmatpush1.bf16.msra.mxu0 %v5254
          %5636 = vmatprep.subr.bf16.mxu0 %v5251
          %5637 = vmatpush1.bf16.msra.mxu0 %v5250
          %5638 = vmatprep.subr.bf16.mxu0 %v5247
          %5639 = vmatpush1.bf16.msra.mxu0 %v5246
          %5640 = vmatprep.subr.bf16.mxu0 %v5243
          %5641 = vmatpush1.bf16.msra.mxu0 %v5242
          %5642 = vmatprep.subr.bf16.mxu0 %v5303
          %5643 = vmatpush2.bf16.msra.mxu0 %v5302
          %5644 = vmatprep.subr.bf16.mxu0 %v5299
          %5645 = vmatpush2.bf16.msra.mxu0 %v5298
          %5646 = vmatprep.subr.bf16.mxu0 %v5295
          %5647 = vmatpush2.bf16.msra.mxu0 %v5294
          %5648 = vmatprep.subr.bf16.mxu0 %v5291
          %5649 = vmatpush2.bf16.msra.mxu0 %v5290
          %5650 = vmatprep.subr.bf16.mxu0 %v5287
          %5651 = vmatpush2.bf16.msra.mxu0 %v5286
          %5652 = vmatprep.subr.bf16.mxu0 %v5283
          %5653 = vmatpush2.bf16.msra.mxu0 %v5282
          %5654 = vmatprep.subr.bf16.mxu0 %v5279
          %5655 = vmatpush2.bf16.msra.mxu0 %v5278
          %5656 = vmatprep.subr.bf16.mxu0 %v5275
          %5657 = vmatpush2.bf16.msra.mxu0 %v5274
          %5658 = vmatprep.mubr.bf16.mxu0 %v4445
          %5659 = vmatmul.mubr.bf16.gmra.mxu0 %v4444
          %v5660 = vpop.f32.mrf.mxu0
          %v5661 = vadd.f32 %v4649, %v5660
          %v5662 = vpop.f32.mrf.mxu0
          %v5663 = vadd.f32 %v4653, %v5662
          %v5664 = vpop.f32.mrf.mxu0
          %v5665 = vpop.f32.mrf.mxu0
          %5666 = vdwg.mxu0
          %5667 = vmatprep.subr.bf16.mxu0 %v5335
          %5668 = vmatpush1.bf16.msra.mxu0 %v5334
          %5669 = vmatprep.subr.bf16.mxu0 %v5331
          %5670 = vmatpush1.bf16.msra.mxu0 %v5330
          %5671 = vmatprep.subr.bf16.mxu0 %v5327
          %5672 = vmatpush1.bf16.msra.mxu0 %v5326
          %5673 = vmatprep.subr.bf16.mxu0 %v5323
          %5674 = vmatpush1.bf16.msra.mxu0 %v5322
          %5675 = vmatprep.subr.bf16.mxu0 %v5319
          %5676 = vmatpush1.bf16.msra.mxu0 %v5318
          %5677 = vmatprep.subr.bf16.mxu0 %v5315
          %5678 = vmatpush1.bf16.msra.mxu0 %v5314
          %5679 = vmatprep.subr.bf16.mxu0 %v5311
          %5680 = vmatpush1.bf16.msra.mxu0 %v5310
          %5681 = vmatprep.subr.bf16.mxu0 %v5307
          %5682 = vmatpush1.bf16.msra.mxu0 %v5306
          %5683 = vmatprep.subr.bf16.mxu0 %v5367
          %5684 = vmatpush2.bf16.msra.mxu0 %v5366
          %5685 = vmatprep.subr.bf16.mxu0 %v5363
          %5686 = vmatpush2.bf16.msra.mxu0 %v5362
          %5687 = vmatprep.subr.bf16.mxu0 %v5359
          %5688 = vmatpush2.bf16.msra.mxu0 %v5358
          %5689 = vmatprep.subr.bf16.mxu0 %v5355
          %5690 = vmatpush2.bf16.msra.mxu0 %v5354
          %5691 = vmatprep.subr.bf16.mxu0 %v5351
          %5692 = vmatpush2.bf16.msra.mxu0 %v5350
          %5693 = vmatprep.subr.bf16.mxu0 %v5347
          %5694 = vmatpush2.bf16.msra.mxu0 %v5346
          %5695 = vmatprep.subr.bf16.mxu0 %v5343
          %5696 = vmatpush2.bf16.msra.mxu0 %v5342
          %5697 = vmatprep.subr.bf16.mxu0 %v5339
          %5698 = vmatpush2.bf16.msra.mxu0 %v5338
          %5699 = vmatprep.mubr.bf16.mxu0 %v4447
          %5700 = vmatmul.mubr.bf16.gmra.mxu0 %v4446
          %v5701 = vpop.f32.mrf.mxu0
          %v5702 = vadd.f32 %v5661, %v5701
          %v5703 = vpop.f32.mrf.mxu0
          %v5704 = vadd.f32 %v5663, %v5703
          %v5705 = vpop.f32.mrf.mxu0
          %v5706 = vpop.f32.mrf.mxu0
          %5707 = vdwg.mxu0
          %5708 = vmatprep.subr.bf16.mxu0 %v5399
          %5709 = vmatpush1.bf16.msra.mxu0 %v5398
          %5710 = vmatprep.subr.bf16.mxu0 %v5395
          %5711 = vmatpush1.bf16.msra.mxu0 %v5394
          %5712 = vmatprep.subr.bf16.mxu0 %v5391
          %5713 = vmatpush1.bf16.msra.mxu0 %v5390
          %5714 = vmatprep.subr.bf16.mxu0 %v5387
          %5715 = vmatpush1.bf16.msra.mxu0 %v5386
          %5716 = vmatprep.subr.bf16.mxu0 %v5383
          %5717 = vmatpush1.bf16.msra.mxu0 %v5382
          %5718 = vmatprep.subr.bf16.mxu0 %v5379
          %5719 = vmatpush1.bf16.msra.mxu0 %v5378
          %5720 = vmatprep.subr.bf16.mxu0 %v5375
          %5721 = vmatpush1.bf16.msra.mxu0 %v5374
          %5722 = vmatprep.subr.bf16.mxu0 %v5371
          %5723 = vmatpush1.bf16.msra.mxu0 %v5370
          %5724 = vmatprep.subr.bf16.mxu0 %v5431
          %5725 = vmatpush2.bf16.msra.mxu0 %v5430
          %5726 = vmatprep.subr.bf16.mxu0 %v5427
          %5727 = vmatpush2.bf16.msra.mxu0 %v5426
          %5728 = vmatprep.subr.bf16.mxu0 %v5423
          %5729 = vmatpush2.bf16.msra.mxu0 %v5422
          %5730 = vmatprep.subr.bf16.mxu0 %v5419
          %5731 = vmatpush2.bf16.msra.mxu0 %v5418
          %5732 = vmatprep.subr.bf16.mxu0 %v5415
          %5733 = vmatpush2.bf16.msra.mxu0 %v5414
          %5734 = vmatprep.subr.bf16.mxu0 %v5411
          %5735 = vmatpush2.bf16.msra.mxu0 %v5410
          %5736 = vmatprep.subr.bf16.mxu0 %v5407
          %5737 = vmatpush2.bf16.msra.mxu0 %v5406
          %5738 = vmatprep.subr.bf16.mxu0 %v5403
          %5739 = vmatpush2.bf16.msra.mxu0 %v5402
          %5740 = vmatprep.mubr.bf16.mxu0 %v4449
          %5741 = vmatmul.mubr.bf16.gmra.mxu0 %v4448
          %v5742 = vpop.f32.mrf.mxu0
          %v5743 = vadd.f32 %v5702, %v5742
          %v5744 = vpop.f32.mrf.mxu0
          %v5745 = vadd.f32 %v5704, %v5744
          %v5746 = vpop.f32.mrf.mxu0
          %v5747 = vpop.f32.mrf.mxu0
          %5748 = vdwg.mxu0
          %5749 = vmatprep.subr.bf16.mxu0 %v5273
          %5750 = vmatpush1.bf16.msra.mxu0 %v5272
          %5751 = vmatprep.subr.bf16.mxu0 %v5269
          %5752 = vmatpush1.bf16.msra.mxu0 %v5268
          %5753 = vmatprep.subr.bf16.mxu0 %v5265
          %5754 = vmatpush1.bf16.msra.mxu0 %v5264
          %5755 = vmatprep.subr.bf16.mxu0 %v5261
          %5756 = vmatpush1.bf16.msra.mxu0 %v5260
          %5757 = vmatprep.subr.bf16.mxu0 %v5257
          %5758 = vmatpush1.bf16.msra.mxu0 %v5256
          %5759 = vmatprep.subr.bf16.mxu0 %v5253
          %5760 = vmatpush1.bf16.msra.mxu0 %v5252
          %5761 = vmatprep.subr.bf16.mxu0 %v5249
          %5762 = vmatpush1.bf16.msra.mxu0 %v5248
          %5763 = vmatprep.subr.bf16.mxu0 %v5245
          %5764 = vmatpush1.bf16.msra.mxu0 %v5244
          %5765 = vmatprep.subr.bf16.mxu0 %v5305
          %5766 = vmatpush2.bf16.msra.mxu0 %v5304
          %5767 = vmatprep.subr.bf16.mxu0 %v5301
          %5768 = vmatpush2.bf16.msra.mxu0 %v5300
          %5769 = vmatprep.subr.bf16.mxu0 %v5297
          %5770 = vmatpush2.bf16.msra.mxu0 %v5296
          %5771 = vmatprep.subr.bf16.mxu0 %v5293
          %5772 = vmatpush2.bf16.msra.mxu0 %v5292
          %5773 = vmatprep.subr.bf16.mxu0 %v5289
          %5774 = vmatpush2.bf16.msra.mxu0 %v5288
          %5775 = vmatprep.subr.bf16.mxu0 %v5285
          %5776 = vmatpush2.bf16.msra.mxu0 %v5284
          %5777 = vmatprep.subr.bf16.mxu0 %v5281
          %5778 = vmatpush2.bf16.msra.mxu0 %v5280
          %5779 = vmatprep.subr.bf16.mxu0 %v5277
          %5780 = vmatpush2.bf16.msra.mxu0 %v5276
          %5781 = vmatprep.mubr.bf16.mxu0 %v4445
          %5782 = vmatmul.mubr.bf16.gmra.mxu0 %v4444
          %v5783 = vpop.f32.mrf.mxu0
          %v5784 = vadd.f32 %v4657, %v5783
          %v5785 = vpop.f32.mrf.mxu0
          %v5786 = vadd.f32 %v4661, %v5785
          %v5787 = vpop.f32.mrf.mxu0
          %v5788 = vpop.f32.mrf.mxu0
          %5789 = vdwg.mxu0
          %5790 = vmatprep.subr.bf16.mxu0 %v5337
          %5791 = vmatpush1.bf16.msra.mxu0 %v5336
          %5792 = vmatprep.subr.bf16.mxu0 %v5333
          %5793 = vmatpush1.bf16.msra.mxu0 %v5332
          %5794 = vmatprep.subr.bf16.mxu0 %v5329
          %5795 = vmatpush1.bf16.msra.mxu0 %v5328
          %5796 = vmatprep.subr.bf16.mxu0 %v5325
          %5797 = vmatpush1.bf16.msra.mxu0 %v5324
          %5798 = vmatprep.subr.bf16.mxu0 %v5321
          %5799 = vmatpush1.bf16.msra.mxu0 %v5320
          %5800 = vmatprep.subr.bf16.mxu0 %v5317
          %5801 = vmatpush1.bf16.msra.mxu0 %v5316
          %5802 = vmatprep.subr.bf16.mxu0 %v5313
          %5803 = vmatpush1.bf16.msra.mxu0 %v5312
          %5804 = vmatprep.subr.bf16.mxu0 %v5309
          %5805 = vmatpush1.bf16.msra.mxu0 %v5308
          %5806 = vmatprep.subr.bf16.mxu0 %v5369
          %5807 = vmatpush2.bf16.msra.mxu0 %v5368
          %5808 = vmatprep.subr.bf16.mxu0 %v5365
          %5809 = vmatpush2.bf16.msra.mxu0 %v5364
          %5810 = vmatprep.subr.bf16.mxu0 %v5361
          %5811 = vmatpush2.bf16.msra.mxu0 %v5360
          %5812 = vmatprep.subr.bf16.mxu0 %v5357
          %5813 = vmatpush2.bf16.msra.mxu0 %v5356
          %5814 = vmatprep.subr.bf16.mxu0 %v5353
          %5815 = vmatpush2.bf16.msra.mxu0 %v5352
          %5816 = vmatprep.subr.bf16.mxu0 %v5349
          %5817 = vmatpush2.bf16.msra.mxu0 %v5348
          %5818 = vmatprep.subr.bf16.mxu0 %v5345
          %5819 = vmatpush2.bf16.msra.mxu0 %v5344
          %5820 = vmatprep.subr.bf16.mxu0 %v5341
          %5821 = vmatpush2.bf16.msra.mxu0 %v5340
          %5822 = vmatprep.mubr.bf16.mxu0 %v4447
          %5823 = vmatmul.mubr.bf16.gmra.mxu0 %v4446
          %v5824 = vpop.f32.mrf.mxu0
          %v5825 = vadd.f32 %v5784, %v5824
          %v5826 = vpop.f32.mrf.mxu0
          %v5827 = vadd.f32 %v5786, %v5826
          %v5828 = vpop.f32.mrf.mxu0
          %v5829 = vpop.f32.mrf.mxu0
          %5830 = vdwg.mxu0
          %5831 = vmatprep.subr.bf16.mxu0 %v5401
          %5832 = vmatpush1.bf16.msra.mxu0 %v5400
          %5833 = vmatprep.subr.bf16.mxu0 %v5397
          %5834 = vmatpush1.bf16.msra.mxu0 %v5396
          %5835 = vmatprep.subr.bf16.mxu0 %v5393
          %5836 = vmatpush1.bf16.msra.mxu0 %v5392
          %5837 = vmatprep.subr.bf16.mxu0 %v5389
          %5838 = vmatpush1.bf16.msra.mxu0 %v5388
          %5839 = vmatprep.subr.bf16.mxu0 %v5385
          %5840 = vmatpush1.bf16.msra.mxu0 %v5384
          %5841 = vmatprep.subr.bf16.mxu0 %v5381
          %5842 = vmatpush1.bf16.msra.mxu0 %v5380
          %5843 = vmatprep.subr.bf16.mxu0 %v5377
          %5844 = vmatpush1.bf16.msra.mxu0 %v5376
          %5845 = vmatprep.subr.bf16.mxu0 %v5373
          %5846 = vmatpush1.bf16.msra.mxu0 %v5372
          %5847 = vmatprep.subr.bf16.mxu0 %v5433
          %5848 = vmatpush2.bf16.msra.mxu0 %v5432
          %5849 = vmatprep.subr.bf16.mxu0 %v5429
          %5850 = vmatpush2.bf16.msra.mxu0 %v5428
          %5851 = vmatprep.subr.bf16.mxu0 %v5425
          %5852 = vmatpush2.bf16.msra.mxu0 %v5424
          %5853 = vmatprep.subr.bf16.mxu0 %v5421
          %5854 = vmatpush2.bf16.msra.mxu0 %v5420
          %5855 = vmatprep.subr.bf16.mxu0 %v5417
          %5856 = vmatpush2.bf16.msra.mxu0 %v5416
          %5857 = vmatprep.subr.bf16.mxu0 %v5413
          %5858 = vmatpush2.bf16.msra.mxu0 %v5412
          %5859 = vmatprep.subr.bf16.mxu0 %v5409
          %5860 = vmatpush2.bf16.msra.mxu0 %v5408
          %5861 = vmatprep.subr.bf16.mxu0 %v5405
          %5862 = vmatpush2.bf16.msra.mxu0 %v5404
          %5863 = vmatprep.mubr.bf16.mxu0 %v4449
          %5864 = vmatmul.mubr.bf16.gmra.mxu0 %v4448
          %v5865 = vpop.f32.mrf.mxu0
          %v5866 = vadd.f32 %v5825, %v5865
          %v5867 = vpop.f32.mrf.mxu0
          %v5868 = vadd.f32 %v5827, %v5867
          %v5869 = vpop.f32.mrf.mxu0
          %v5870 = vpop.f32.mrf.mxu0
          %5871 = vdwg.mxu0
          %v5876 = vcombine.low %v5743, %v5745
          %v5877 = vcombine.low %v5866, %v5868
          %v5879 = vunpack.c.l.s4 1983009808
          %v5880 = vunpack.c.0.s8 %v5879
          %v5881 = vlaneseq
          %v5882 = vshrl.u32 %v5881, 7
          %v5883 = vsub.s32 %v5880, %v5882
          %v5884 = vrot.slane %v5876, %v5883
          %v5886 = vunpack.c.l.s4 1983009808
          %v5887 = vunpack.c.0.s8 %v5886
          %v5888 = vlaneseq
          %v5889 = vshrl.u32 %v5888, 7
          %v5890 = vsub.s32 %v5887, %v5889
          %v5891 = vrot.slane %v5877, %v5890
          %v5892 = vcombine.low %v5884, %v5891
          %5894 = vst [vmem:[%s298 + $0x10] sm:$0xff] %v5892
        $region52: #{tpu_custom_call.1} parent=31 // pred_fallthru
          _
        %s5895 = sand.u32 %s134, 1
        %s5896 = scalar_lea.sflag [#allocation6], %s5895
        %s5897 = sand.u32 %s134, 1
        %s5898 = smul.addr %s5897, 24
        %s5899 = scalar_lea.vmem [#allocation10], %s5898
        // Predicated region
        $region53: #{tpu_custom_call.1} parent=31 // pred_check
          %p5900 = pneg %p144
        $region54: #{tpu_custom_call.1} parent=31 // pred_check_branch
          %5902 = sbr.rel (%p5900) target = $region56
        $region55: #{tpu_custom_call.1} parent=31 // pred_region
          %s5903 = smul.u32 12, %s28
          %s5905 = ssub.s32 384, 384
          %5906 = vsyncadd %s5896, %s5905
          %s5907 = smul.addr %s29, 48
          %s5908 = sadd.s32 %s5903, %s5907
          %s5909 = smul.addr %s5908, 32
          %s5910 = scalar_lea.hbm %s3, %s5909
          %s5912 = sshll.u32 %s5899, 4
          %s5913 = int_to_ptr.vmem [resolvable:$true] %s5912
          %5915 = dma.vmem_to_hbm [thread:$0]  %s5913, 384, %s5910, %s5896
        $region56: #{tpu_custom_call.1} parent=31 // pred_fallthru
          _
      $region32: #{tpu_custom_call.1} parent=5 // pred_fallthru
        _
      %p5916 = scmp.le.s32.totalorder 2, %s18
      // Predicated region
      $region57: #{tpu_custom_call.1} parent=5 // pred_check
        %p5917 = pneg %p5916
      $region58: #{tpu_custom_call.1} parent=5 // pred_check_branch
        %5919 = sbr.rel (%p5917) target = $region60
      $region59: #{tpu_custom_call.1} parent=5 // pred_region
        %s5920 = ssub.s32 %s18, 2
        // Predicated region
        $region61: #{tpu_custom_call.1} parent=59 // pred_check
          %p5921 = pneg %p150
        $region62: #{tpu_custom_call.1} parent=59 // pred_check_branch
          %5923 = sbr.rel (%p5921) target = $region64
        $region63: #{tpu_custom_call.1} parent=59 // pred_region
          %s5924 = sand.u32 %s135, 1
          %s5925 = scalar_lea.sflag [#allocation6], %s5924
          %s5926 = sand.u32 %s135, 1
          %s5927 = smul.addr %s5926, 24
          %s5928 = scalar_lea.vmem [#allocation10], %s5927
          %5929 = dma.done %s5925, 384
        $region64: #{tpu_custom_call.1} parent=59 // pred_fallthru
          _
      $region60: #{tpu_custom_call.1} parent=5 // pred_fallthru
        _
    $region6: #{tpu_custom_call.1} parent=1 // loop_footer
      %s22 = sadd.s32 1, %s18
    $region7: #{tpu_custom_call.1} parent=1 // loop_footer_branch
      %17 = sbr.rel target = $region3
    $region8: #{tpu_custom_call.1} parent=1 // loop_exit
      _
    %5930 = vsyncpa [#allocation5], 1
    %s5931 = scalar_lea.sflag [#allocation5], 1
    %5932 = vsyncpa %s5931, 1
    %5933 = vsyncpa [#allocation8], 1
    %s5934 = scalar_lea.sflag [#allocation8], 1
    %5935 = vsyncpa %s5934, 1
    %5936 = vsyncpa [#allocation6], 1
    %s5937 = scalar_lea.sflag [#allocation6], 1
    %5938 = vsyncpa %s5937, 1

</llo_original>
